<compile_context>
chip_gen: v7x
topology: tpu7x:2x2x1
jax: 0.10.0
libtpu: 0.0.40
codegen_flags: <defaults>
</compile_context>

<pallas_src>
import math

import numpy as np
import jax
import jax.numpy as jnp
from jax.experimental import pallas as pl
from jax.experimental.pallas import tpu as pltpu

# ---- model hyper-parameters (small, consistent with the module's __init__) ----
SEQ = 8        # sequence length
BATCH = 2      # batch size
NTOKEN = 64    # vocabulary size
NINP = 32      # d_model
NHEAD = 4      # attention heads
NHID = 64      # feed-forward hidden size
NLAYERS = 2    # encoder layers
HEAD_DIM = NINP // NHEAD
LN_EPS = 1e-5
R_ROWS = SEQ * BATCH            # flattened rows, seq-major: r = s * BATCH + b
VPAD = 128                      # decoder / output padded to a full lane width

# ---- static offsets inside the packed slabs (rows, all 8-aligned) ----
S32_EMB = 0                     # (NTOKEN, NINP)  embedding table, pre-scaled by sqrt(d_model)
S32_PE = NTOKEN                 # (R_ROWS, NINP)  positional encoding, pre-tiled per row
S32_LAYER0 = NTOKEN + R_ROWS    # per-layer block: [w2t (NHID rows), vec (8 rows)]
S32_PER_LAYER = NHID + 8
S64_PER_LAYER = 40              # per-layer block in the 64-lane slab: [w1t (32), b1 (1), pad(7)]
SH_PER_LAYER = 3 * NHEAD + NHEAD  # per-layer head-space blocks: 12 qkv groups + 4 out-proj heads


def _layer_norm(x, w, b):
    mu = jnp.mean(x, axis=-1, keepdims=True)
    xc = x - mu
    var = jnp.mean(xc * xc, axis=-1, keepdims=True)
    return xc * jax.lax.rsqrt(var + LN_EPS) * w + b


# ---------------------------------------------------------------------------
# Fused Pallas kernel: embedding + PE + 2 x TransformerEncoderLayer + decoder
# ---------------------------------------------------------------------------
def fused_transformer_kernel(ids_ref, slab32_ref, slabh_ref, slab64_ref,
                             slab128_ref, bqkv_ref, o_ref):
    D, H, hd = NINP, NHEAD, HEAD_DIM
    R = R_ROWS

    # --- fused embedding lookup (one-hot @ pre-scaled table) + positional encoding ---
    tok = jax.lax.broadcasted_iota(jnp.int32, (R, NTOKEN), 1)
    onehot = (ids_ref[...] == tok).astype(jnp.float32)                      # (R, V)
    x = jnp.dot(onehot, slab32_ref[S32_EMB:S32_EMB + NTOKEN, :],
                preferred_element_type=jnp.float32)
    x = x + slab32_ref[S32_PE:S32_PE + R, :]                                # (R, D)

    # --- same-batch attention mask generated in-kernel (rows are seq-major) ---
    ri = jax.lax.broadcasted_iota(jnp.int32, (R, R), 0)
    ci = jax.lax.broadcasted_iota(jnp.int32, (R, R), 1)
    if (BATCH & (BATCH - 1)) == 0:
        same = (ri & (BATCH - 1)) == (ci & (BATCH - 1))
    else:
        same = (ri % BATCH) == (ci % BATCH)
    mask = same.astype(jnp.float32)[None]                                   # (1, R, R)

    for l in range(NLAYERS):                    # static unroll; everything stays VMEM-resident
        s32 = S32_LAYER0 + l * S32_PER_LAYER
        sh = l * SH_PER_LAYER
        s64 = l * S64_PER_LAYER
        wqkv = slabh_ref[sh:sh + 3 * H, :, :]                               # (12, hd, D)
        wo = slabh_ref[sh + 3 * H:sh + 3 * H + H, :, :]                     # (H, hd, D)
        w2t = slab32_ref[s32:s32 + NHID, :]                                 # (NHID, D)
        vec = slab32_ref[s32 + NHID:s32 + NHID + 8, :]                      # (8, D)
        w1t = slab64_ref[s64:s64 + D, :]                                    # (D, NHID)
        b1 = slab64_ref[s64 + D:s64 + D + 1, :]                             # (1, NHID)

        # --- multi-head self attention, fully head-batched (no lane slices / concats) ---
        xb = jnp.broadcast_to(x[None], (3 * H, R, D))
        qkv = jax.lax.dot_general(xb, wqkv, (((2,), (2,)), ((0,), (0,))),
                                  preferred_element_type=jnp.float32)
        qkv = qkv + bqkv_ref[l]                                             # (12, R, hd)
        q = qkv[0:H]                     # Q weights/bias pre-scaled by 1/sqrt(hd) host-side
        k = qkv[H:2 * H]
        v = qkv[2 * H:3 * H]

        s = jax.lax.dot_general(q, k, (((2,), (2,)), ((0,), (0,))),
                                preferred_element_type=jnp.float32)         # (H, R, R)
        s = s - jnp.max(s, axis=-1, keepdims=True)
        p = jnp.exp(s) * mask                       # kill cross-batch entries (0/1 multiply)
        denom = jnp.sum(p, axis=-1, keepdims=True)
        o_h = jax.lax.dot_general(p, v, (((2,), (1,)), ((0,), (0,))),
                                  preferred_element_type=jnp.float32)       # (H, R, hd)
        o_h = o_h * pl.reciprocal(denom, approx=True)                       # EUP reciprocal

        attn_ph = jax.lax.dot_general(o_h, wo, (((2,), (1,)), ((0,), (0,))),
                                      preferred_element_type=jnp.float32)   # (H, R, D)
        attn = attn_ph[0]
        for h in range(1, H):
            attn = attn + attn_ph[h]
        attn = attn + vec[0:1]                                              # out_proj bias

        # residual + LayerNorm 1 (dropout = identity)
        x1 = _layer_norm(x + attn, vec[2:3], vec[3:4])

        # feed-forward (ReLU) + residual + LayerNorm 2
        h1 = jnp.maximum(
            jnp.dot(x1, w1t, preferred_element_type=jnp.float32) + b1, 0.0)
        ff = jnp.dot(h1, w2t, preferred_element_type=jnp.float32) + vec[1:2]
        x = _layer_norm(x1 + ff, vec[4:5], vec[5:6])

    # final linear decoder, padded to 128 lanes -> lane-dense output, unmasked stores
    o_ref[...] = jnp.dot(x, slab128_ref[0:D, :],
                         preferred_element_type=jnp.float32) + slab128_ref[D:D + 1, :]


def fused_forward(ids, slabs):
    args = (ids, slabs['slab32'], slabs['slabh'], slabs['slab64'],
            slabs['slab128'], slabs['bqkv'])
    in_specs = [pl.BlockSpec(a.shape, lambda i, nd=a.ndim: (0,) * nd) for a in args]
    return pl.pallas_call(
        fused_transformer_kernel,
        out_shape=jax.ShapeDtypeStruct((R_ROWS, VPAD), jnp.float32),
        grid_spec=pltpu.PrefetchScalarGridSpec(
            num_scalar_prefetch=0,
            grid=(1,),                                   # single block; everything fits in VMEM
            in_specs=in_specs,
            out_specs=pl.BlockSpec((R_ROWS, VPAD), lambda i: (0, 0))),
        compiler_params=pltpu.CompilerParams(dimension_semantics=("arbitrary",)),
    )(*args)


# ---------------------------------------------------------------------------
# Parameters / slab packing / glue
# ---------------------------------------------------------------------------
def init_params(key):
    initrange = 0.1
    keys = jax.random.split(key, 2 + 8 * NLAYERS)
    u = lambda k, shape: jax.random.uniform(k, shape, jnp.float32, -initrange, initrange)
    ones = jnp.ones((NINP,), jnp.float32)
    zeros = jnp.zeros((NINP,), jnp.float32)

    in_wt, in_b, out_wt, w1t, b1, w2t, vec = [], [], [], [], [], [], []
    for l in range(NLAYERS):
        ks = keys[2 + 8 * l: 2 + 8 * (l + 1)]
        in_wt.append(u(ks[0], (3 * NINP, NINP)).T)        # (D, 3D), cols ordered q|k|v by head
        in_b.append(u(ks[1], (1, 3 * NINP)))
        out_wt.append(u(ks[2], (NINP, NINP)).T)           # (D_in, D_out)
        out_b = u(ks[3], (NINP,))
        w1t.append(u(ks[4], (NHID, NINP)).T)              # (D, NHID)
        b1.append(u(ks[5], (1, NHID)))
        w2t.append(u(ks[6], (NINP, NHID)).T)              # (NHID, D)
        b2 = u(ks[7], (NINP,))
        vec.append(jnp.stack([out_b, b2, ones, zeros, ones, zeros, zeros, zeros], axis=0))

    return {
        'emb': u(keys[0], (NTOKEN, NINP)),                # encoder.weight uniform(-0.1, 0.1)
        'dec_wt': u(keys[1], (NTOKEN, NINP)).T,           # decoder.weight, stored (D, V)
        'dec_b': jnp.zeros((1, NTOKEN), jnp.float32),     # decoder.bias zeroed
        'in_wt': jnp.stack(in_wt), 'in_b': jnp.stack(in_b),
        'out_wt': jnp.stack(out_wt),
        'w1t': jnp.stack(w1t), 'b1': jnp.stack(b1),
        'w2t': jnp.stack(w2t),
        'vec': jnp.stack(vec),
    }


def positional_encoding(S, D):
    pos = jnp.arange(S, dtype=jnp.float32)[:, None]
    div = jnp.exp(jnp.arange(0, D, 2, dtype=jnp.float32) * (-math.log(10000.0) / D))
    pe = jnp.zeros((S, D), jnp.float32)
    pe = pe.at[:, 0::2].set(jnp.sin(pos * div))
    pe = pe.at[:, 1::2].set(jnp.cos(pos * div))
    return pe


def build_slabs(params):
    """One-time host-side packing of all weights into a handful of DMA-friendly slabs."""
    f32 = np.float32
    D, H, hd, R = NINP, NHEAD, HEAD_DIM, R_ROWS
    scale = 1.0 / math.sqrt(hd)

    emb_scaled = np.array(params['emb'], f32) * math.sqrt(D)           # sqrt(d_model) folded in
    pe = np.array(positional_encoding(SEQ, D), f32)
    pe_tiled = np.repeat(pe, BATCH, axis=0)                            # row r -> pe[r // BATCH]

    slab32_rows = [emb_scaled, pe_tiled]
    slabh_rows, slab64_rows, bqkv_all = [], [], []
    for l in range(NLAYERS):
        in_wt = np.array(params['in_wt'][l], f32)                      # (D, 3D)
        in_b = np.array(params['in_b'][l], f32)[0]                     # (3D,)
        in_wt[:, :D] *= scale                                          # fold 1/sqrt(hd) into Q
        in_b[:D] *= scale
        wqkv = in_wt.T.reshape(3 * H, hd, D)                           # group g = qkv*H + head
        wo = np.array(params['out_wt'][l], f32).reshape(H, hd, D)
        slabh_rows.append(np.concatenate([wqkv, wo], axis=0))          # (16, hd, D)
        bqkv_all.append(np.broadcast_to(in_b.reshape(3 * H, 1, hd), (3 * H, R, hd)).copy())

        w1t = np.array(params['w1t'][l], f32)                          # (D, NHID)
        b1 = np.array(params['b1'][l], f32)                            # (1, NHID)
        slab64_rows.append(np.concatenate([w1t, b1, np.zeros((7, NHID), f32)], axis=0))

        slab32_rows.append(np.array(params['w2t'][l], f32))            # (NHID, D)
        slab32_rows.append(np.array(params['vec'][l], f32))            # (8, D)

    dec = np.zeros((40, VPAD), f32)                                    # lane-padded decoder
    dec[:D, :NTOKEN] = np.array(params['dec_wt'], f32)
    dec[D, :NTOKEN] = np.array(params['dec_b'], f32)[0]

    return {
        'slab32': jnp.asarray(np.concatenate(slab32_rows, axis=0)),    # (224, 32)
        'slabh': jnp.asarray(np.concatenate(slabh_rows, axis=0)),      # (32, 8, 32)
        'slab64': jnp.asarray(np.concatenate(slab64_rows, axis=0)),    # (80, 64)
        'slab128': jnp.asarray(dec),                                   # (40, 128)
        'bqkv': jnp.asarray(np.stack(bqkv_all, axis=0)),               # (2, 12, 16, 8)
    }


@jax.jit
def transformer_forward(src, slabs):
    """src: (S, N) int32 token ids -> (S, N, NTOKEN) float32 logits."""
    S, N = src.shape
    # rows are seq-major (r = s*N + b), so ids is a free reshape (no transpose), and the
    # embedding gather + PE add happen inside the kernel.
    ids = src.reshape(S * N, 1).astype(jnp.int32)
    logits = fused_forward(ids, slabs)                                 # (S*N, 128)
    return logits.reshape(S, N, VPAD)[:, :, :NTOKEN]                   # drop the lane padding


# ---------------------------------------------------------------------------
# Pure-JAX reference (same math) for sanity checking
# ---------------------------------------------------------------------------
def reference_forward(src, params):
    S, N = src.shape
    x = params['emb'][src.T] * math.sqrt(NINP) + positional_encoding(S, NINP)[None, :, :]
    for l in range(NLAYERS):
        vec = params['vec'][l]
        qkv = x @ params['in_wt'][l] + params['in_b'][l]
        q, k, v = qkv[..., :NINP], qkv[..., NINP:2 * NINP], qkv[..., 2 * NINP:]
        sh = lambda t: t.reshape(N, S, NHEAD, HEAD_DIM).transpose(0, 2, 1, 3)
        qh, kh, vh = sh(q), sh(k), sh(v)
        sc = jnp.einsum('nhqd,nhkd->nhqk', qh * (1.0 / math.sqrt(HEAD_DIM)), kh)
        p = jax.nn.softmax(sc, axis=-1)
        ao = jnp.einsum('nhqk,nhkd->nhqd', p, vh).transpose(0, 2, 1, 3).reshape(N, S, NINP)
        ao = ao @ params['out_wt'][l] + vec[0]
        x1 = _layer_norm(x + ao, vec[2], vec[3])
        ff = jnp.maximum(x1 @ params['w1t'][l] + params['b1'][l], 0.0) @ params['w2t'][l] + vec[1]
        x = _layer_norm(x1 + ff, vec[4], vec[5])
    logits = x @ params['dec_wt'] + params['dec_b'][0]
    return jnp.transpose(logits, (1, 0, 2))


# ---------------------------------------------------------------------------
if __name__ == "__main__":
    key = jax.random.PRNGKey(0)
    k_params, k_src = jax.random.split(key)
    params = init_params(k_params)
    slabs = build_slabs(params)
    src = jax.random.randint(k_src, (SEQ, BATCH), 0, NTOKEN, dtype=jnp.int32)

    out = jax.block_until_ready(transformer_forward(src, slabs))
    assert out.shape == (SEQ, BATCH, NTOKEN), out.shape

    ref = jax.block_until_ready(reference_forward(src, params))
    max_diff = float(jnp.max(jnp.abs(out - ref)))
    if not (bool(jnp.isfinite(out).all()) and max_diff < 2e-2):
        raise AssertionError(f"mismatch vs reference, max |diff| = {max_diff}")

    print("KERNEL_OK")
</pallas_src>

<mosaic_0001>
module attributes {stable_mosaic.version = 11 : i64} {
  func.func @fused_transformer_kernel(%arg0: i32, %arg1: memref<16x1xi32, #tpu.memory_space<vmem>>, %arg2: memref<224x32xf32, #tpu.memory_space<vmem>>, %arg3: memref<32x8x32xf32, #tpu.memory_space<vmem>>, %arg4: memref<80x64xf32, #tpu.memory_space<vmem>>, %arg5: memref<40x128xf32, #tpu.memory_space<vmem>>, %arg6: memref<2x12x16x8xf32, #tpu.memory_space<vmem>>, %arg7: memref<16x128xf32, #tpu.memory_space<vmem>>) attributes {dimension_semantics = [#tpu.dimension_semantics<arbitrary>], iteration_bounds = array<i64: 1>, scalar_prefetch = 0 : i64, scratch_operands = 0 : i64, tpu.core_type = #tpu.core_type<tc>, window_params = [{pipeline_mode = #tpu.pipeline_mode<synchronous>, transform_indices = @transform_0, window_bounds = array<i64: 16, 1>}, {pipeline_mode = #tpu.pipeline_mode<synchronous>, transform_indices = @transform_1, window_bounds = array<i64: 224, 32>}, {pipeline_mode = #tpu.pipeline_mode<synchronous>, transform_indices = @transform_2, window_bounds = array<i64: 32, 8, 32>}, {pipeline_mode = #tpu.pipeline_mode<synchronous>, transform_indices = @transform_3, window_bounds = array<i64: 80, 64>}, {pipeline_mode = #tpu.pipeline_mode<synchronous>, transform_indices = @transform_4, window_bounds = array<i64: 40, 128>}, {pipeline_mode = #tpu.pipeline_mode<synchronous>, transform_indices = @transform_5, window_bounds = array<i64: 2, 12, 16, 8>}, {pipeline_mode = #tpu.pipeline_mode<synchronous>, transform_indices = @transform_6, window_bounds = array<i64: 16, 128>}]} {
    %0 = tpu.iota {dimensions = array<i32: 1>} : vector<16x64xi32>
    %c0 = arith.constant 0 : index
    %c0_0 = arith.constant 0 : index
    %1 = vector.load %arg1[%c0, %c0_0] : memref<16x1xi32, #tpu.memory_space<vmem>>, vector<16x1xi32>
    %2 = vector.broadcast %1 : vector<16x1xi32> to vector<16x64xi32>
    %3 = arith.cmpi eq, %2, %0 : vector<16x64xi32>
    %4 = arith.extui %3 : vector<16x64xi1> to vector<16x64xi32>
    %5 = arith.sitofp %4 : vector<16x64xi32> to vector<16x64xf32>
    %c0_1 = arith.constant 0 : index
    %c0_2 = arith.constant 0 : index
    %6 = vector.load %arg2[%c0_1, %c0_2] : memref<224x32xf32, #tpu.memory_space<vmem>>, vector<64x32xf32>
    %cst = arith.constant dense<0.000000e+00> : vector<16x32xf32>
    %7 = tpu.matmul %5, %6, %cst {dimension_numbers = #tpu.dot_dimension_numbers<[1], [0], [0], [1], [0, 0, 1, 1], [], []>} : vector<16x64xf32>, vector<64x32xf32>, vector<16x32xf32> -> vector<16x32xf32>
    %c64 = arith.constant 64 : index
    %c0_3 = arith.constant 0 : index
    %8 = vector.load %arg2[%c64, %c0_3] : memref<224x32xf32, #tpu.memory_space<vmem>>, vector<16x32xf32>
    %9 = arith.addf %7, %8 : vector<16x32xf32>
    %10 = tpu.iota {dimensions = array<i32: 0>} : vector<16x16xi32>
    %11 = tpu.iota {dimensions = array<i32: 1>} : vector<16x16xi32>
    %c1_i32 = arith.constant 1 : i32
    %12 = vector.broadcast %c1_i32 : i32 to vector<16x16xi32>
    %13 = arith.andi %10, %12 : vector<16x16xi32>
    %c1_i32_4 = arith.constant 1 : i32
    %14 = vector.broadcast %c1_i32_4 : i32 to vector<16x16xi32>
    %15 = arith.andi %11, %14 : vector<16x16xi32>
    %16 = arith.cmpi eq, %13, %15 : vector<16x16xi32>
    %17 = arith.extui %16 : vector<16x16xi1> to vector<16x16xi32>
    %18 = arith.sitofp %17 : vector<16x16xi32> to vector<16x16xf32>
    %19 = vector.shape_cast %18 : vector<16x16xf32> to vector<1x16x16xf32>
    %c0_5 = arith.constant 0 : index
    %c0_6 = arith.constant 0 : index
    %c0_7 = arith.constant 0 : index
    %20 = vector.load %arg3[%c0_5, %c0_6, %c0_7] : memref<32x8x32xf32, #tpu.memory_space<vmem>>, vector<12x8x32xf32>
    %c12 = arith.constant 12 : index
    %c0_8 = arith.constant 0 : index
    %c0_9 = arith.constant 0 : index
    %21 = vector.load %arg3[%c12, %c0_8, %c0_9] : memref<32x8x32xf32, #tpu.memory_space<vmem>>, vector<4x8x32xf32>
    %c80 = arith.constant 80 : index
    %c0_10 = arith.constant 0 : index
    %22 = vector.load %arg2[%c80, %c0_10] : memref<224x32xf32, #tpu.memory_space<vmem>>, vector<64x32xf32>
    %c144 = arith.constant 144 : index
    %c0_11 = arith.constant 0 : index
    %23 = vector.load %arg2[%c144, %c0_11] : memref<224x32xf32, #tpu.memory_space<vmem>>, vector<8x32xf32>
    %c0_12 = arith.constant 0 : index
    %c0_13 = arith.constant 0 : index
    %24 = vector.load %arg4[%c0_12, %c0_13] : memref<80x64xf32, #tpu.memory_space<vmem>>, vector<32x64xf32>
    %c32 = arith.constant 32 : index
    %c0_14 = arith.constant 0 : index
    %25 = vector.load %arg4[%c32, %c0_14] : memref<80x64xf32, #tpu.memory_space<vmem>>, vector<1x64xf32>
    %26 = vector.shape_cast %9 : vector<16x32xf32> to vector<1x16x32xf32>
    %27 = vector.shape_cast %26 : vector<1x16x32xf32> to vector<1x16x32xf32>
    %28 = vector.broadcast %27 : vector<1x16x32xf32> to vector<12x16x32xf32>
    %cst_15 = arith.constant dense<0.000000e+00> : vector<12x16x8xf32>
    %29 = tpu.matmul %28, %20, %cst_15 {dimension_numbers = #tpu.dot_dimension_numbers<[2], [2], [1], [1], [0, 0, 0, 1, 1, 1], [0], [0]>} : vector<12x16x32xf32>, vector<12x8x32xf32>, vector<12x16x8xf32> -> vector<12x16x8xf32>
    %c0_16 = arith.constant 0 : index
    %c0_17 = arith.constant 0 : index
    %c0_18 = arith.constant 0 : index
    %c0_19 = arith.constant 0 : index
    %30 = vector.load %arg6[%c0_16, %c0_17, %c0_18, %c0_19] : memref<2x12x16x8xf32, #tpu.memory_space<vmem>>, vector<1x12x16x8xf32>
    %31 = vector.shape_cast %30 : vector<1x12x16x8xf32> to vector<12x16x8xf32>
    %32 = arith.addf %29, %31 : vector<12x16x8xf32>
    %33 = vector.extract_strided_slice %32 {offsets = [0, 0, 0], sizes = [4, 16, 8], strides = [1, 1, 1]} : vector<12x16x8xf32> to vector<4x16x8xf32>
    %34 = vector.extract_strided_slice %32 {offsets = [4, 0, 0], sizes = [4, 16, 8], strides = [1, 1, 1]} : vector<12x16x8xf32> to vector<4x16x8xf32>
    %35 = vector.extract_strided_slice %32 {offsets = [8, 0, 0], sizes = [4, 16, 8], strides = [1, 1, 1]} : vector<12x16x8xf32> to vector<4x16x8xf32>
    %cst_20 = arith.constant dense<0.000000e+00> : vector<4x16x16xf32>
    %36 = tpu.matmul %33, %34, %cst_20 {dimension_numbers = #tpu.dot_dimension_numbers<[2], [2], [1], [1], [0, 0, 0, 1, 1, 1], [0], [0]>} : vector<4x16x8xf32>, vector<4x16x8xf32>, vector<4x16x16xf32> -> vector<4x16x16xf32>
    %cst_21 = arith.constant dense<0xFF800000> : vector<4x16xf32>
    %37 = vector.multi_reduction <maximumf>, %36, %cst_21 [2] : vector<4x16x16xf32> to vector<4x16xf32>
    %38 = vector.shape_cast %37 : vector<4x16xf32> to vector<4x16x1xf32>
    %39 = vector.broadcast %38 : vector<4x16x1xf32> to vector<4x16x16xf32>
    %40 = arith.subf %36, %39 : vector<4x16x16xf32>
    %41 = math.exp %40 : vector<4x16x16xf32>
    %42 = vector.broadcast %19 : vector<1x16x16xf32> to vector<4x16x16xf32>
    %43 = arith.mulf %41, %42 : vector<4x16x16xf32>
    %cst_22 = arith.constant dense<0.000000e+00> : vector<4x16xf32>
    %44 = vector.multi_reduction <add>, %43, %cst_22 [2] : vector<4x16x16xf32> to vector<4x16xf32>
    %45 = vector.shape_cast %44 : vector<4x16xf32> to vector<4x16x1xf32>
    %cst_23 = arith.constant dense<0.000000e+00> : vector<4x16x8xf32>
    %46 = tpu.matmul %43, %35, %cst_23 {dimension_numbers = #tpu.dot_dimension_numbers<[2], [1], [1], [2], [0, 0, 0, 1, 1, 2], [0], [0]>} : vector<4x16x16xf32>, vector<4x16x8xf32>, vector<4x16x8xf32> -> vector<4x16x8xf32>
    %47 = tpu.reciprocal %45 {approx = true} : vector<4x16x1xf32> -> vector<4x16x1xf32>
    %48 = vector.broadcast %47 : vector<4x16x1xf32> to vector<4x16x8xf32>
    %49 = arith.mulf %46, %48 : vector<4x16x8xf32>
    %cst_24 = arith.constant dense<0.000000e+00> : vector<4x16x32xf32>
    %50 = tpu.matmul %49, %21, %cst_24 {dimension_numbers = #tpu.dot_dimension_numbers<[2], [1], [1], [2], [0, 0, 0, 1, 1, 2], [0], [0]>} : vector<4x16x8xf32>, vector<4x8x32xf32>, vector<4x16x32xf32> -> vector<4x16x32xf32>
    %51 = vector.extract_strided_slice %50 {offsets = [0, 0, 0], sizes = [1, 16, 32], strides = [1, 1, 1]} : vector<4x16x32xf32> to vector<1x16x32xf32>
    %52 = vector.shape_cast %51 : vector<1x16x32xf32> to vector<16x32xf32>
    %53 = vector.extract_strided_slice %50 {offsets = [1, 0, 0], sizes = [1, 16, 32], strides = [1, 1, 1]} : vector<4x16x32xf32> to vector<1x16x32xf32>
    %54 = vector.shape_cast %53 : vector<1x16x32xf32> to vector<16x32xf32>
    %55 = arith.addf %52, %54 : vector<16x32xf32>
    %56 = vector.extract_strided_slice %50 {offsets = [2, 0, 0], sizes = [1, 16, 32], strides = [1, 1, 1]} : vector<4x16x32xf32> to vector<1x16x32xf32>
    %57 = vector.shape_cast %56 : vector<1x16x32xf32> to vector<16x32xf32>
    %58 = arith.addf %55, %57 : vector<16x32xf32>
    %59 = vector.extract_strided_slice %50 {offsets = [3, 0, 0], sizes = [1, 16, 32], strides = [1, 1, 1]} : vector<4x16x32xf32> to vector<1x16x32xf32>
    %60 = vector.shape_cast %59 : vector<1x16x32xf32> to vector<16x32xf32>
    %61 = arith.addf %58, %60 : vector<16x32xf32>
    %62 = vector.extract_strided_slice %23 {offsets = [0, 0], sizes = [1, 32], strides = [1, 1]} : vector<8x32xf32> to vector<1x32xf32>
    %63 = vector.broadcast %62 : vector<1x32xf32> to vector<16x32xf32>
    %64 = arith.addf %61, %63 : vector<16x32xf32>
    %65 = arith.addf %9, %64 : vector<16x32xf32>
    %66 = vector.extract_strided_slice %23 {offsets = [2, 0], sizes = [1, 32], strides = [1, 1]} : vector<8x32xf32> to vector<1x32xf32>
    %67 = vector.extract_strided_slice %23 {offsets = [3, 0], sizes = [1, 32], strides = [1, 1]} : vector<8x32xf32> to vector<1x32xf32>
    %cst_25 = arith.constant dense<0.000000e+00> : vector<16xf32>
    %68 = vector.multi_reduction <add>, %65, %cst_25 [1] : vector<16x32xf32> to vector<16xf32>
    %69 = vector.shape_cast %68 : vector<16xf32> to vector<16x1xf32>
    %cst_26 = arith.constant 3.200000e+01 : f32
    %70 = vector.broadcast %cst_26 : f32 to vector<16x1xf32>
    %71 = arith.divf %69, %70 : vector<16x1xf32>
    %72 = vector.broadcast %71 : vector<16x1xf32> to vector<16x32xf32>
    %73 = arith.subf %65, %72 : vector<16x32xf32>
    %74 = arith.mulf %73, %73 : vector<16x32xf32>
    %cst_27 = arith.constant dense<0.000000e+00> : vector<16xf32>
    %75 = vector.multi_reduction <add>, %74, %cst_27 [1] : vector<16x32xf32> to vector<16xf32>
    %76 = vector.shape_cast %75 : vector<16xf32> to vector<16x1xf32>
    %cst_28 = arith.constant 3.200000e+01 : f32
    %77 = vector.broadcast %cst_28 : f32 to vector<16x1xf32>
    %78 = arith.divf %76, %77 : vector<16x1xf32>
    %cst_29 = arith.constant 9.99999974E-6 : f32
    %79 = vector.broadcast %cst_29 : f32 to vector<16x1xf32>
    %80 = arith.addf %78, %79 : vector<16x1xf32>
    %81 = math.rsqrt %80 : vector<16x1xf32>
    %82 = vector.broadcast %81 : vector<16x1xf32> to vector<16x32xf32>
    %83 = arith.mulf %73, %82 : vector<16x32xf32>
    %84 = vector.broadcast %66 : vector<1x32xf32> to vector<16x32xf32>
    %85 = arith.mulf %83, %84 : vector<16x32xf32>
    %86 = vector.broadcast %67 : vector<1x32xf32> to vector<16x32xf32>
    %87 = arith.addf %85, %86 : vector<16x32xf32>
    %cst_30 = arith.constant dense<0.000000e+00> : vector<16x64xf32>
    %88 = tpu.matmul %87, %24, %cst_30 {dimension_numbers = #tpu.dot_dimension_numbers<[1], [0], [0], [1], [0, 0, 1, 1], [], []>} : vector<16x32xf32>, vector<32x64xf32>, vector<16x64xf32> -> vector<16x64xf32>
    %89 = vector.broadcast %25 : vector<1x64xf32> to vector<16x64xf32>
    %90 = arith.addf %88, %89 : vector<16x64xf32>
    %cst_31 = arith.constant 0.000000e+00 : f32
    %91 = vector.broadcast %cst_31 : f32 to vector<16x64xf32>
    %92 = arith.maximumf %90, %91 : vector<16x64xf32>
    %cst_32 = arith.constant dense<0.000000e+00> : vector<16x32xf32>
    %93 = tpu.matmul %92, %22, %cst_32 {dimension_numbers = #tpu.dot_dimension_numbers<[1], [0], [0], [1], [0, 0, 1, 1], [], []>} : vector<16x64xf32>, vector<64x32xf32>, vector<16x32xf32> -> vector<16x32xf32>
    %94 = vector.extract_strided_slice %23 {offsets = [1, 0], sizes = [1, 32], strides = [1, 1]} : vector<8x32xf32> to vector<1x32xf32>
    %95 = vector.broadcast %94 : vector<1x32xf32> to vector<16x32xf32>
    %96 = arith.addf %93, %95 : vector<16x32xf32>
    %97 = arith.addf %87, %96 : vector<16x32xf32>
    %98 = vector.extract_strided_slice %23 {offsets = [4, 0], sizes = [1, 32], strides = [1, 1]} : vector<8x32xf32> to vector<1x32xf32>
    %99 = vector.extract_strided_slice %23 {offsets = [5, 0], sizes = [1, 32], strides = [1, 1]} : vector<8x32xf32> to vector<1x32xf32>
    %cst_33 = arith.constant dense<0.000000e+00> : vector<16xf32>
    %100 = vector.multi_reduction <add>, %97, %cst_33 [1] : vector<16x32xf32> to vector<16xf32>
    %101 = vector.shape_cast %100 : vector<16xf32> to vector<16x1xf32>
    %cst_34 = arith.constant 3.200000e+01 : f32
    %102 = vector.broadcast %cst_34 : f32 to vector<16x1xf32>
    %103 = arith.divf %101, %102 : vector<16x1xf32>
    %104 = vector.broadcast %103 : vector<16x1xf32> to vector<16x32xf32>
    %105 = arith.subf %97, %104 : vector<16x32xf32>
    %106 = arith.mulf %105, %105 : vector<16x32xf32>
    %cst_35 = arith.constant dense<0.000000e+00> : vector<16xf32>
    %107 = vector.multi_reduction <add>, %106, %cst_35 [1] : vector<16x32xf32> to vector<16xf32>
    %108 = vector.shape_cast %107 : vector<16xf32> to vector<16x1xf32>
    %cst_36 = arith.constant 3.200000e+01 : f32
    %109 = vector.broadcast %cst_36 : f32 to vector<16x1xf32>
    %110 = arith.divf %108, %109 : vector<16x1xf32>
    %cst_37 = arith.constant 9.99999974E-6 : f32
    %111 = vector.broadcast %cst_37 : f32 to vector<16x1xf32>
    %112 = arith.addf %110, %111 : vector<16x1xf32>
    %113 = math.rsqrt %112 : vector<16x1xf32>
    %114 = vector.broadcast %113 : vector<16x1xf32> to vector<16x32xf32>
    %115 = arith.mulf %105, %114 : vector<16x32xf32>
    %116 = vector.broadcast %98 : vector<1x32xf32> to vector<16x32xf32>
    %117 = arith.mulf %115, %116 : vector<16x32xf32>
    %118 = vector.broadcast %99 : vector<1x32xf32> to vector<16x32xf32>
    %119 = arith.addf %117, %118 : vector<16x32xf32>
    %c16 = arith.constant 16 : index
    %c0_38 = arith.constant 0 : index
    %c0_39 = arith.constant 0 : index
    %120 = vector.load %arg3[%c16, %c0_38, %c0_39] : memref<32x8x32xf32, #tpu.memory_space<vmem>>, vector<12x8x32xf32>
    %c28 = arith.constant 28 : index
    %c0_40 = arith.constant 0 : index
    %c0_41 = arith.constant 0 : index
    %121 = vector.load %arg3[%c28, %c0_40, %c0_41] : memref<32x8x32xf32, #tpu.memory_space<vmem>>, vector<4x8x32xf32>
    %c152 = arith.constant 152 : index
    %c0_42 = arith.constant 0 : index
    %122 = vector.load %arg2[%c152, %c0_42] : memref<224x32xf32, #tpu.memory_space<vmem>>, vector<64x32xf32>
    %c216 = arith.constant 216 : index
    %c0_43 = arith.constant 0 : index
    %123 = vector.load %arg2[%c216, %c0_43] : memref<224x32xf32, #tpu.memory_space<vmem>>, vector<8x32xf32>
    %c40 = arith.constant 40 : index
    %c0_44 = arith.constant 0 : index
    %124 = vector.load %arg4[%c40, %c0_44] : memref<80x64xf32, #tpu.memory_space<vmem>>, vector<32x64xf32>
    %c72 = arith.constant 72 : index
    %c0_45 = arith.constant 0 : index
    %125 = vector.load %arg4[%c72, %c0_45] : memref<80x64xf32, #tpu.memory_space<vmem>>, vector<1x64xf32>
    %126 = vector.shape_cast %119 : vector<16x32xf32> to vector<1x16x32xf32>
    %127 = vector.shape_cast %126 : vector<1x16x32xf32> to vector<1x16x32xf32>
    %128 = vector.broadcast %127 : vector<1x16x32xf32> to vector<12x16x32xf32>
    %cst_46 = arith.constant dense<0.000000e+00> : vector<12x16x8xf32>
    %129 = tpu.matmul %128, %120, %cst_46 {dimension_numbers = #tpu.dot_dimension_numbers<[2], [2], [1], [1], [0, 0, 0, 1, 1, 1], [0], [0]>} : vector<12x16x32xf32>, vector<12x8x32xf32>, vector<12x16x8xf32> -> vector<12x16x8xf32>
    %c1 = arith.constant 1 : index
    %c0_47 = arith.constant 0 : index
    %c0_48 = arith.constant 0 : index
    %c0_49 = arith.constant 0 : index
    %130 = vector.load %arg6[%c1, %c0_47, %c0_48, %c0_49] : memref<2x12x16x8xf32, #tpu.memory_space<vmem>>, vector<1x12x16x8xf32>
    %131 = vector.shape_cast %130 : vector<1x12x16x8xf32> to vector<12x16x8xf32>
    %132 = arith.addf %129, %131 : vector<12x16x8xf32>
    %133 = vector.extract_strided_slice %132 {offsets = [0, 0, 0], sizes = [4, 16, 8], strides = [1, 1, 1]} : vector<12x16x8xf32> to vector<4x16x8xf32>
    %134 = vector.extract_strided_slice %132 {offsets = [4, 0, 0], sizes = [4, 16, 8], strides = [1, 1, 1]} : vector<12x16x8xf32> to vector<4x16x8xf32>
    %135 = vector.extract_strided_slice %132 {offsets = [8, 0, 0], sizes = [4, 16, 8], strides = [1, 1, 1]} : vector<12x16x8xf32> to vector<4x16x8xf32>
    %cst_50 = arith.constant dense<0.000000e+00> : vector<4x16x16xf32>
    %136 = tpu.matmul %133, %134, %cst_50 {dimension_numbers = #tpu.dot_dimension_numbers<[2], [2], [1], [1], [0, 0, 0, 1, 1, 1], [0], [0]>} : vector<4x16x8xf32>, vector<4x16x8xf32>, vector<4x16x16xf32> -> vector<4x16x16xf32>
    %cst_51 = arith.constant dense<0xFF800000> : vector<4x16xf32>
    %137 = vector.multi_reduction <maximumf>, %136, %cst_51 [2] : vector<4x16x16xf32> to vector<4x16xf32>
    %138 = vector.shape_cast %137 : vector<4x16xf32> to vector<4x16x1xf32>
    %139 = vector.broadcast %138 : vector<4x16x1xf32> to vector<4x16x16xf32>
    %140 = arith.subf %136, %139 : vector<4x16x16xf32>
    %141 = math.exp %140 : vector<4x16x16xf32>
    %142 = vector.broadcast %19 : vector<1x16x16xf32> to vector<4x16x16xf32>
    %143 = arith.mulf %141, %142 : vector<4x16x16xf32>
    %cst_52 = arith.constant dense<0.000000e+00> : vector<4x16xf32>
    %144 = vector.multi_reduction <add>, %143, %cst_52 [2] : vector<4x16x16xf32> to vector<4x16xf32>
    %145 = vector.shape_cast %144 : vector<4x16xf32> to vector<4x16x1xf32>
    %cst_53 = arith.constant dense<0.000000e+00> : vector<4x16x8xf32>
    %146 = tpu.matmul %143, %135, %cst_53 {dimension_numbers = #tpu.dot_dimension_numbers<[2], [1], [1], [2], [0, 0, 0, 1, 1, 2], [0], [0]>} : vector<4x16x16xf32>, vector<4x16x8xf32>, vector<4x16x8xf32> -> vector<4x16x8xf32>
    %147 = tpu.reciprocal %145 {approx = true} : vector<4x16x1xf32> -> vector<4x16x1xf32>
    %148 = vector.broadcast %147 : vector<4x16x1xf32> to vector<4x16x8xf32>
    %149 = arith.mulf %146, %148 : vector<4x16x8xf32>
    %cst_54 = arith.constant dense<0.000000e+00> : vector<4x16x32xf32>
    %150 = tpu.matmul %149, %121, %cst_54 {dimension_numbers = #tpu.dot_dimension_numbers<[2], [1], [1], [2], [0, 0, 0, 1, 1, 2], [0], [0]>} : vector<4x16x8xf32>, vector<4x8x32xf32>, vector<4x16x32xf32> -> vector<4x16x32xf32>
    %151 = vector.extract_strided_slice %150 {offsets = [0, 0, 0], sizes = [1, 16, 32], strides = [1, 1, 1]} : vector<4x16x32xf32> to vector<1x16x32xf32>
    %152 = vector.shape_cast %151 : vector<1x16x32xf32> to vector<16x32xf32>
    %153 = vector.extract_strided_slice %150 {offsets = [1, 0, 0], sizes = [1, 16, 32], strides = [1, 1, 1]} : vector<4x16x32xf32> to vector<1x16x32xf32>
    %154 = vector.shape_cast %153 : vector<1x16x32xf32> to vector<16x32xf32>
    %155 = arith.addf %152, %154 : vector<16x32xf32>
    %156 = vector.extract_strided_slice %150 {offsets = [2, 0, 0], sizes = [1, 16, 32], strides = [1, 1, 1]} : vector<4x16x32xf32> to vector<1x16x32xf32>
    %157 = vector.shape_cast %156 : vector<1x16x32xf32> to vector<16x32xf32>
    %158 = arith.addf %155, %157 : vector<16x32xf32>
    %159 = vector.extract_strided_slice %150 {offsets = [3, 0, 0], sizes = [1, 16, 32], strides = [1, 1, 1]} : vector<4x16x32xf32> to vector<1x16x32xf32>
    %160 = vector.shape_cast %159 : vector<1x16x32xf32> to vector<16x32xf32>
    %161 = arith.addf %158, %160 : vector<16x32xf32>
    %162 = vector.extract_strided_slice %123 {offsets = [0, 0], sizes = [1, 32], strides = [1, 1]} : vector<8x32xf32> to vector<1x32xf32>
    %163 = vector.broadcast %162 : vector<1x32xf32> to vector<16x32xf32>
    %164 = arith.addf %161, %163 : vector<16x32xf32>
    %165 = arith.addf %119, %164 : vector<16x32xf32>
    %166 = vector.extract_strided_slice %123 {offsets = [2, 0], sizes = [1, 32], strides = [1, 1]} : vector<8x32xf32> to vector<1x32xf32>
    %167 = vector.extract_strided_slice %123 {offsets = [3, 0], sizes = [1, 32], strides = [1, 1]} : vector<8x32xf32> to vector<1x32xf32>
    %cst_55 = arith.constant dense<0.000000e+00> : vector<16xf32>
    %168 = vector.multi_reduction <add>, %165, %cst_55 [1] : vector<16x32xf32> to vector<16xf32>
    %169 = vector.shape_cast %168 : vector<16xf32> to vector<16x1xf32>
    %cst_56 = arith.constant 3.200000e+01 : f32
    %170 = vector.broadcast %cst_56 : f32 to vector<16x1xf32>
    %171 = arith.divf %169, %170 : vector<16x1xf32>
    %172 = vector.broadcast %171 : vector<16x1xf32> to vector<16x32xf32>
    %173 = arith.subf %165, %172 : vector<16x32xf32>
    %174 = arith.mulf %173, %173 : vector<16x32xf32>
    %cst_57 = arith.constant dense<0.000000e+00> : vector<16xf32>
    %175 = vector.multi_reduction <add>, %174, %cst_57 [1] : vector<16x32xf32> to vector<16xf32>
    %176 = vector.shape_cast %175 : vector<16xf32> to vector<16x1xf32>
    %cst_58 = arith.constant 3.200000e+01 : f32
    %177 = vector.broadcast %cst_58 : f32 to vector<16x1xf32>
    %178 = arith.divf %176, %177 : vector<16x1xf32>
    %cst_59 = arith.constant 9.99999974E-6 : f32
    %179 = vector.broadcast %cst_59 : f32 to vector<16x1xf32>
    %180 = arith.addf %178, %179 : vector<16x1xf32>
    %181 = math.rsqrt %180 : vector<16x1xf32>
    %182 = vector.broadcast %181 : vector<16x1xf32> to vector<16x32xf32>
    %183 = arith.mulf %173, %182 : vector<16x32xf32>
    %184 = vector.broadcast %166 : vector<1x32xf32> to vector<16x32xf32>
    %185 = arith.mulf %183, %184 : vector<16x32xf32>
    %186 = vector.broadcast %167 : vector<1x32xf32> to vector<16x32xf32>
    %187 = arith.addf %185, %186 : vector<16x32xf32>
    %cst_60 = arith.constant dense<0.000000e+00> : vector<16x64xf32>
    %188 = tpu.matmul %187, %124, %cst_60 {dimension_numbers = #tpu.dot_dimension_numbers<[1], [0], [0], [1], [0, 0, 1, 1], [], []>} : vector<16x32xf32>, vector<32x64xf32>, vector<16x64xf32> -> vector<16x64xf32>
    %189 = vector.broadcast %125 : vector<1x64xf32> to vector<16x64xf32>
    %190 = arith.addf %188, %189 : vector<16x64xf32>
    %cst_61 = arith.constant 0.000000e+00 : f32
    %191 = vector.broadcast %cst_61 : f32 to vector<16x64xf32>
    %192 = arith.maximumf %190, %191 : vector<16x64xf32>
    %cst_62 = arith.constant dense<0.000000e+00> : vector<16x32xf32>
    %193 = tpu.matmul %192, %122, %cst_62 {dimension_numbers = #tpu.dot_dimension_numbers<[1], [0], [0], [1], [0, 0, 1, 1], [], []>} : vector<16x64xf32>, vector<64x32xf32>, vector<16x32xf32> -> vector<16x32xf32>
    %194 = vector.extract_strided_slice %123 {offsets = [1, 0], sizes = [1, 32], strides = [1, 1]} : vector<8x32xf32> to vector<1x32xf32>
    %195 = vector.broadcast %194 : vector<1x32xf32> to vector<16x32xf32>
    %196 = arith.addf %193, %195 : vector<16x32xf32>
    %197 = arith.addf %187, %196 : vector<16x32xf32>
    %198 = vector.extract_strided_slice %123 {offsets = [4, 0], sizes = [1, 32], strides = [1, 1]} : vector<8x32xf32> to vector<1x32xf32>
    %199 = vector.extract_strided_slice %123 {offsets = [5, 0], sizes = [1, 32], strides = [1, 1]} : vector<8x32xf32> to vector<1x32xf32>
    %cst_63 = arith.constant dense<0.000000e+00> : vector<16xf32>
    %200 = vector.multi_reduction <add>, %197, %cst_63 [1] : vector<16x32xf32> to vector<16xf32>
    %201 = vector.shape_cast %200 : vector<16xf32> to vector<16x1xf32>
    %cst_64 = arith.constant 3.200000e+01 : f32
    %202 = vector.broadcast %cst_64 : f32 to vector<16x1xf32>
    %203 = arith.divf %201, %202 : vector<16x1xf32>
    %204 = vector.broadcast %203 : vector<16x1xf32> to vector<16x32xf32>
    %205 = arith.subf %197, %204 : vector<16x32xf32>
    %206 = arith.mulf %205, %205 : vector<16x32xf32>
    %cst_65 = arith.constant dense<0.000000e+00> : vector<16xf32>
    %207 = vector.multi_reduction <add>, %206, %cst_65 [1] : vector<16x32xf32> to vector<16xf32>
    %208 = vector.shape_cast %207 : vector<16xf32> to vector<16x1xf32>
    %cst_66 = arith.constant 3.200000e+01 : f32
    %209 = vector.broadcast %cst_66 : f32 to vector<16x1xf32>
    %210 = arith.divf %208, %209 : vector<16x1xf32>
    %cst_67 = arith.constant 9.99999974E-6 : f32
    %211 = vector.broadcast %cst_67 : f32 to vector<16x1xf32>
    %212 = arith.addf %210, %211 : vector<16x1xf32>
    %213 = math.rsqrt %212 : vector<16x1xf32>
    %214 = vector.broadcast %213 : vector<16x1xf32> to vector<16x32xf32>
    %215 = arith.mulf %205, %214 : vector<16x32xf32>
    %216 = vector.broadcast %198 : vector<1x32xf32> to vector<16x32xf32>
    %217 = arith.mulf %215, %216 : vector<16x32xf32>
    %218 = vector.broadcast %199 : vector<1x32xf32> to vector<16x32xf32>
    %219 = arith.addf %217, %218 : vector<16x32xf32>
    %c0_68 = arith.constant 0 : index
    %c0_69 = arith.constant 0 : index
    %220 = vector.load %arg5[%c0_68, %c0_69] : memref<40x128xf32, #tpu.memory_space<vmem>>, vector<32x128xf32>
    %cst_70 = arith.constant dense<0.000000e+00> : vector<16x128xf32>
    %221 = tpu.matmul %219, %220, %cst_70 {dimension_numbers = #tpu.dot_dimension_numbers<[1], [0], [0], [1], [0, 0, 1, 1], [], []>} : vector<16x32xf32>, vector<32x128xf32>, vector<16x128xf32> -> vector<16x128xf32>
    %c32_71 = arith.constant 32 : index
    %c0_72 = arith.constant 0 : index
    %222 = vector.load %arg5[%c32_71, %c0_72] : memref<40x128xf32, #tpu.memory_space<vmem>>, vector<1x128xf32>
    %223 = vector.broadcast %222 : vector<1x128xf32> to vector<16x128xf32>
    %224 = arith.addf %221, %223 : vector<16x128xf32>
    %c0_73 = arith.constant 0 : index
    %c0_74 = arith.constant 0 : index
    %225 = vector.load %arg7[%c0_73, %c0_74] : memref<16x128xf32, #tpu.memory_space<vmem>>, vector<16x128xf32>
    tpu.vector_store %arg7[%c0_73, %c0_74], %224 {strides = array<i32>} : memref<16x128xf32, #tpu.memory_space<vmem>>, vector<16x128xf32>,
    return
  }
  func.func @transform_0(%arg0: i32) -> (i32, i32) {
    %c0_i32 = arith.constant 0 : i32
    %c0_i32_0 = arith.constant 0 : i32
    %c0_i32_1 = arith.constant 0 : i32
    return %c0_i32, %c0_i32_0 : i32, i32
  }
  func.func @transform_1(%arg0: i32) -> (i32, i32) {
    %c0_i32 = arith.constant 0 : i32
    %c0_i32_0 = arith.constant 0 : i32
    %c0_i32_1 = arith.constant 0 : i32
    return %c0_i32, %c0_i32_0 : i32, i32
  }
  func.func @transform_2(%arg0: i32) -> (i32, i32, i32) {
    %c0_i32 = arith.constant 0 : i32
    %c0_i32_0 = arith.constant 0 : i32
    %c0_i32_1 = arith.constant 0 : i32
    %c0_i32_2 = arith.constant 0 : i32
    return %c0_i32, %c0_i32_0, %c0_i32_1 : i32, i32, i32
  }
  func.func @transform_3(%arg0: i32) -> (i32, i32) {
    %c0_i32 = arith.constant 0 : i32
    %c0_i32_0 = arith.constant 0 : i32
    %c0_i32_1 = arith.constant 0 : i32
    return %c0_i32, %c0_i32_0 : i32, i32
  }
  func.func @transform_4(%arg0: i32) -> (i32, i32) {
    %c0_i32 = arith.constant 0 : i32
    %c0_i32_0 = arith.constant 0 : i32
    %c0_i32_1 = arith.constant 0 : i32
    return %c0_i32, %c0_i32_0 : i32, i32
  }
  func.func @transform_5(%arg0: i32) -> (i32, i32, i32, i32) {
    %c0_i32 = arith.constant 0 : i32
    %c0_i32_0 = arith.constant 0 : i32
    %c0_i32_1 = arith.constant 0 : i32
    %c0_i32_2 = arith.constant 0 : i32
    %c0_i32_3 = arith.constant 0 : i32
    return %c0_i32, %c0_i32_0, %c0_i32_1, %c0_i32_2 : i32, i32, i32, i32
  }
  func.func @transform_6(%arg0: i32) -> (i32, i32) {
    %c0_i32 = arith.constant 0 : i32
    %c0_i32_0 = arith.constant 0 : i32
    %c0_i32_1 = arith.constant 0 : i32
    return %c0_i32, %c0_i32_0 : i32, i32
  }
}

</mosaic_0001>

<llo_original>
// kernel: transformer_forward.1
$region0: #{transformer_forward.1}
  #allocation0 [shape = 'u32[]', space=smem, size = 0x4, offset = 0x4, fixed_abs, tag = 'smem constant byte address 0x4 - core index']
  #allocation1 [shape = 'u32[144,128]{1,0:T(1,128)}', space=vmem, size = 0x12000, scoped, tag = 'internal scratch']
  %s0 = inlined_call_operand.vmem [shape: s32[16,1], index: 0, kind: input, shape index: {}]
  %s1 = inlined_call_operand.vmem [shape: f32[224,32], index: 1, kind: input, shape index: {}]
  %s2 = inlined_call_operand.vmem [shape: f32[32,8,32], index: 2, kind: input, shape index: {}]
  %s3 = inlined_call_operand.vmem [shape: f32[80,64], index: 3, kind: input, shape index: {}]
  %s4 = inlined_call_operand.vmem [shape: f32[40,128], index: 4, kind: input, shape index: {}]
  %s5 = inlined_call_operand.vmem [shape: f32[2,12,16,8], index: 5, kind: input, shape index: {}]
  %s6 = inlined_call_operand.hbm [shape: f32[16,128], index: 6, kind: output, shape index: {}]
  %s7 = sld [smem:[#allocation0]]
  $region34: #{transformer_forward.1} parent=0
    _
  %s9 = ssub.s32 1, %s7
  %s10 = scalar_select 0, %s9, %s7
  $region1: #{transformer_forward.1} parent=0
    #allocation2 [shape = 'u8[8192]{0}', space=vmem, size = 0x2000, scoped, tag = 'output window, operand 0, single buffered']
    #allocation3 [shape = 's32[1]{0}', space=sflag, size = 0x4, scoped, tag = 'scoped memory for transformer_forward.1']
    %11 = vsyncpa [#allocation3], 0
    // Predicated region
    $region2: #{transformer_forward.1} parent=1 // pred_check
      _
    $region3: #{transformer_forward.1} parent=1 // pred_check_branch
      %13 = sbr.rel (0) target = $region5
    $region4: #{transformer_forward.1} parent=1 // pred_region
      _
    $region5: #{transformer_forward.1} parent=1 // pred_fallthru
      _
    // Predicated region
    $region6: #{transformer_forward.1} parent=1 // pred_check
      _
    $region7: #{transformer_forward.1} parent=1 // pred_check_branch
      %15 = sbr.rel (0) target = $region9
    $region8: #{transformer_forward.1} parent=1 // pred_region
      _
    $region9: #{transformer_forward.1} parent=1 // pred_fallthru
      _
    // Predicated region
    $region10: #{transformer_forward.1} parent=1 // pred_check
      _
    $region11: #{transformer_forward.1} parent=1 // pred_check_branch
      %17 = sbr.rel (0) target = $region13
    $region12: #{transformer_forward.1} parent=1 // pred_region
      _
    $region13: #{transformer_forward.1} parent=1 // pred_fallthru
      _
    // Predicated region
    $region14: #{transformer_forward.1} parent=1 // pred_check
      _
    $region15: #{transformer_forward.1} parent=1 // pred_check_branch
      %19 = sbr.rel (0) target = $region17
    $region16: #{transformer_forward.1} parent=1 // pred_region
      _
    $region17: #{transformer_forward.1} parent=1 // pred_fallthru
      _
    // Predicated region
    $region18: #{transformer_forward.1} parent=1 // pred_check
      _
    $region19: #{transformer_forward.1} parent=1 // pred_check_branch
      %21 = sbr.rel (0) target = $region21
    $region20: #{transformer_forward.1} parent=1 // pred_region
      _
    $region21: #{transformer_forward.1} parent=1 // pred_fallthru
      _
    // Predicated region
    $region22: #{transformer_forward.1} parent=1 // pred_check
      _
    $region23: #{transformer_forward.1} parent=1 // pred_check_branch
      %23 = sbr.rel (0) target = $region25
    $region24: #{transformer_forward.1} parent=1 // pred_region
      _
    $region25: #{transformer_forward.1} parent=1 // pred_fallthru
      _
    %v24 = vlaneseq
    %v25 = vand.u32 %v24, 127
    %v26 = vld [vmem:[%s0] sm:$0xff]
    %v27 = vld [vmem:[%s0 + $0x8] sm:$0xff]
    %28 = vset.pattern.permute.xlu0 0
    %29 = vperm.xlu0 %28, %v26
    %v30 = vpop.permute.xlu0 %29
    %31 = vset.pattern.permute.xlu0 0
    %32 = vperm.xlu0 %31, %v27
    %v33 = vpop.permute.xlu0 %32
    %vm34 = vcmp.eq.s32.totalorder %v30, %v25
    %vm35 = vcmp.eq.s32.totalorder %v33, %v25
    %v36 = vsel %vm34, 1, 0
    %v37 = vsel %vm35, 1, 0
    %v38 = vcvt.s32.f32 %v36
    %v39 = vcvt.s32.f32 %v37
    %v40 = vld [vmem:[%s1] sm:$0xff]
    %v41 = vld [vmem:[%s1 + $0x8] sm:$0xff]
    %v42 = vld [vmem:[%s1 + $0x10] sm:$0xff]
    %v43 = vld [vmem:[%s1 + $0x18] sm:$0xff]
    %v44 = vld [vmem:[%s1 + $0x20] sm:$0xff]
    %v45 = vld [vmem:[%s1 + $0x28] sm:$0xff]
    %v46 = vld [vmem:[%s1 + $0x30] sm:$0xff]
    %v47 = vld [vmem:[%s1 + $0x38] sm:$0xff]
    %v48 = vld [vmem:[%s1 + $0x40] sm:$0xff]
    %v49 = vld [vmem:[%s1 + $0x48] sm:$0xff]
    %vm50 = vcmask 523264
    %v52 = vsel %vm50, %v38, 0
    %v55 = vsel %vm50, %v39, 0
    %57 = vmatprep.subr.mxu0 0.0
    %58 = vmatpush1.msra.mxu0 %v40
    %59 = vmatprep.subr.mxu0 0.0
    %60 = vmatpush1.msra.mxu0 %v41
    %61 = vmatprep.subr.mxu0 0.0
    %62 = vmatpush1.msra.mxu0 %v42
    %63 = vmatprep.subr.mxu0 0.0
    %64 = vmatpush1.msra.mxu0 %v43
    %65 = vmatprep.subr.mxu0 0.0
    %66 = vmatpush1.msra.mxu0 %v44
    %67 = vmatprep.subr.mxu0 0.0
    %68 = vmatpush1.msra.mxu0 %v45
    %69 = vmatprep.subr.mxu0 0.0
    %70 = vmatpush1.msra.mxu0 %v46
    %71 = vmatprep.subr.mxu0 0.0
    %72 = vmatpush1.msra.mxu0 %v47
    %73 = vmatprep.subr.mxu0 0.0
    %74 = vmatpush1.msra.mxu0 0.0
    %75 = vmatprep.subr.mxu0 0.0
    %76 = vmatpush1.msra.mxu0 0.0
    %77 = vmatprep.subr.mxu0 0.0
    %78 = vmatpush1.msra.mxu0 0.0
    %79 = vmatprep.subr.mxu0 0.0
    %80 = vmatpush1.msra.mxu0 0.0
    %81 = vmatprep.subr.mxu0 0.0
    %82 = vmatpush1.msra.mxu0 0.0
    %83 = vmatprep.subr.mxu0 0.0
    %84 = vmatpush1.msra.mxu0 0.0
    %85 = vmatprep.subr.mxu0 0.0
    %86 = vmatpush1.msra.mxu0 0.0
    %87 = vmatprep.subr.mxu0 0.0
    %88 = vmatpush1.msra.mxu0 0.0
    %89 = vmatprep.subr.mxu0 0.0
    %90 = vmatpush1.msra.mxu0 0.0
    %91 = vmatprep.subr.mxu0 0.0
    %92 = vmatpush1.msra.mxu0 0.0
    %93 = vmatprep.subr.mxu0 0.0
    %94 = vmatpush1.msra.mxu0 0.0
    %95 = vmatprep.subr.mxu0 0.0
    %96 = vmatpush1.msra.mxu0 0.0
    %97 = vmatprep.subr.mxu0 0.0
    %98 = vmatpush1.msra.mxu0 0.0
    %99 = vmatprep.subr.mxu0 0.0
    %100 = vmatpush1.msra.mxu0 0.0
    %101 = vmatprep.subr.mxu0 0.0
    %102 = vmatpush1.msra.mxu0 0.0
    %103 = vmatprep.subr.mxu0 0.0
    %104 = vmatpush1.msra.mxu0 0.0
    %105 = vmatprep.subr.mxu0 0.0
    %106 = vmatpush1.msra.mxu0 0.0
    %107 = vmatprep.subr.mxu0 0.0
    %108 = vmatpush1.msra.mxu0 0.0
    %109 = vmatprep.subr.mxu0 0.0
    %110 = vmatpush1.msra.mxu0 0.0
    %111 = vmatprep.subr.mxu0 0.0
    %112 = vmatpush1.msra.mxu0 0.0
    %113 = vmatprep.subr.mxu0 0.0
    %114 = vmatpush1.msra.mxu0 0.0
    %115 = vmatprep.subr.mxu0 0.0
    %116 = vmatpush1.msra.mxu0 0.0
    %117 = vmatprep.subr.mxu0 0.0
    %118 = vmatpush1.msra.mxu0 0.0
    %119 = vmatprep.subr.mxu0 0.0
    %120 = vmatpush1.msra.mxu0 0.0
    %121 = vmatprep.mubr.f32.mxu0 0.0
    %122 = vmatmul.mubr.f32.gmra.mrb[0].mxu0 %v52
    %v123 = vpop.f32.mrb[0].mxu0
    %v124 = vadd.f32 %v48, %v123
    %v125 = vpop.f32.mrb[0].mxu0
    %126 = vmatprep.mubr.f32.mxu0 0.0
    %127 = vmatmul.mubr.f32.gmra.mrb[0].mxu0 %v55
    %v128 = vpop.f32.mrb[0].mxu0
    %v129 = vadd.f32 %v49, %v128
    %v130 = vpop.f32.mrb[0].mxu0
    %131 = vdwg.mxu0
    %v132 = vlaneseq
    %v133 = vshrl.u32 %v132, 7
    %v134 = vadd.s32 %v133, 8
    %v135 = vand.u32 %v133, 1
    %v136 = vand.u32 %v134, 1
    %v137 = vand.u32 %v25, 1
    %vm138 = vcmp.eq.s32.totalorder %v135, %v137
    %vm139 = vcmp.eq.s32.totalorder %v136, %v137
    %v140 = vsel %vm138, 1, 0
    %v141 = vsel %vm139, 1, 0
    %v142 = vcvt.s32.f32 %v140
    %v143 = vcvt.s32.f32 %v141
    %v144 = vld [vmem:[%s2] sm:$0xff]
    %v145 = vld [vmem:[%s2 + $0x8] sm:$0xff]
    %v146 = vld [vmem:[%s2 + $0x10] sm:$0xff]
    %v147 = vld [vmem:[%s2 + $0x18] sm:$0xff]
    %v148 = vld [vmem:[%s2 + $0x20] sm:$0xff]
    %v149 = vld [vmem:[%s2 + $0x28] sm:$0xff]
    %v150 = vld [vmem:[%s2 + $0x30] sm:$0xff]
    %v151 = vld [vmem:[%s2 + $0x38] sm:$0xff]
    %v152 = vld [vmem:[%s2 + $0x40] sm:$0xff]
    %v153 = vld [vmem:[%s2 + $0x48] sm:$0xff]
    %v154 = vld [vmem:[%s2 + $0x50] sm:$0xff]
    %v155 = vld [vmem:[%s2 + $0x58] sm:$0xff]
    %s156 = scalar_lea.vmem %s2, 96
    %v157 = vld [vmem:[%s156] sm:$0xff]
    %v158 = vld [vmem:[%s156 + $0x8] sm:$0xff]
    %v159 = vld [vmem:[%s156 + $0x10] sm:$0xff]
    %v160 = vld [vmem:[%s156 + $0x18] sm:$0xff]
    %v161 = vld [vmem:[%s1 + $0x50] sm:$0xff]
    %v162 = vld [vmem:[%s1 + $0x58] sm:$0xff]
    %v163 = vld [vmem:[%s1 + $0x60] sm:$0xff]
    %v164 = vld [vmem:[%s1 + $0x68] sm:$0xff]
    %v165 = vld [vmem:[%s1 + $0x70] sm:$0xff]
    %v166 = vld [vmem:[%s1 + $0x78] sm:$0xff]
    %v167 = vld [vmem:[%s1 + $0x80] sm:$0xff]
    %v168 = vld [vmem:[%s1 + $0x88] sm:$0xff]
    %v169 = vld [vmem:[%s1 + $0x90] sm:$0xff]
    %v170 = vld [vmem:[%s3] sm:$0xff]
    %v171 = vld [vmem:[%s3 + $0x8] sm:$0xff]
    %v172 = vld [vmem:[%s3 + $0x10] sm:$0xff]
    %v173 = vld [vmem:[%s3 + $0x18] sm:$0xff]
    %v174 = vld [vmem:[%s3 + $0x20] sm:$0x1]
    %v175 = vld [vmem:[%s5] sm:$0xff]
    %v176 = vld [vmem:[%s5 + $0x8] sm:$0xff]
    %v177 = vld [vmem:[%s5 + $0x10] sm:$0xff]
    %v178 = vld [vmem:[%s5 + $0x18] sm:$0xff]
    %v179 = vld [vmem:[%s5 + $0x20] sm:$0xff]
    %v180 = vld [vmem:[%s5 + $0x28] sm:$0xff]
    %v181 = vld [vmem:[%s5 + $0x30] sm:$0xff]
    %v182 = vld [vmem:[%s5 + $0x38] sm:$0xff]
    %v183 = vld [vmem:[%s5 + $0x40] sm:$0xff]
    %v184 = vld [vmem:[%s5 + $0x48] sm:$0xff]
    %v185 = vld [vmem:[%s5 + $0x50] sm:$0xff]
    %v186 = vld [vmem:[%s5 + $0x58] sm:$0xff]
    %v187 = vld [vmem:[%s5 + $0x60] sm:$0xff]
    %v188 = vld [vmem:[%s5 + $0x68] sm:$0xff]
    %v189 = vld [vmem:[%s5 + $0x70] sm:$0xff]
    %v190 = vld [vmem:[%s5 + $0x78] sm:$0xff]
    %v191 = vld [vmem:[%s5 + $0x80] sm:$0xff]
    %v192 = vld [vmem:[%s5 + $0x88] sm:$0xff]
    %v193 = vld [vmem:[%s5 + $0x90] sm:$0xff]
    %v194 = vld [vmem:[%s5 + $0x98] sm:$0xff]
    %v195 = vld [vmem:[%s5 + $0xa0] sm:$0xff]
    %v196 = vld [vmem:[%s5 + $0xa8] sm:$0xff]
    %v197 = vld [vmem:[%s5 + $0xb0] sm:$0xff]
    %v198 = vld [vmem:[%s5 + $0xb8] sm:$0xff]
    %vm199 = vcmask 261120
    %v201 = vsel %vm199, %v124, 0
    %v204 = vsel %vm199, %v129, 0
    %v207 = vsel %vm199, %v144, 0
    %209 = vmatprep.subr.mxu0 0.0
    %210 = vmatpush1.xpose.msra.mxu0 %v207
    %211 = vmatprep.subr.mxu0 0.0
    %212 = vmatpush1.xpose.msra.mxu0 0.0
    %213 = vmatprep.subr.mxu0 0.0
    %214 = vmatpush1.xpose.msra.mxu0 0.0
    %215 = vmatprep.subr.mxu0 0.0
    %216 = vmatpush1.xpose.msra.mxu0 0.0
    %217 = vmatprep.subr.mxu0 0.0
    %218 = vmatpush1.xpose.msra.mxu0 0.0
    %219 = vmatprep.subr.mxu0 0.0
    %220 = vmatpush1.xpose.msra.mxu0 0.0
    %221 = vmatprep.subr.mxu0 0.0
    %222 = vmatpush1.xpose.msra.mxu0 0.0
    %223 = vmatprep.subr.mxu0 0.0
    %224 = vmatpush1.xpose.msra.mxu0 0.0
    %225 = vmatprep.subr.mxu0 0.0
    %226 = vmatpush1.xpose.msra.mxu0 0.0
    %227 = vmatprep.subr.mxu0 0.0
    %228 = vmatpush1.xpose.msra.mxu0 0.0
    %229 = vmatprep.subr.mxu0 0.0
    %230 = vmatpush1.xpose.msra.mxu0 0.0
    %231 = vmatprep.subr.mxu0 0.0
    %232 = vmatpush1.xpose.msra.mxu0 0.0
    %233 = vmatprep.subr.mxu0 0.0
    %234 = vmatpush1.xpose.msra.mxu0 0.0
    %235 = vmatprep.subr.mxu0 0.0
    %236 = vmatpush1.xpose.msra.mxu0 0.0
    %237 = vmatprep.subr.mxu0 0.0
    %238 = vmatpush1.xpose.msra.mxu0 0.0
    %239 = vmatprep.subr.mxu0 0.0
    %240 = vmatpush1.xpose.msra.mxu0 0.0
    %241 = vmatprep.subr.mxu0 0.0
    %242 = vmatpush1.xpose.msra.mxu0 0.0
    %243 = vmatprep.subr.mxu0 0.0
    %244 = vmatpush1.xpose.msra.mxu0 0.0
    %245 = vmatprep.subr.mxu0 0.0
    %246 = vmatpush1.xpose.msra.mxu0 0.0
    %247 = vmatprep.subr.mxu0 0.0
    %248 = vmatpush1.xpose.msra.mxu0 0.0
    %249 = vmatprep.subr.mxu0 0.0
    %250 = vmatpush1.xpose.msra.mxu0 0.0
    %251 = vmatprep.subr.mxu0 0.0
    %252 = vmatpush1.xpose.msra.mxu0 0.0
    %253 = vmatprep.subr.mxu0 0.0
    %254 = vmatpush1.xpose.msra.mxu0 0.0
    %255 = vmatprep.subr.mxu0 0.0
    %256 = vmatpush1.xpose.msra.mxu0 0.0
    %257 = vmatprep.subr.mxu0 0.0
    %258 = vmatpush1.xpose.msra.mxu0 0.0
    %259 = vmatprep.subr.mxu0 0.0
    %260 = vmatpush1.xpose.msra.mxu0 0.0
    %261 = vmatprep.subr.mxu0 0.0
    %262 = vmatpush1.xpose.msra.mxu0 0.0
    %263 = vmatprep.subr.mxu0 0.0
    %264 = vmatpush1.xpose.msra.mxu0 0.0
    %265 = vmatprep.subr.mxu0 0.0
    %266 = vmatpush1.xpose.msra.mxu0 0.0
    %267 = vmatprep.subr.mxu0 0.0
    %268 = vmatpush1.xpose.msra.mxu0 0.0
    %269 = vmatprep.subr.mxu0 0.0
    %270 = vmatpush1.xpose.msra.mxu0 0.0
    %271 = vmatprep.subr.mxu0 0.0
    %272 = vmatpush1.xpose.msra.mxu0 0.0
    %273 = vmatprep.mubr.f32.mxu0 0.0
    %274 = vmatmul.mubr.f32.gmra.mrb[0].mxu0 %v201
    %v275 = vpop.f32.mrb[0].mxu0
    %v276 = vadd.f32 %v175, %v275
    %v277 = vpop.f32.mrb[0].mxu0
    %278 = vmatprep.mubr.f32.mxu0 0.0
    %279 = vmatmul.mubr.f32.gmra.mrb[0].mxu0 %v204
    %v280 = vpop.f32.mrb[0].mxu0
    %v281 = vadd.f32 %v176, %v280
    %v282 = vpop.f32.mrb[0].mxu0
    %283 = vdwg.mxu0
    %v285 = vsel %vm199, %v145, 0
    %287 = vmatprep.subr.mxu0 0.0
    %288 = vmatpush1.xpose.msra.mxu0 %v285
    %289 = vmatprep.subr.mxu0 0.0
    %290 = vmatpush1.xpose.msra.mxu0 0.0
    %291 = vmatprep.subr.mxu0 0.0
    %292 = vmatpush1.xpose.msra.mxu0 0.0
    %293 = vmatprep.subr.mxu0 0.0
    %294 = vmatpush1.xpose.msra.mxu0 0.0
    %295 = vmatprep.subr.mxu0 0.0
    %296 = vmatpush1.xpose.msra.mxu0 0.0
    %297 = vmatprep.subr.mxu0 0.0
    %298 = vmatpush1.xpose.msra.mxu0 0.0
    %299 = vmatprep.subr.mxu0 0.0
    %300 = vmatpush1.xpose.msra.mxu0 0.0
    %301 = vmatprep.subr.mxu0 0.0
    %302 = vmatpush1.xpose.msra.mxu0 0.0
    %303 = vmatprep.subr.mxu0 0.0
    %304 = vmatpush1.xpose.msra.mxu0 0.0
    %305 = vmatprep.subr.mxu0 0.0
    %306 = vmatpush1.xpose.msra.mxu0 0.0
    %307 = vmatprep.subr.mxu0 0.0
    %308 = vmatpush1.xpose.msra.mxu0 0.0
    %309 = vmatprep.subr.mxu0 0.0
    %310 = vmatpush1.xpose.msra.mxu0 0.0
    %311 = vmatprep.subr.mxu0 0.0
    %312 = vmatpush1.xpose.msra.mxu0 0.0
    %313 = vmatprep.subr.mxu0 0.0
    %314 = vmatpush1.xpose.msra.mxu0 0.0
    %315 = vmatprep.subr.mxu0 0.0
    %316 = vmatpush1.xpose.msra.mxu0 0.0
    %317 = vmatprep.subr.mxu0 0.0
    %318 = vmatpush1.xpose.msra.mxu0 0.0
    %319 = vmatprep.subr.mxu0 0.0
    %320 = vmatpush1.xpose.msra.mxu0 0.0
    %321 = vmatprep.subr.mxu0 0.0
    %322 = vmatpush1.xpose.msra.mxu0 0.0
    %323 = vmatprep.subr.mxu0 0.0
    %324 = vmatpush1.xpose.msra.mxu0 0.0
    %325 = vmatprep.subr.mxu0 0.0
    %326 = vmatpush1.xpose.msra.mxu0 0.0
    %327 = vmatprep.subr.mxu0 0.0
    %328 = vmatpush1.xpose.msra.mxu0 0.0
    %329 = vmatprep.subr.mxu0 0.0
    %330 = vmatpush1.xpose.msra.mxu0 0.0
    %331 = vmatprep.subr.mxu0 0.0
    %332 = vmatpush1.xpose.msra.mxu0 0.0
    %333 = vmatprep.subr.mxu0 0.0
    %334 = vmatpush1.xpose.msra.mxu0 0.0
    %335 = vmatprep.subr.mxu0 0.0
    %336 = vmatpush1.xpose.msra.mxu0 0.0
    %337 = vmatprep.subr.mxu0 0.0
    %338 = vmatpush1.xpose.msra.mxu0 0.0
    %339 = vmatprep.subr.mxu0 0.0
    %340 = vmatpush1.xpose.msra.mxu0 0.0
    %341 = vmatprep.subr.mxu0 0.0
    %342 = vmatpush1.xpose.msra.mxu0 0.0
    %343 = vmatprep.subr.mxu0 0.0
    %344 = vmatpush1.xpose.msra.mxu0 0.0
    %345 = vmatprep.subr.mxu0 0.0
    %346 = vmatpush1.xpose.msra.mxu0 0.0
    %347 = vmatprep.subr.mxu0 0.0
    %348 = vmatpush1.xpose.msra.mxu0 0.0
    %349 = vmatprep.subr.mxu0 0.0
    %350 = vmatpush1.xpose.msra.mxu0 0.0
    %351 = vmatprep.mubr.f32.mxu0 0.0
    %352 = vmatmul.mubr.f32.gmra.mrb[0].mxu0 %v201
    %v353 = vpop.f32.mrb[0].mxu0
    %v354 = vadd.f32 %v177, %v353
    %v355 = vpop.f32.mrb[0].mxu0
    %356 = vmatprep.mubr.f32.mxu0 0.0
    %357 = vmatmul.mubr.f32.gmra.mrb[0].mxu0 %v204
    %v358 = vpop.f32.mrb[0].mxu0
    %v359 = vadd.f32 %v178, %v358
    %v360 = vpop.f32.mrb[0].mxu0
    %361 = vdwg.mxu0
    %v363 = vsel %vm199, %v146, 0
    %365 = vmatprep.subr.mxu0 0.0
    %366 = vmatpush1.xpose.msra.mxu0 %v363
    %367 = vmatprep.subr.mxu0 0.0
    %368 = vmatpush1.xpose.msra.mxu0 0.0
    %369 = vmatprep.subr.mxu0 0.0
    %370 = vmatpush1.xpose.msra.mxu0 0.0
    %371 = vmatprep.subr.mxu0 0.0
    %372 = vmatpush1.xpose.msra.mxu0 0.0
    %373 = vmatprep.subr.mxu0 0.0
    %374 = vmatpush1.xpose.msra.mxu0 0.0
    %375 = vmatprep.subr.mxu0 0.0
    %376 = vmatpush1.xpose.msra.mxu0 0.0
    %377 = vmatprep.subr.mxu0 0.0
    %378 = vmatpush1.xpose.msra.mxu0 0.0
    %379 = vmatprep.subr.mxu0 0.0
    %380 = vmatpush1.xpose.msra.mxu0 0.0
    %381 = vmatprep.subr.mxu0 0.0
    %382 = vmatpush1.xpose.msra.mxu0 0.0
    %383 = vmatprep.subr.mxu0 0.0
    %384 = vmatpush1.xpose.msra.mxu0 0.0
    %385 = vmatprep.subr.mxu0 0.0
    %386 = vmatpush1.xpose.msra.mxu0 0.0
    %387 = vmatprep.subr.mxu0 0.0
    %388 = vmatpush1.xpose.msra.mxu0 0.0
    %389 = vmatprep.subr.mxu0 0.0
    %390 = vmatpush1.xpose.msra.mxu0 0.0
    %391 = vmatprep.subr.mxu0 0.0
    %392 = vmatpush1.xpose.msra.mxu0 0.0
    %393 = vmatprep.subr.mxu0 0.0
    %394 = vmatpush1.xpose.msra.mxu0 0.0
    %395 = vmatprep.subr.mxu0 0.0
    %396 = vmatpush1.xpose.msra.mxu0 0.0
    %397 = vmatprep.subr.mxu0 0.0
    %398 = vmatpush1.xpose.msra.mxu0 0.0
    %399 = vmatprep.subr.mxu0 0.0
    %400 = vmatpush1.xpose.msra.mxu0 0.0
    %401 = vmatprep.subr.mxu0 0.0
    %402 = vmatpush1.xpose.msra.mxu0 0.0
    %403 = vmatprep.subr.mxu0 0.0
    %404 = vmatpush1.xpose.msra.mxu0 0.0
    %405 = vmatprep.subr.mxu0 0.0
    %406 = vmatpush1.xpose.msra.mxu0 0.0
    %407 = vmatprep.subr.mxu0 0.0
    %408 = vmatpush1.xpose.msra.mxu0 0.0
    %409 = vmatprep.subr.mxu0 0.0
    %410 = vmatpush1.xpose.msra.mxu0 0.0
    %411 = vmatprep.subr.mxu0 0.0
    %412 = vmatpush1.xpose.msra.mxu0 0.0
    %413 = vmatprep.subr.mxu0 0.0
    %414 = vmatpush1.xpose.msra.mxu0 0.0
    %415 = vmatprep.subr.mxu0 0.0
    %416 = vmatpush1.xpose.msra.mxu0 0.0
    %417 = vmatprep.subr.mxu0 0.0
    %418 = vmatpush1.xpose.msra.mxu0 0.0
    %419 = vmatprep.subr.mxu0 0.0
    %420 = vmatpush1.xpose.msra.mxu0 0.0
    %421 = vmatprep.subr.mxu0 0.0
    %422 = vmatpush1.xpose.msra.mxu0 0.0
    %423 = vmatprep.subr.mxu0 0.0
    %424 = vmatpush1.xpose.msra.mxu0 0.0
    %425 = vmatprep.subr.mxu0 0.0
    %426 = vmatpush1.xpose.msra.mxu0 0.0
    %427 = vmatprep.subr.mxu0 0.0
    %428 = vmatpush1.xpose.msra.mxu0 0.0
    %429 = vmatprep.mubr.f32.mxu0 0.0
    %430 = vmatmul.mubr.f32.gmra.mrb[0].mxu0 %v201
    %v431 = vpop.f32.mrb[0].mxu0
    %v432 = vadd.f32 %v179, %v431
    %v433 = vpop.f32.mrb[0].mxu0
    %434 = vmatprep.mubr.f32.mxu0 0.0
    %435 = vmatmul.mubr.f32.gmra.mrb[0].mxu0 %v204
    %v436 = vpop.f32.mrb[0].mxu0
    %v437 = vadd.f32 %v180, %v436
    %v438 = vpop.f32.mrb[0].mxu0
    %439 = vdwg.mxu0
    %v441 = vsel %vm199, %v147, 0
    %443 = vmatprep.subr.mxu0 0.0
    %444 = vmatpush1.xpose.msra.mxu0 %v441
    %445 = vmatprep.subr.mxu0 0.0
    %446 = vmatpush1.xpose.msra.mxu0 0.0
    %447 = vmatprep.subr.mxu0 0.0
    %448 = vmatpush1.xpose.msra.mxu0 0.0
    %449 = vmatprep.subr.mxu0 0.0
    %450 = vmatpush1.xpose.msra.mxu0 0.0
    %451 = vmatprep.subr.mxu0 0.0
    %452 = vmatpush1.xpose.msra.mxu0 0.0
    %453 = vmatprep.subr.mxu0 0.0
    %454 = vmatpush1.xpose.msra.mxu0 0.0
    %455 = vmatprep.subr.mxu0 0.0
    %456 = vmatpush1.xpose.msra.mxu0 0.0
    %457 = vmatprep.subr.mxu0 0.0
    %458 = vmatpush1.xpose.msra.mxu0 0.0
    %459 = vmatprep.subr.mxu0 0.0
    %460 = vmatpush1.xpose.msra.mxu0 0.0
    %461 = vmatprep.subr.mxu0 0.0
    %462 = vmatpush1.xpose.msra.mxu0 0.0
    %463 = vmatprep.subr.mxu0 0.0
    %464 = vmatpush1.xpose.msra.mxu0 0.0
    %465 = vmatprep.subr.mxu0 0.0
    %466 = vmatpush1.xpose.msra.mxu0 0.0
    %467 = vmatprep.subr.mxu0 0.0
    %468 = vmatpush1.xpose.msra.mxu0 0.0
    %469 = vmatprep.subr.mxu0 0.0
    %470 = vmatpush1.xpose.msra.mxu0 0.0
    %471 = vmatprep.subr.mxu0 0.0
    %472 = vmatpush1.xpose.msra.mxu0 0.0
    %473 = vmatprep.subr.mxu0 0.0
    %474 = vmatpush1.xpose.msra.mxu0 0.0
    %475 = vmatprep.subr.mxu0 0.0
    %476 = vmatpush1.xpose.msra.mxu0 0.0
    %477 = vmatprep.subr.mxu0 0.0
    %478 = vmatpush1.xpose.msra.mxu0 0.0
    %479 = vmatprep.subr.mxu0 0.0
    %480 = vmatpush1.xpose.msra.mxu0 0.0
    %481 = vmatprep.subr.mxu0 0.0
    %482 = vmatpush1.xpose.msra.mxu0 0.0
    %483 = vmatprep.subr.mxu0 0.0
    %484 = vmatpush1.xpose.msra.mxu0 0.0
    %485 = vmatprep.subr.mxu0 0.0
    %486 = vmatpush1.xpose.msra.mxu0 0.0
    %487 = vmatprep.subr.mxu0 0.0
    %488 = vmatpush1.xpose.msra.mxu0 0.0
    %489 = vmatprep.subr.mxu0 0.0
    %490 = vmatpush1.xpose.msra.mxu0 0.0
    %491 = vmatprep.subr.mxu0 0.0
    %492 = vmatpush1.xpose.msra.mxu0 0.0
    %493 = vmatprep.subr.mxu0 0.0
    %494 = vmatpush1.xpose.msra.mxu0 0.0
    %495 = vmatprep.subr.mxu0 0.0
    %496 = vmatpush1.xpose.msra.mxu0 0.0
    %497 = vmatprep.subr.mxu0 0.0
    %498 = vmatpush1.xpose.msra.mxu0 0.0
    %499 = vmatprep.subr.mxu0 0.0
    %500 = vmatpush1.xpose.msra.mxu0 0.0
    %501 = vmatprep.subr.mxu0 0.0
    %502 = vmatpush1.xpose.msra.mxu0 0.0
    %503 = vmatprep.subr.mxu0 0.0
    %504 = vmatpush1.xpose.msra.mxu0 0.0
    %505 = vmatprep.subr.mxu0 0.0
    %506 = vmatpush1.xpose.msra.mxu0 0.0
    %507 = vmatprep.mubr.f32.mxu0 0.0
    %508 = vmatmul.mubr.f32.gmra.mrb[0].mxu0 %v201
    %v509 = vpop.f32.mrb[0].mxu0
    %v510 = vadd.f32 %v181, %v509
    %v511 = vpop.f32.mrb[0].mxu0
    %512 = vmatprep.mubr.f32.mxu0 0.0
    %513 = vmatmul.mubr.f32.gmra.mrb[0].mxu0 %v204
    %v514 = vpop.f32.mrb[0].mxu0
    %v515 = vadd.f32 %v182, %v514
    %v516 = vpop.f32.mrb[0].mxu0
    %517 = vdwg.mxu0
    %v519 = vsel %vm199, %v148, 0
    %521 = vmatprep.subr.mxu0 0.0
    %522 = vmatpush1.xpose.msra.mxu0 %v519
    %523 = vmatprep.subr.mxu0 0.0
    %524 = vmatpush1.xpose.msra.mxu0 0.0
    %525 = vmatprep.subr.mxu0 0.0
    %526 = vmatpush1.xpose.msra.mxu0 0.0
    %527 = vmatprep.subr.mxu0 0.0
    %528 = vmatpush1.xpose.msra.mxu0 0.0
    %529 = vmatprep.subr.mxu0 0.0
    %530 = vmatpush1.xpose.msra.mxu0 0.0
    %531 = vmatprep.subr.mxu0 0.0
    %532 = vmatpush1.xpose.msra.mxu0 0.0
    %533 = vmatprep.subr.mxu0 0.0
    %534 = vmatpush1.xpose.msra.mxu0 0.0
    %535 = vmatprep.subr.mxu0 0.0
    %536 = vmatpush1.xpose.msra.mxu0 0.0
    %537 = vmatprep.subr.mxu0 0.0
    %538 = vmatpush1.xpose.msra.mxu0 0.0
    %539 = vmatprep.subr.mxu0 0.0
    %540 = vmatpush1.xpose.msra.mxu0 0.0
    %541 = vmatprep.subr.mxu0 0.0
    %542 = vmatpush1.xpose.msra.mxu0 0.0
    %543 = vmatprep.subr.mxu0 0.0
    %544 = vmatpush1.xpose.msra.mxu0 0.0
    %545 = vmatprep.subr.mxu0 0.0
    %546 = vmatpush1.xpose.msra.mxu0 0.0
    %547 = vmatprep.subr.mxu0 0.0
    %548 = vmatpush1.xpose.msra.mxu0 0.0
    %549 = vmatprep.subr.mxu0 0.0
    %550 = vmatpush1.xpose.msra.mxu0 0.0
    %551 = vmatprep.subr.mxu0 0.0
    %552 = vmatpush1.xpose.msra.mxu0 0.0
    %553 = vmatprep.subr.mxu0 0.0
    %554 = vmatpush1.xpose.msra.mxu0 0.0
    %555 = vmatprep.subr.mxu0 0.0
    %556 = vmatpush1.xpose.msra.mxu0 0.0
    %557 = vmatprep.subr.mxu0 0.0
    %558 = vmatpush1.xpose.msra.mxu0 0.0
    %559 = vmatprep.subr.mxu0 0.0
    %560 = vmatpush1.xpose.msra.mxu0 0.0
    %561 = vmatprep.subr.mxu0 0.0
    %562 = vmatpush1.xpose.msra.mxu0 0.0
    %563 = vmatprep.subr.mxu0 0.0
    %564 = vmatpush1.xpose.msra.mxu0 0.0
    %565 = vmatprep.subr.mxu0 0.0
    %566 = vmatpush1.xpose.msra.mxu0 0.0
    %567 = vmatprep.subr.mxu0 0.0
    %568 = vmatpush1.xpose.msra.mxu0 0.0
    %569 = vmatprep.subr.mxu0 0.0
    %570 = vmatpush1.xpose.msra.mxu0 0.0
    %571 = vmatprep.subr.mxu0 0.0
    %572 = vmatpush1.xpose.msra.mxu0 0.0
    %573 = vmatprep.subr.mxu0 0.0
    %574 = vmatpush1.xpose.msra.mxu0 0.0
    %575 = vmatprep.subr.mxu0 0.0
    %576 = vmatpush1.xpose.msra.mxu0 0.0
    %577 = vmatprep.subr.mxu0 0.0
    %578 = vmatpush1.xpose.msra.mxu0 0.0
    %579 = vmatprep.subr.mxu0 0.0
    %580 = vmatpush1.xpose.msra.mxu0 0.0
    %581 = vmatprep.subr.mxu0 0.0
    %582 = vmatpush1.xpose.msra.mxu0 0.0
    %583 = vmatprep.subr.mxu0 0.0
    %584 = vmatpush1.xpose.msra.mxu0 0.0
    %585 = vmatprep.mubr.f32.mxu0 0.0
    %586 = vmatmul.mubr.f32.gmra.mrb[0].mxu0 %v201
    %v587 = vpop.f32.mrb[0].mxu0
    %v588 = vadd.f32 %v183, %v587
    %v589 = vpop.f32.mrb[0].mxu0
    %590 = vmatprep.mubr.f32.mxu0 0.0
    %591 = vmatmul.mubr.f32.gmra.mrb[0].mxu0 %v204
    %v592 = vpop.f32.mrb[0].mxu0
    %v593 = vadd.f32 %v184, %v592
    %v594 = vpop.f32.mrb[0].mxu0
    %595 = vdwg.mxu0
    %v597 = vsel %vm199, %v149, 0
    %599 = vmatprep.subr.mxu0 0.0
    %600 = vmatpush1.xpose.msra.mxu0 %v597
    %601 = vmatprep.subr.mxu0 0.0
    %602 = vmatpush1.xpose.msra.mxu0 0.0
    %603 = vmatprep.subr.mxu0 0.0
    %604 = vmatpush1.xpose.msra.mxu0 0.0
    %605 = vmatprep.subr.mxu0 0.0
    %606 = vmatpush1.xpose.msra.mxu0 0.0
    %607 = vmatprep.subr.mxu0 0.0
    %608 = vmatpush1.xpose.msra.mxu0 0.0
    %609 = vmatprep.subr.mxu0 0.0
    %610 = vmatpush1.xpose.msra.mxu0 0.0
    %611 = vmatprep.subr.mxu0 0.0
    %612 = vmatpush1.xpose.msra.mxu0 0.0
    %613 = vmatprep.subr.mxu0 0.0
    %614 = vmatpush1.xpose.msra.mxu0 0.0
    %615 = vmatprep.subr.mxu0 0.0
    %616 = vmatpush1.xpose.msra.mxu0 0.0
    %617 = vmatprep.subr.mxu0 0.0
    %618 = vmatpush1.xpose.msra.mxu0 0.0
    %619 = vmatprep.subr.mxu0 0.0
    %620 = vmatpush1.xpose.msra.mxu0 0.0
    %621 = vmatprep.subr.mxu0 0.0
    %622 = vmatpush1.xpose.msra.mxu0 0.0
    %623 = vmatprep.subr.mxu0 0.0
    %624 = vmatpush1.xpose.msra.mxu0 0.0
    %625 = vmatprep.subr.mxu0 0.0
    %626 = vmatpush1.xpose.msra.mxu0 0.0
    %627 = vmatprep.subr.mxu0 0.0
    %628 = vmatpush1.xpose.msra.mxu0 0.0
    %629 = vmatprep.subr.mxu0 0.0
    %630 = vmatpush1.xpose.msra.mxu0 0.0
    %631 = vmatprep.subr.mxu0 0.0
    %632 = vmatpush1.xpose.msra.mxu0 0.0
    %633 = vmatprep.subr.mxu0 0.0
    %634 = vmatpush1.xpose.msra.mxu0 0.0
    %635 = vmatprep.subr.mxu0 0.0
    %636 = vmatpush1.xpose.msra.mxu0 0.0
    %637 = vmatprep.subr.mxu0 0.0
    %638 = vmatpush1.xpose.msra.mxu0 0.0
    %639 = vmatprep.subr.mxu0 0.0
    %640 = vmatpush1.xpose.msra.mxu0 0.0
    %641 = vmatprep.subr.mxu0 0.0
    %642 = vmatpush1.xpose.msra.mxu0 0.0
    %643 = vmatprep.subr.mxu0 0.0
    %644 = vmatpush1.xpose.msra.mxu0 0.0
    %645 = vmatprep.subr.mxu0 0.0
    %646 = vmatpush1.xpose.msra.mxu0 0.0
    %647 = vmatprep.subr.mxu0 0.0
    %648 = vmatpush1.xpose.msra.mxu0 0.0
    %649 = vmatprep.subr.mxu0 0.0
    %650 = vmatpush1.xpose.msra.mxu0 0.0
    %651 = vmatprep.subr.mxu0 0.0
    %652 = vmatpush1.xpose.msra.mxu0 0.0
    %653 = vmatprep.subr.mxu0 0.0
    %654 = vmatpush1.xpose.msra.mxu0 0.0
    %655 = vmatprep.subr.mxu0 0.0
    %656 = vmatpush1.xpose.msra.mxu0 0.0
    %657 = vmatprep.subr.mxu0 0.0
    %658 = vmatpush1.xpose.msra.mxu0 0.0
    %659 = vmatprep.subr.mxu0 0.0
    %660 = vmatpush1.xpose.msra.mxu0 0.0
    %661 = vmatprep.subr.mxu0 0.0
    %662 = vmatpush1.xpose.msra.mxu0 0.0
    %663 = vmatprep.mubr.f32.mxu0 0.0
    %664 = vmatmul.mubr.f32.gmra.mrb[0].mxu0 %v201
    %v665 = vpop.f32.mrb[0].mxu0
    %v666 = vadd.f32 %v185, %v665
    %v667 = vpop.f32.mrb[0].mxu0
    %668 = vmatprep.mubr.f32.mxu0 0.0
    %669 = vmatmul.mubr.f32.gmra.mrb[0].mxu0 %v204
    %v670 = vpop.f32.mrb[0].mxu0
    %v671 = vadd.f32 %v186, %v670
    %v672 = vpop.f32.mrb[0].mxu0
    %673 = vdwg.mxu0
    %v675 = vsel %vm199, %v150, 0
    %677 = vmatprep.subr.mxu0 0.0
    %678 = vmatpush1.xpose.msra.mxu0 %v675
    %679 = vmatprep.subr.mxu0 0.0
    %680 = vmatpush1.xpose.msra.mxu0 0.0
    %681 = vmatprep.subr.mxu0 0.0
    %682 = vmatpush1.xpose.msra.mxu0 0.0
    %683 = vmatprep.subr.mxu0 0.0
    %684 = vmatpush1.xpose.msra.mxu0 0.0
    %685 = vmatprep.subr.mxu0 0.0
    %686 = vmatpush1.xpose.msra.mxu0 0.0
    %687 = vmatprep.subr.mxu0 0.0
    %688 = vmatpush1.xpose.msra.mxu0 0.0
    %689 = vmatprep.subr.mxu0 0.0
    %690 = vmatpush1.xpose.msra.mxu0 0.0
    %691 = vmatprep.subr.mxu0 0.0
    %692 = vmatpush1.xpose.msra.mxu0 0.0
    %693 = vmatprep.subr.mxu0 0.0
    %694 = vmatpush1.xpose.msra.mxu0 0.0
    %695 = vmatprep.subr.mxu0 0.0
    %696 = vmatpush1.xpose.msra.mxu0 0.0
    %697 = vmatprep.subr.mxu0 0.0
    %698 = vmatpush1.xpose.msra.mxu0 0.0
    %699 = vmatprep.subr.mxu0 0.0
    %700 = vmatpush1.xpose.msra.mxu0 0.0
    %701 = vmatprep.subr.mxu0 0.0
    %702 = vmatpush1.xpose.msra.mxu0 0.0
    %703 = vmatprep.subr.mxu0 0.0
    %704 = vmatpush1.xpose.msra.mxu0 0.0
    %705 = vmatprep.subr.mxu0 0.0
    %706 = vmatpush1.xpose.msra.mxu0 0.0
    %707 = vmatprep.subr.mxu0 0.0
    %708 = vmatpush1.xpose.msra.mxu0 0.0
    %709 = vmatprep.subr.mxu0 0.0
    %710 = vmatpush1.xpose.msra.mxu0 0.0
    %711 = vmatprep.subr.mxu0 0.0
    %712 = vmatpush1.xpose.msra.mxu0 0.0
    %713 = vmatprep.subr.mxu0 0.0
    %714 = vmatpush1.xpose.msra.mxu0 0.0
    %715 = vmatprep.subr.mxu0 0.0
    %716 = vmatpush1.xpose.msra.mxu0 0.0
    %717 = vmatprep.subr.mxu0 0.0
    %718 = vmatpush1.xpose.msra.mxu0 0.0
    %719 = vmatprep.subr.mxu0 0.0
    %720 = vmatpush1.xpose.msra.mxu0 0.0
    %721 = vmatprep.subr.mxu0 0.0
    %722 = vmatpush1.xpose.msra.mxu0 0.0
    %723 = vmatprep.subr.mxu0 0.0
    %724 = vmatpush1.xpose.msra.mxu0 0.0
    %725 = vmatprep.subr.mxu0 0.0
    %726 = vmatpush1.xpose.msra.mxu0 0.0
    %727 = vmatprep.subr.mxu0 0.0
    %728 = vmatpush1.xpose.msra.mxu0 0.0
    %729 = vmatprep.subr.mxu0 0.0
    %730 = vmatpush1.xpose.msra.mxu0 0.0
    %731 = vmatprep.subr.mxu0 0.0
    %732 = vmatpush1.xpose.msra.mxu0 0.0
    %733 = vmatprep.subr.mxu0 0.0
    %734 = vmatpush1.xpose.msra.mxu0 0.0
    %735 = vmatprep.subr.mxu0 0.0
    %736 = vmatpush1.xpose.msra.mxu0 0.0
    %737 = vmatprep.subr.mxu0 0.0
    %738 = vmatpush1.xpose.msra.mxu0 0.0
    %739 = vmatprep.subr.mxu0 0.0
    %740 = vmatpush1.xpose.msra.mxu0 0.0
    %741 = vmatprep.mubr.f32.mxu0 0.0
    %742 = vmatmul.mubr.f32.gmra.mrb[0].mxu0 %v201
    %v743 = vpop.f32.mrb[0].mxu0
    %v744 = vadd.f32 %v187, %v743
    %v745 = vpop.f32.mrb[0].mxu0
    %746 = vmatprep.mubr.f32.mxu0 0.0
    %747 = vmatmul.mubr.f32.gmra.mrb[0].mxu0 %v204
    %v748 = vpop.f32.mrb[0].mxu0
    %v749 = vadd.f32 %v188, %v748
    %v750 = vpop.f32.mrb[0].mxu0
    %751 = vdwg.mxu0
    %v753 = vsel %vm199, %v151, 0
    %755 = vmatprep.subr.mxu0 0.0
    %756 = vmatpush1.xpose.msra.mxu0 %v753
    %757 = vmatprep.subr.mxu0 0.0
    %758 = vmatpush1.xpose.msra.mxu0 0.0
    %759 = vmatprep.subr.mxu0 0.0
    %760 = vmatpush1.xpose.msra.mxu0 0.0
    %761 = vmatprep.subr.mxu0 0.0
    %762 = vmatpush1.xpose.msra.mxu0 0.0
    %763 = vmatprep.subr.mxu0 0.0
    %764 = vmatpush1.xpose.msra.mxu0 0.0
    %765 = vmatprep.subr.mxu0 0.0
    %766 = vmatpush1.xpose.msra.mxu0 0.0
    %767 = vmatprep.subr.mxu0 0.0
    %768 = vmatpush1.xpose.msra.mxu0 0.0
    %769 = vmatprep.subr.mxu0 0.0
    %770 = vmatpush1.xpose.msra.mxu0 0.0
    %771 = vmatprep.subr.mxu0 0.0
    %772 = vmatpush1.xpose.msra.mxu0 0.0
    %773 = vmatprep.subr.mxu0 0.0
    %774 = vmatpush1.xpose.msra.mxu0 0.0
    %775 = vmatprep.subr.mxu0 0.0
    %776 = vmatpush1.xpose.msra.mxu0 0.0
    %777 = vmatprep.subr.mxu0 0.0
    %778 = vmatpush1.xpose.msra.mxu0 0.0
    %779 = vmatprep.subr.mxu0 0.0
    %780 = vmatpush1.xpose.msra.mxu0 0.0
    %781 = vmatprep.subr.mxu0 0.0
    %782 = vmatpush1.xpose.msra.mxu0 0.0
    %783 = vmatprep.subr.mxu0 0.0
    %784 = vmatpush1.xpose.msra.mxu0 0.0
    %785 = vmatprep.subr.mxu0 0.0
    %786 = vmatpush1.xpose.msra.mxu0 0.0
    %787 = vmatprep.subr.mxu0 0.0
    %788 = vmatpush1.xpose.msra.mxu0 0.0
    %789 = vmatprep.subr.mxu0 0.0
    %790 = vmatpush1.xpose.msra.mxu0 0.0
    %791 = vmatprep.subr.mxu0 0.0
    %792 = vmatpush1.xpose.msra.mxu0 0.0
    %793 = vmatprep.subr.mxu0 0.0
    %794 = vmatpush1.xpose.msra.mxu0 0.0
    %795 = vmatprep.subr.mxu0 0.0
    %796 = vmatpush1.xpose.msra.mxu0 0.0
    %797 = vmatprep.subr.mxu0 0.0
    %798 = vmatpush1.xpose.msra.mxu0 0.0
    %799 = vmatprep.subr.mxu0 0.0
    %800 = vmatpush1.xpose.msra.mxu0 0.0
    %801 = vmatprep.subr.mxu0 0.0
    %802 = vmatpush1.xpose.msra.mxu0 0.0
    %803 = vmatprep.subr.mxu0 0.0
    %804 = vmatpush1.xpose.msra.mxu0 0.0
    %805 = vmatprep.subr.mxu0 0.0
    %806 = vmatpush1.xpose.msra.mxu0 0.0
    %807 = vmatprep.subr.mxu0 0.0
    %808 = vmatpush1.xpose.msra.mxu0 0.0
    %809 = vmatprep.subr.mxu0 0.0
    %810 = vmatpush1.xpose.msra.mxu0 0.0
    %811 = vmatprep.subr.mxu0 0.0
    %812 = vmatpush1.xpose.msra.mxu0 0.0
    %813 = vmatprep.subr.mxu0 0.0
    %814 = vmatpush1.xpose.msra.mxu0 0.0
    %815 = vmatprep.subr.mxu0 0.0
    %816 = vmatpush1.xpose.msra.mxu0 0.0
    %817 = vmatprep.subr.mxu0 0.0
    %818 = vmatpush1.xpose.msra.mxu0 0.0
    %819 = vmatprep.mubr.f32.mxu0 0.0
    %820 = vmatmul.mubr.f32.gmra.mrb[0].mxu0 %v201
    %v821 = vpop.f32.mrb[0].mxu0
    %v822 = vadd.f32 %v189, %v821
    %v823 = vpop.f32.mrb[0].mxu0
    %824 = vmatprep.mubr.f32.mxu0 0.0
    %825 = vmatmul.mubr.f32.gmra.mrb[0].mxu0 %v204
    %v826 = vpop.f32.mrb[0].mxu0
    %v827 = vadd.f32 %v190, %v826
    %v828 = vpop.f32.mrb[0].mxu0
    %829 = vdwg.mxu0
    %v831 = vsel %vm199, %v152, 0
    %833 = vmatprep.subr.mxu0 0.0
    %834 = vmatpush1.xpose.msra.mxu0 %v831
    %835 = vmatprep.subr.mxu0 0.0
    %836 = vmatpush1.xpose.msra.mxu0 0.0
    %837 = vmatprep.subr.mxu0 0.0
    %838 = vmatpush1.xpose.msra.mxu0 0.0
    %839 = vmatprep.subr.mxu0 0.0
    %840 = vmatpush1.xpose.msra.mxu0 0.0
    %841 = vmatprep.subr.mxu0 0.0
    %842 = vmatpush1.xpose.msra.mxu0 0.0
    %843 = vmatprep.subr.mxu0 0.0
    %844 = vmatpush1.xpose.msra.mxu0 0.0
    %845 = vmatprep.subr.mxu0 0.0
    %846 = vmatpush1.xpose.msra.mxu0 0.0
    %847 = vmatprep.subr.mxu0 0.0
    %848 = vmatpush1.xpose.msra.mxu0 0.0
    %849 = vmatprep.subr.mxu0 0.0
    %850 = vmatpush1.xpose.msra.mxu0 0.0
    %851 = vmatprep.subr.mxu0 0.0
    %852 = vmatpush1.xpose.msra.mxu0 0.0
    %853 = vmatprep.subr.mxu0 0.0
    %854 = vmatpush1.xpose.msra.mxu0 0.0
    %855 = vmatprep.subr.mxu0 0.0
    %856 = vmatpush1.xpose.msra.mxu0 0.0
    %857 = vmatprep.subr.mxu0 0.0
    %858 = vmatpush1.xpose.msra.mxu0 0.0
    %859 = vmatprep.subr.mxu0 0.0
    %860 = vmatpush1.xpose.msra.mxu0 0.0
    %861 = vmatprep.subr.mxu0 0.0
    %862 = vmatpush1.xpose.msra.mxu0 0.0
    %863 = vmatprep.subr.mxu0 0.0
    %864 = vmatpush1.xpose.msra.mxu0 0.0
    %865 = vmatprep.subr.mxu0 0.0
    %866 = vmatpush1.xpose.msra.mxu0 0.0
    %867 = vmatprep.subr.mxu0 0.0
    %868 = vmatpush1.xpose.msra.mxu0 0.0
    %869 = vmatprep.subr.mxu0 0.0
    %870 = vmatpush1.xpose.msra.mxu0 0.0
    %871 = vmatprep.subr.mxu0 0.0
    %872 = vmatpush1.xpose.msra.mxu0 0.0
    %873 = vmatprep.subr.mxu0 0.0
    %874 = vmatpush1.xpose.msra.mxu0 0.0
    %875 = vmatprep.subr.mxu0 0.0
    %876 = vmatpush1.xpose.msra.mxu0 0.0
    %877 = vmatprep.subr.mxu0 0.0
    %878 = vmatpush1.xpose.msra.mxu0 0.0
    %879 = vmatprep.subr.mxu0 0.0
    %880 = vmatpush1.xpose.msra.mxu0 0.0
    %881 = vmatprep.subr.mxu0 0.0
    %882 = vmatpush1.xpose.msra.mxu0 0.0
    %883 = vmatprep.subr.mxu0 0.0
    %884 = vmatpush1.xpose.msra.mxu0 0.0
    %885 = vmatprep.subr.mxu0 0.0
    %886 = vmatpush1.xpose.msra.mxu0 0.0
    %887 = vmatprep.subr.mxu0 0.0
    %888 = vmatpush1.xpose.msra.mxu0 0.0
    %889 = vmatprep.subr.mxu0 0.0
    %890 = vmatpush1.xpose.msra.mxu0 0.0
    %891 = vmatprep.subr.mxu0 0.0
    %892 = vmatpush1.xpose.msra.mxu0 0.0
    %893 = vmatprep.subr.mxu0 0.0
    %894 = vmatpush1.xpose.msra.mxu0 0.0
    %895 = vmatprep.subr.mxu0 0.0
    %896 = vmatpush1.xpose.msra.mxu0 0.0
    %897 = vmatprep.mubr.f32.mxu0 0.0
    %898 = vmatmul.mubr.f32.gmra.mrb[0].mxu0 %v201
    %v899 = vpop.f32.mrb[0].mxu0
    %v900 = vadd.f32 %v191, %v899
    %v901 = vpop.f32.mrb[0].mxu0
    %902 = vmatprep.mubr.f32.mxu0 0.0
    %903 = vmatmul.mubr.f32.gmra.mrb[0].mxu0 %v204
    %v904 = vpop.f32.mrb[0].mxu0
    %v905 = vadd.f32 %v192, %v904
    %v906 = vpop.f32.mrb[0].mxu0
    %907 = vdwg.mxu0
    %v909 = vsel %vm199, %v153, 0
    %911 = vmatprep.subr.mxu0 0.0
    %912 = vmatpush1.xpose.msra.mxu0 %v909
    %913 = vmatprep.subr.mxu0 0.0
    %914 = vmatpush1.xpose.msra.mxu0 0.0
    %915 = vmatprep.subr.mxu0 0.0
    %916 = vmatpush1.xpose.msra.mxu0 0.0
    %917 = vmatprep.subr.mxu0 0.0
    %918 = vmatpush1.xpose.msra.mxu0 0.0
    %919 = vmatprep.subr.mxu0 0.0
    %920 = vmatpush1.xpose.msra.mxu0 0.0
    %921 = vmatprep.subr.mxu0 0.0
    %922 = vmatpush1.xpose.msra.mxu0 0.0
    %923 = vmatprep.subr.mxu0 0.0
    %924 = vmatpush1.xpose.msra.mxu0 0.0
    %925 = vmatprep.subr.mxu0 0.0
    %926 = vmatpush1.xpose.msra.mxu0 0.0
    %927 = vmatprep.subr.mxu0 0.0
    %928 = vmatpush1.xpose.msra.mxu0 0.0
    %929 = vmatprep.subr.mxu0 0.0
    %930 = vmatpush1.xpose.msra.mxu0 0.0
    %931 = vmatprep.subr.mxu0 0.0
    %932 = vmatpush1.xpose.msra.mxu0 0.0
    %933 = vmatprep.subr.mxu0 0.0
    %934 = vmatpush1.xpose.msra.mxu0 0.0
    %935 = vmatprep.subr.mxu0 0.0
    %936 = vmatpush1.xpose.msra.mxu0 0.0
    %937 = vmatprep.subr.mxu0 0.0
    %938 = vmatpush1.xpose.msra.mxu0 0.0
    %939 = vmatprep.subr.mxu0 0.0
    %940 = vmatpush1.xpose.msra.mxu0 0.0
    %941 = vmatprep.subr.mxu0 0.0
    %942 = vmatpush1.xpose.msra.mxu0 0.0
    %943 = vmatprep.subr.mxu0 0.0
    %944 = vmatpush1.xpose.msra.mxu0 0.0
    %945 = vmatprep.subr.mxu0 0.0
    %946 = vmatpush1.xpose.msra.mxu0 0.0
    %947 = vmatprep.subr.mxu0 0.0
    %948 = vmatpush1.xpose.msra.mxu0 0.0
    %949 = vmatprep.subr.mxu0 0.0
    %950 = vmatpush1.xpose.msra.mxu0 0.0
    %951 = vmatprep.subr.mxu0 0.0
    %952 = vmatpush1.xpose.msra.mxu0 0.0
    %953 = vmatprep.subr.mxu0 0.0
    %954 = vmatpush1.xpose.msra.mxu0 0.0
    %955 = vmatprep.subr.mxu0 0.0
    %956 = vmatpush1.xpose.msra.mxu0 0.0
    %957 = vmatprep.subr.mxu0 0.0
    %958 = vmatpush1.xpose.msra.mxu0 0.0
    %959 = vmatprep.subr.mxu0 0.0
    %960 = vmatpush1.xpose.msra.mxu0 0.0
    %961 = vmatprep.subr.mxu0 0.0
    %962 = vmatpush1.xpose.msra.mxu0 0.0
    %963 = vmatprep.subr.mxu0 0.0
    %964 = vmatpush1.xpose.msra.mxu0 0.0
    %965 = vmatprep.subr.mxu0 0.0
    %966 = vmatpush1.xpose.msra.mxu0 0.0
    %967 = vmatprep.subr.mxu0 0.0
    %968 = vmatpush1.xpose.msra.mxu0 0.0
    %969 = vmatprep.subr.mxu0 0.0
    %970 = vmatpush1.xpose.msra.mxu0 0.0
    %971 = vmatprep.subr.mxu0 0.0
    %972 = vmatpush1.xpose.msra.mxu0 0.0
    %973 = vmatprep.subr.mxu0 0.0
    %974 = vmatpush1.xpose.msra.mxu0 0.0
    %975 = vmatprep.mubr.f32.mxu0 0.0
    %976 = vmatmul.mubr.f32.gmra.mrb[0].mxu0 %v201
    %v977 = vpop.f32.mrb[0].mxu0
    %v978 = vadd.f32 %v193, %v977
    %v979 = vpop.f32.mrb[0].mxu0
    %980 = vmatprep.mubr.f32.mxu0 0.0
    %981 = vmatmul.mubr.f32.gmra.mrb[0].mxu0 %v204
    %v982 = vpop.f32.mrb[0].mxu0
    %v983 = vadd.f32 %v194, %v982
    %v984 = vpop.f32.mrb[0].mxu0
    %985 = vdwg.mxu0
    %v987 = vsel %vm199, %v154, 0
    %989 = vmatprep.subr.mxu0 0.0
    %990 = vmatpush1.xpose.msra.mxu0 %v987
    %991 = vmatprep.subr.mxu0 0.0
    %992 = vmatpush1.xpose.msra.mxu0 0.0
    %993 = vmatprep.subr.mxu0 0.0
    %994 = vmatpush1.xpose.msra.mxu0 0.0
    %995 = vmatprep.subr.mxu0 0.0
    %996 = vmatpush1.xpose.msra.mxu0 0.0
    %997 = vmatprep.subr.mxu0 0.0
    %998 = vmatpush1.xpose.msra.mxu0 0.0
    %999 = vmatprep.subr.mxu0 0.0
    %1000 = vmatpush1.xpose.msra.mxu0 0.0
    %1001 = vmatprep.subr.mxu0 0.0
    %1002 = vmatpush1.xpose.msra.mxu0 0.0
    %1003 = vmatprep.subr.mxu0 0.0
    %1004 = vmatpush1.xpose.msra.mxu0 0.0
    %1005 = vmatprep.subr.mxu0 0.0
    %1006 = vmatpush1.xpose.msra.mxu0 0.0
    %1007 = vmatprep.subr.mxu0 0.0
    %1008 = vmatpush1.xpose.msra.mxu0 0.0
    %1009 = vmatprep.subr.mxu0 0.0
    %1010 = vmatpush1.xpose.msra.mxu0 0.0
    %1011 = vmatprep.subr.mxu0 0.0
    %1012 = vmatpush1.xpose.msra.mxu0 0.0
    %1013 = vmatprep.subr.mxu0 0.0
    %1014 = vmatpush1.xpose.msra.mxu0 0.0
    %1015 = vmatprep.subr.mxu0 0.0
    %1016 = vmatpush1.xpose.msra.mxu0 0.0
    %1017 = vmatprep.subr.mxu0 0.0
    %1018 = vmatpush1.xpose.msra.mxu0 0.0
    %1019 = vmatprep.subr.mxu0 0.0
    %1020 = vmatpush1.xpose.msra.mxu0 0.0
    %1021 = vmatprep.subr.mxu0 0.0
    %1022 = vmatpush1.xpose.msra.mxu0 0.0
    %1023 = vmatprep.subr.mxu0 0.0
    %1024 = vmatpush1.xpose.msra.mxu0 0.0
    %1025 = vmatprep.subr.mxu0 0.0
    %1026 = vmatpush1.xpose.msra.mxu0 0.0
    %1027 = vmatprep.subr.mxu0 0.0
    %1028 = vmatpush1.xpose.msra.mxu0 0.0
    %1029 = vmatprep.subr.mxu0 0.0
    %1030 = vmatpush1.xpose.msra.mxu0 0.0
    %1031 = vmatprep.subr.mxu0 0.0
    %1032 = vmatpush1.xpose.msra.mxu0 0.0
    %1033 = vmatprep.subr.mxu0 0.0
    %1034 = vmatpush1.xpose.msra.mxu0 0.0
    %1035 = vmatprep.subr.mxu0 0.0
    %1036 = vmatpush1.xpose.msra.mxu0 0.0
    %1037 = vmatprep.subr.mxu0 0.0
    %1038 = vmatpush1.xpose.msra.mxu0 0.0
    %1039 = vmatprep.subr.mxu0 0.0
    %1040 = vmatpush1.xpose.msra.mxu0 0.0
    %1041 = vmatprep.subr.mxu0 0.0
    %1042 = vmatpush1.xpose.msra.mxu0 0.0
    %1043 = vmatprep.subr.mxu0 0.0
    %1044 = vmatpush1.xpose.msra.mxu0 0.0
    %1045 = vmatprep.subr.mxu0 0.0
    %1046 = vmatpush1.xpose.msra.mxu0 0.0
    %1047 = vmatprep.subr.mxu0 0.0
    %1048 = vmatpush1.xpose.msra.mxu0 0.0
    %1049 = vmatprep.subr.mxu0 0.0
    %1050 = vmatpush1.xpose.msra.mxu0 0.0
    %1051 = vmatprep.subr.mxu0 0.0
    %1052 = vmatpush1.xpose.msra.mxu0 0.0
    %1053 = vmatprep.mubr.f32.mxu0 0.0
    %1054 = vmatmul.mubr.f32.gmra.mrb[0].mxu0 %v201
    %v1055 = vpop.f32.mrb[0].mxu0
    %v1056 = vadd.f32 %v195, %v1055
    %v1057 = vpop.f32.mrb[0].mxu0
    %1058 = vmatprep.mubr.f32.mxu0 0.0
    %1059 = vmatmul.mubr.f32.gmra.mrb[0].mxu0 %v204
    %v1060 = vpop.f32.mrb[0].mxu0
    %v1061 = vadd.f32 %v196, %v1060
    %v1062 = vpop.f32.mrb[0].mxu0
    %1063 = vdwg.mxu0
    %v1065 = vsel %vm199, %v155, 0
    %1067 = vmatprep.subr.mxu0 0.0
    %1068 = vmatpush1.xpose.msra.mxu0 %v1065
    %1069 = vmatprep.subr.mxu0 0.0
    %1070 = vmatpush1.xpose.msra.mxu0 0.0
    %1071 = vmatprep.subr.mxu0 0.0
    %1072 = vmatpush1.xpose.msra.mxu0 0.0
    %1073 = vmatprep.subr.mxu0 0.0
    %1074 = vmatpush1.xpose.msra.mxu0 0.0
    %1075 = vmatprep.subr.mxu0 0.0
    %1076 = vmatpush1.xpose.msra.mxu0 0.0
    %1077 = vmatprep.subr.mxu0 0.0
    %1078 = vmatpush1.xpose.msra.mxu0 0.0
    %1079 = vmatprep.subr.mxu0 0.0
    %1080 = vmatpush1.xpose.msra.mxu0 0.0
    %1081 = vmatprep.subr.mxu0 0.0
    %1082 = vmatpush1.xpose.msra.mxu0 0.0
    %1083 = vmatprep.subr.mxu0 0.0
    %1084 = vmatpush1.xpose.msra.mxu0 0.0
    %1085 = vmatprep.subr.mxu0 0.0
    %1086 = vmatpush1.xpose.msra.mxu0 0.0
    %1087 = vmatprep.subr.mxu0 0.0
    %1088 = vmatpush1.xpose.msra.mxu0 0.0
    %1089 = vmatprep.subr.mxu0 0.0
    %1090 = vmatpush1.xpose.msra.mxu0 0.0
    %1091 = vmatprep.subr.mxu0 0.0
    %1092 = vmatpush1.xpose.msra.mxu0 0.0
    %1093 = vmatprep.subr.mxu0 0.0
    %1094 = vmatpush1.xpose.msra.mxu0 0.0
    %1095 = vmatprep.subr.mxu0 0.0
    %1096 = vmatpush1.xpose.msra.mxu0 0.0
    %1097 = vmatprep.subr.mxu0 0.0
    %1098 = vmatpush1.xpose.msra.mxu0 0.0
    %1099 = vmatprep.subr.mxu0 0.0
    %1100 = vmatpush1.xpose.msra.mxu0 0.0
    %1101 = vmatprep.subr.mxu0 0.0
    %1102 = vmatpush1.xpose.msra.mxu0 0.0
    %1103 = vmatprep.subr.mxu0 0.0
    %1104 = vmatpush1.xpose.msra.mxu0 0.0
    %1105 = vmatprep.subr.mxu0 0.0
    %1106 = vmatpush1.xpose.msra.mxu0 0.0
    %1107 = vmatprep.subr.mxu0 0.0
    %1108 = vmatpush1.xpose.msra.mxu0 0.0
    %1109 = vmatprep.subr.mxu0 0.0
    %1110 = vmatpush1.xpose.msra.mxu0 0.0
    %1111 = vmatprep.subr.mxu0 0.0
    %1112 = vmatpush1.xpose.msra.mxu0 0.0
    %1113 = vmatprep.subr.mxu0 0.0
    %1114 = vmatpush1.xpose.msra.mxu0 0.0
    %1115 = vmatprep.subr.mxu0 0.0
    %1116 = vmatpush1.xpose.msra.mxu0 0.0
    %1117 = vmatprep.subr.mxu0 0.0
    %1118 = vmatpush1.xpose.msra.mxu0 0.0
    %1119 = vmatprep.subr.mxu0 0.0
    %1120 = vmatpush1.xpose.msra.mxu0 0.0
    %1121 = vmatprep.subr.mxu0 0.0
    %1122 = vmatpush1.xpose.msra.mxu0 0.0
    %1123 = vmatprep.subr.mxu0 0.0
    %1124 = vmatpush1.xpose.msra.mxu0 0.0
    %1125 = vmatprep.subr.mxu0 0.0
    %1126 = vmatpush1.xpose.msra.mxu0 0.0
    %1127 = vmatprep.subr.mxu0 0.0
    %1128 = vmatpush1.xpose.msra.mxu0 0.0
    %1129 = vmatprep.subr.mxu0 0.0
    %1130 = vmatpush1.xpose.msra.mxu0 0.0
    %1131 = vmatprep.mubr.f32.mxu0 0.0
    %1132 = vmatmul.mubr.f32.gmra.mrb[0].mxu0 %v201
    %v1133 = vpop.f32.mrb[0].mxu0
    %v1134 = vadd.f32 %v197, %v1133
    %v1135 = vpop.f32.mrb[0].mxu0
    %1136 = vmatprep.mubr.f32.mxu0 0.0
    %1137 = vmatmul.mubr.f32.gmra.mrb[0].mxu0 %v204
    %v1138 = vpop.f32.mrb[0].mxu0
    %v1139 = vadd.f32 %v198, %v1138
    %v1140 = vpop.f32.mrb[0].mxu0
    %1141 = vdwg.mxu0
    %vm1142 = vcmask 64512
    %v1144 = vsel %vm1142, %v276, 0
    %v1147 = vsel %vm1142, %v281, 0
    %v1150 = vsel %vm1142, %v588, 0
    %v1153 = vsel %vm1142, %v593, 0
    %1155 = vmatprep.subr.mxu0 0.0
    %1156 = vmatpush1.xpose.msra.mxu0 %v1150
    %1157 = vmatprep.subr.mxu0 0.0
    %1158 = vmatpush1.xpose.msra.mxu0 %v1153
    %1159 = vmatprep.subr.mxu0 0.0
    %1160 = vmatpush1.xpose.msra.mxu0 0.0
    %1161 = vmatprep.subr.mxu0 0.0
    %1162 = vmatpush1.xpose.msra.mxu0 0.0
    %1163 = vmatprep.subr.mxu0 0.0
    %1164 = vmatpush1.xpose.msra.mxu0 0.0
    %1165 = vmatprep.subr.mxu0 0.0
    %1166 = vmatpush1.xpose.msra.mxu0 0.0
    %1167 = vmatprep.subr.mxu0 0.0
    %1168 = vmatpush1.xpose.msra.mxu0 0.0
    %1169 = vmatprep.subr.mxu0 0.0
    %1170 = vmatpush1.xpose.msra.mxu0 0.0
    %1171 = vmatprep.subr.mxu0 0.0
    %1172 = vmatpush1.xpose.msra.mxu0 0.0
    %1173 = vmatprep.subr.mxu0 0.0
    %1174 = vmatpush1.xpose.msra.mxu0 0.0
    %1175 = vmatprep.subr.mxu0 0.0
    %1176 = vmatpush1.xpose.msra.mxu0 0.0
    %1177 = vmatprep.subr.mxu0 0.0
    %1178 = vmatpush1.xpose.msra.mxu0 0.0
    %1179 = vmatprep.subr.mxu0 0.0
    %1180 = vmatpush1.xpose.msra.mxu0 0.0
    %1181 = vmatprep.subr.mxu0 0.0
    %1182 = vmatpush1.xpose.msra.mxu0 0.0
    %1183 = vmatprep.subr.mxu0 0.0
    %1184 = vmatpush1.xpose.msra.mxu0 0.0
    %1185 = vmatprep.subr.mxu0 0.0
    %1186 = vmatpush1.xpose.msra.mxu0 0.0
    %1187 = vmatprep.subr.mxu0 0.0
    %1188 = vmatpush1.xpose.msra.mxu0 0.0
    %1189 = vmatprep.subr.mxu0 0.0
    %1190 = vmatpush1.xpose.msra.mxu0 0.0
    %1191 = vmatprep.subr.mxu0 0.0
    %1192 = vmatpush1.xpose.msra.mxu0 0.0
    %1193 = vmatprep.subr.mxu0 0.0
    %1194 = vmatpush1.xpose.msra.mxu0 0.0
    %1195 = vmatprep.subr.mxu0 0.0
    %1196 = vmatpush1.xpose.msra.mxu0 0.0
    %1197 = vmatprep.subr.mxu0 0.0
    %1198 = vmatpush1.xpose.msra.mxu0 0.0
    %1199 = vmatprep.subr.mxu0 0.0
    %1200 = vmatpush1.xpose.msra.mxu0 0.0
    %1201 = vmatprep.subr.mxu0 0.0
    %1202 = vmatpush1.xpose.msra.mxu0 0.0
    %1203 = vmatprep.subr.mxu0 0.0
    %1204 = vmatpush1.xpose.msra.mxu0 0.0
    %1205 = vmatprep.subr.mxu0 0.0
    %1206 = vmatpush1.xpose.msra.mxu0 0.0
    %1207 = vmatprep.subr.mxu0 0.0
    %1208 = vmatpush1.xpose.msra.mxu0 0.0
    %1209 = vmatprep.subr.mxu0 0.0
    %1210 = vmatpush1.xpose.msra.mxu0 0.0
    %1211 = vmatprep.subr.mxu0 0.0
    %1212 = vmatpush1.xpose.msra.mxu0 0.0
    %1213 = vmatprep.subr.mxu0 0.0
    %1214 = vmatpush1.xpose.msra.mxu0 0.0
    %1215 = vmatprep.subr.mxu0 0.0
    %1216 = vmatpush1.xpose.msra.mxu0 0.0
    %1217 = vmatprep.subr.mxu0 0.0
    %1218 = vmatpush1.xpose.msra.mxu0 0.0
    %1219 = vmatprep.mubr.f32.mxu0 0.0
    %1220 = vmatmul.mubr.f32.gmra.mrb[0].mxu0 %v1144
    %v1221 = vpop.f32.mrb[0].mxu0
    %v1222 = vadd.f32 0.0, %v1221
    %v1223 = vpop.f32.mrb[0].mxu0
    %1224 = vmatprep.mubr.f32.mxu0 0.0
    %1225 = vmatmul.mubr.f32.gmra.mrb[0].mxu0 %v1147
    %v1226 = vpop.f32.mrb[0].mxu0
    %v1227 = vadd.f32 0.0, %v1226
    %v1228 = vpop.f32.mrb[0].mxu0
    %1229 = vdwg.mxu0
    %v1231 = vsel %vm1142, %v354, 0
    %v1234 = vsel %vm1142, %v359, 0
    %v1237 = vsel %vm1142, %v666, 0
    %v1240 = vsel %vm1142, %v671, 0
    %1242 = vmatprep.subr.mxu0 0.0
    %1243 = vmatpush1.xpose.msra.mxu0 %v1237
    %1244 = vmatprep.subr.mxu0 0.0
    %1245 = vmatpush1.xpose.msra.mxu0 %v1240
    %1246 = vmatprep.subr.mxu0 0.0
    %1247 = vmatpush1.xpose.msra.mxu0 0.0
    %1248 = vmatprep.subr.mxu0 0.0
    %1249 = vmatpush1.xpose.msra.mxu0 0.0
    %1250 = vmatprep.subr.mxu0 0.0
    %1251 = vmatpush1.xpose.msra.mxu0 0.0
    %1252 = vmatprep.subr.mxu0 0.0
    %1253 = vmatpush1.xpose.msra.mxu0 0.0
    %1254 = vmatprep.subr.mxu0 0.0
    %1255 = vmatpush1.xpose.msra.mxu0 0.0
    %1256 = vmatprep.subr.mxu0 0.0
    %1257 = vmatpush1.xpose.msra.mxu0 0.0
    %1258 = vmatprep.subr.mxu0 0.0
    %1259 = vmatpush1.xpose.msra.mxu0 0.0
    %1260 = vmatprep.subr.mxu0 0.0
    %1261 = vmatpush1.xpose.msra.mxu0 0.0
    %1262 = vmatprep.subr.mxu0 0.0
    %1263 = vmatpush1.xpose.msra.mxu0 0.0
    %1264 = vmatprep.subr.mxu0 0.0
    %1265 = vmatpush1.xpose.msra.mxu0 0.0
    %1266 = vmatprep.subr.mxu0 0.0
    %1267 = vmatpush1.xpose.msra.mxu0 0.0
    %1268 = vmatprep.subr.mxu0 0.0
    %1269 = vmatpush1.xpose.msra.mxu0 0.0
    %1270 = vmatprep.subr.mxu0 0.0
    %1271 = vmatpush1.xpose.msra.mxu0 0.0
    %1272 = vmatprep.subr.mxu0 0.0
    %1273 = vmatpush1.xpose.msra.mxu0 0.0
    %1274 = vmatprep.subr.mxu0 0.0
    %1275 = vmatpush1.xpose.msra.mxu0 0.0
    %1276 = vmatprep.subr.mxu0 0.0
    %1277 = vmatpush1.xpose.msra.mxu0 0.0
    %1278 = vmatprep.subr.mxu0 0.0
    %1279 = vmatpush1.xpose.msra.mxu0 0.0
    %1280 = vmatprep.subr.mxu0 0.0
    %1281 = vmatpush1.xpose.msra.mxu0 0.0
    %1282 = vmatprep.subr.mxu0 0.0
    %1283 = vmatpush1.xpose.msra.mxu0 0.0
    %1284 = vmatprep.subr.mxu0 0.0
    %1285 = vmatpush1.xpose.msra.mxu0 0.0
    %1286 = vmatprep.subr.mxu0 0.0
    %1287 = vmatpush1.xpose.msra.mxu0 0.0
    %1288 = vmatprep.subr.mxu0 0.0
    %1289 = vmatpush1.xpose.msra.mxu0 0.0
    %1290 = vmatprep.subr.mxu0 0.0
    %1291 = vmatpush1.xpose.msra.mxu0 0.0
    %1292 = vmatprep.subr.mxu0 0.0
    %1293 = vmatpush1.xpose.msra.mxu0 0.0
    %1294 = vmatprep.subr.mxu0 0.0
    %1295 = vmatpush1.xpose.msra.mxu0 0.0
    %1296 = vmatprep.subr.mxu0 0.0
    %1297 = vmatpush1.xpose.msra.mxu0 0.0
    %1298 = vmatprep.subr.mxu0 0.0
    %1299 = vmatpush1.xpose.msra.mxu0 0.0
    %1300 = vmatprep.subr.mxu0 0.0
    %1301 = vmatpush1.xpose.msra.mxu0 0.0
    %1302 = vmatprep.subr.mxu0 0.0
    %1303 = vmatpush1.xpose.msra.mxu0 0.0
    %1304 = vmatprep.subr.mxu0 0.0
    %1305 = vmatpush1.xpose.msra.mxu0 0.0
    %1306 = vmatprep.mubr.f32.mxu0 0.0
    %1307 = vmatmul.mubr.f32.gmra.mrb[0].mxu0 %v1231
    %v1308 = vpop.f32.mrb[0].mxu0
    %v1309 = vadd.f32 0.0, %v1308
    %v1310 = vpop.f32.mrb[0].mxu0
    %1311 = vmatprep.mubr.f32.mxu0 0.0
    %1312 = vmatmul.mubr.f32.gmra.mrb[0].mxu0 %v1234
    %v1313 = vpop.f32.mrb[0].mxu0
    %v1314 = vadd.f32 0.0, %v1313
    %v1315 = vpop.f32.mrb[0].mxu0
    %1316 = vdwg.mxu0
    %v1318 = vsel %vm1142, %v432, 0
    %v1321 = vsel %vm1142, %v437, 0
    %v1324 = vsel %vm1142, %v744, 0
    %v1327 = vsel %vm1142, %v749, 0
    %1329 = vmatprep.subr.mxu0 0.0
    %1330 = vmatpush1.xpose.msra.mxu0 %v1324
    %1331 = vmatprep.subr.mxu0 0.0
    %1332 = vmatpush1.xpose.msra.mxu0 %v1327
    %1333 = vmatprep.subr.mxu0 0.0
    %1334 = vmatpush1.xpose.msra.mxu0 0.0
    %1335 = vmatprep.subr.mxu0 0.0
    %1336 = vmatpush1.xpose.msra.mxu0 0.0
    %1337 = vmatprep.subr.mxu0 0.0
    %1338 = vmatpush1.xpose.msra.mxu0 0.0
    %1339 = vmatprep.subr.mxu0 0.0
    %1340 = vmatpush1.xpose.msra.mxu0 0.0
    %1341 = vmatprep.subr.mxu0 0.0
    %1342 = vmatpush1.xpose.msra.mxu0 0.0
    %1343 = vmatprep.subr.mxu0 0.0
    %1344 = vmatpush1.xpose.msra.mxu0 0.0
    %1345 = vmatprep.subr.mxu0 0.0
    %1346 = vmatpush1.xpose.msra.mxu0 0.0
    %1347 = vmatprep.subr.mxu0 0.0
    %1348 = vmatpush1.xpose.msra.mxu0 0.0
    %1349 = vmatprep.subr.mxu0 0.0
    %1350 = vmatpush1.xpose.msra.mxu0 0.0
    %1351 = vmatprep.subr.mxu0 0.0
    %1352 = vmatpush1.xpose.msra.mxu0 0.0
    %1353 = vmatprep.subr.mxu0 0.0
    %1354 = vmatpush1.xpose.msra.mxu0 0.0
    %1355 = vmatprep.subr.mxu0 0.0
    %1356 = vmatpush1.xpose.msra.mxu0 0.0
    %1357 = vmatprep.subr.mxu0 0.0
    %1358 = vmatpush1.xpose.msra.mxu0 0.0
    %1359 = vmatprep.subr.mxu0 0.0
    %1360 = vmatpush1.xpose.msra.mxu0 0.0
    %1361 = vmatprep.subr.mxu0 0.0
    %1362 = vmatpush1.xpose.msra.mxu0 0.0
    %1363 = vmatprep.subr.mxu0 0.0
    %1364 = vmatpush1.xpose.msra.mxu0 0.0
    %1365 = vmatprep.subr.mxu0 0.0
    %1366 = vmatpush1.xpose.msra.mxu0 0.0
    %1367 = vmatprep.subr.mxu0 0.0
    %1368 = vmatpush1.xpose.msra.mxu0 0.0
    %1369 = vmatprep.subr.mxu0 0.0
    %1370 = vmatpush1.xpose.msra.mxu0 0.0
    %1371 = vmatprep.subr.mxu0 0.0
    %1372 = vmatpush1.xpose.msra.mxu0 0.0
    %1373 = vmatprep.subr.mxu0 0.0
    %1374 = vmatpush1.xpose.msra.mxu0 0.0
    %1375 = vmatprep.subr.mxu0 0.0
    %1376 = vmatpush1.xpose.msra.mxu0 0.0
    %1377 = vmatprep.subr.mxu0 0.0
    %1378 = vmatpush1.xpose.msra.mxu0 0.0
    %1379 = vmatprep.subr.mxu0 0.0
    %1380 = vmatpush1.xpose.msra.mxu0 0.0
    %1381 = vmatprep.subr.mxu0 0.0
    %1382 = vmatpush1.xpose.msra.mxu0 0.0
    %1383 = vmatprep.subr.mxu0 0.0
    %1384 = vmatpush1.xpose.msra.mxu0 0.0
    %1385 = vmatprep.subr.mxu0 0.0
    %1386 = vmatpush1.xpose.msra.mxu0 0.0
    %1387 = vmatprep.subr.mxu0 0.0
    %1388 = vmatpush1.xpose.msra.mxu0 0.0
    %1389 = vmatprep.subr.mxu0 0.0
    %1390 = vmatpush1.xpose.msra.mxu0 0.0
    %1391 = vmatprep.subr.mxu0 0.0
    %1392 = vmatpush1.xpose.msra.mxu0 0.0
    %1393 = vmatprep.mubr.f32.mxu0 0.0
    %1394 = vmatmul.mubr.f32.gmra.mrb[0].mxu0 %v1318
    %v1395 = vpop.f32.mrb[0].mxu0
    %v1396 = vadd.f32 0.0, %v1395
    %v1397 = vpop.f32.mrb[0].mxu0
    %1398 = vmatprep.mubr.f32.mxu0 0.0
    %1399 = vmatmul.mubr.f32.gmra.mrb[0].mxu0 %v1321
    %v1400 = vpop.f32.mrb[0].mxu0
    %v1401 = vadd.f32 0.0, %v1400
    %v1402 = vpop.f32.mrb[0].mxu0
    %1403 = vdwg.mxu0
    %v1405 = vsel %vm1142, %v510, 0
    %v1408 = vsel %vm1142, %v515, 0
    %v1411 = vsel %vm1142, %v822, 0
    %v1414 = vsel %vm1142, %v827, 0
    %1416 = vmatprep.subr.mxu0 0.0
    %1417 = vmatpush1.xpose.msra.mxu0 %v1411
    %1418 = vmatprep.subr.mxu0 0.0
    %1419 = vmatpush1.xpose.msra.mxu0 %v1414
    %1420 = vmatprep.subr.mxu0 0.0
    %1421 = vmatpush1.xpose.msra.mxu0 0.0
    %1422 = vmatprep.subr.mxu0 0.0
    %1423 = vmatpush1.xpose.msra.mxu0 0.0
    %1424 = vmatprep.subr.mxu0 0.0
    %1425 = vmatpush1.xpose.msra.mxu0 0.0
    %1426 = vmatprep.subr.mxu0 0.0
    %1427 = vmatpush1.xpose.msra.mxu0 0.0
    %1428 = vmatprep.subr.mxu0 0.0
    %1429 = vmatpush1.xpose.msra.mxu0 0.0
    %1430 = vmatprep.subr.mxu0 0.0
    %1431 = vmatpush1.xpose.msra.mxu0 0.0
    %1432 = vmatprep.subr.mxu0 0.0
    %1433 = vmatpush1.xpose.msra.mxu0 0.0
    %1434 = vmatprep.subr.mxu0 0.0
    %1435 = vmatpush1.xpose.msra.mxu0 0.0
    %1436 = vmatprep.subr.mxu0 0.0
    %1437 = vmatpush1.xpose.msra.mxu0 0.0
    %1438 = vmatprep.subr.mxu0 0.0
    %1439 = vmatpush1.xpose.msra.mxu0 0.0
    %1440 = vmatprep.subr.mxu0 0.0
    %1441 = vmatpush1.xpose.msra.mxu0 0.0
    %1442 = vmatprep.subr.mxu0 0.0
    %1443 = vmatpush1.xpose.msra.mxu0 0.0
    %1444 = vmatprep.subr.mxu0 0.0
    %1445 = vmatpush1.xpose.msra.mxu0 0.0
    %1446 = vmatprep.subr.mxu0 0.0
    %1447 = vmatpush1.xpose.msra.mxu0 0.0
    %1448 = vmatprep.subr.mxu0 0.0
    %1449 = vmatpush1.xpose.msra.mxu0 0.0
    %1450 = vmatprep.subr.mxu0 0.0
    %1451 = vmatpush1.xpose.msra.mxu0 0.0
    %1452 = vmatprep.subr.mxu0 0.0
    %1453 = vmatpush1.xpose.msra.mxu0 0.0
    %1454 = vmatprep.subr.mxu0 0.0
    %1455 = vmatpush1.xpose.msra.mxu0 0.0
    %1456 = vmatprep.subr.mxu0 0.0
    %1457 = vmatpush1.xpose.msra.mxu0 0.0
    %1458 = vmatprep.subr.mxu0 0.0
    %1459 = vmatpush1.xpose.msra.mxu0 0.0
    %1460 = vmatprep.subr.mxu0 0.0
    %1461 = vmatpush1.xpose.msra.mxu0 0.0
    %1462 = vmatprep.subr.mxu0 0.0
    %1463 = vmatpush1.xpose.msra.mxu0 0.0
    %1464 = vmatprep.subr.mxu0 0.0
    %1465 = vmatpush1.xpose.msra.mxu0 0.0
    %1466 = vmatprep.subr.mxu0 0.0
    %1467 = vmatpush1.xpose.msra.mxu0 0.0
    %1468 = vmatprep.subr.mxu0 0.0
    %1469 = vmatpush1.xpose.msra.mxu0 0.0
    %1470 = vmatprep.subr.mxu0 0.0
    %1471 = vmatpush1.xpose.msra.mxu0 0.0
    %1472 = vmatprep.subr.mxu0 0.0
    %1473 = vmatpush1.xpose.msra.mxu0 0.0
    %1474 = vmatprep.subr.mxu0 0.0
    %1475 = vmatpush1.xpose.msra.mxu0 0.0
    %1476 = vmatprep.subr.mxu0 0.0
    %1477 = vmatpush1.xpose.msra.mxu0 0.0
    %1478 = vmatprep.subr.mxu0 0.0
    %1479 = vmatpush1.xpose.msra.mxu0 0.0
    %1480 = vmatprep.mubr.f32.mxu0 0.0
    %1481 = vmatmul.mubr.f32.gmra.mrb[0].mxu0 %v1405
    %v1482 = vpop.f32.mrb[0].mxu0
    %v1483 = vadd.f32 0.0, %v1482
    %v1484 = vpop.f32.mrb[0].mxu0
    %1485 = vmatprep.mubr.f32.mxu0 0.0
    %1486 = vmatmul.mubr.f32.gmra.mrb[0].mxu0 %v1408
    %v1487 = vpop.f32.mrb[0].mxu0
    %v1488 = vadd.f32 0.0, %v1487
    %v1489 = vpop.f32.mrb[0].mxu0
    %1490 = vdwg.mxu0
    %vm1491 = vcmask 130048
    %v1492 = vsel %vm1491, %v1222, -inf
    %1493 = vmax.xlane.f32.xlu0 %v1492
    %v1494 = vpop.xlane.xlu0 %1493
    %v1495 = vsel %vm1491, %v1227, -inf
    %1496 = vmax.xlane.f32.xlu0 %v1495
    %v1497 = vpop.xlane.xlu0 %1496
    %v1498 = vsel %vm1491, %v1309, -inf
    %1499 = vmax.xlane.f32.xlu0 %v1498
    %v1500 = vpop.xlane.xlu0 %1499
    %v1501 = vsel %vm1491, %v1314, -inf
    %1502 = vmax.xlane.f32.xlu0 %v1501
    %v1503 = vpop.xlane.xlu0 %1502
    %v1504 = vsel %vm1491, %v1396, -inf
    %1505 = vmax.xlane.f32.xlu0 %v1504
    %v1506 = vpop.xlane.xlu0 %1505
    %v1507 = vsel %vm1491, %v1401, -inf
    %1508 = vmax.xlane.f32.xlu0 %v1507
    %v1509 = vpop.xlane.xlu0 %1508
    %v1510 = vsel %vm1491, %v1483, -inf
    %1511 = vmax.xlane.f32.xlu0 %v1510
    %v1512 = vpop.xlane.xlu0 %1511
    %v1513 = vsel %vm1491, %v1488, -inf
    %1514 = vmax.xlane.f32.xlu0 %v1513
    %v1515 = vpop.xlane.xlu0 %1514
    %v1516 = vsub.f32 %v1222, %v1494
    %v1517 = vsub.f32 %v1227, %v1497
    %v1518 = vsub.f32 %v1309, %v1500
    %v1519 = vsub.f32 %v1314, %v1503
    %v1520 = vsub.f32 %v1396, %v1506
    %v1521 = vsub.f32 %v1401, %v1509
    %v1522 = vsub.f32 %v1483, %v1512
    %v1523 = vsub.f32 %v1488, %v1515
    %v1524 = vmul.f32 %v1516, 1.442695
    %v1525 = vpow.pop %v1524
    %v1526 = vmul.f32 %v1517, 1.442695
    %v1527 = vpow.pop %v1526
    %v1528 = vmul.f32 %v1518, 1.442695
    %v1529 = vpow.pop %v1528
    %v1530 = vmul.f32 %v1519, 1.442695
    %v1531 = vpow.pop %v1530
    %v1532 = vmul.f32 %v1520, 1.442695
    %v1533 = vpow.pop %v1532
    %v1534 = vmul.f32 %v1521, 1.442695
    %v1535 = vpow.pop %v1534
    %v1536 = vmul.f32 %v1522, 1.442695
    %v1537 = vpow.pop %v1536
    %v1538 = vmul.f32 %v1523, 1.442695
    %v1539 = vpow.pop %v1538
    %v1540 = vmul.f32 %v1525, %v142
    %v1541 = vmul.f32 %v1527, %v143
    %v1542 = vmul.f32 %v1529, %v142
    %v1543 = vmul.f32 %v1531, %v143
    %v1544 = vmul.f32 %v1533, %v142
    %v1545 = vmul.f32 %v1535, %v143
    %v1546 = vmul.f32 %v1537, %v142
    %v1547 = vmul.f32 %v1539, %v143
    %v1548 = vsel %vm1491, %v1540, 0.0
    %1549 = vadd.xlane.f32.xlu0 %v1548
    %v1550 = vpop.xlane.xlu0 %1549
    %v1551 = vsel %vm1491, %v1541, 0.0
    %1552 = vadd.xlane.f32.xlu0 %v1551
    %v1553 = vpop.xlane.xlu0 %1552
    %v1554 = vsel %vm1491, %v1542, 0.0
    %1555 = vadd.xlane.f32.xlu0 %v1554
    %v1556 = vpop.xlane.xlu0 %1555
    %v1557 = vsel %vm1491, %v1543, 0.0
    %1558 = vadd.xlane.f32.xlu0 %v1557
    %v1559 = vpop.xlane.xlu0 %1558
    %v1560 = vsel %vm1491, %v1544, 0.0
    %1561 = vadd.xlane.f32.xlu0 %v1560
    %v1562 = vpop.xlane.xlu0 %1561
    %v1563 = vsel %vm1491, %v1545, 0.0
    %1564 = vadd.xlane.f32.xlu0 %v1563
    %v1565 = vpop.xlane.xlu0 %1564
    %v1566 = vsel %vm1491, %v1546, 0.0
    %1567 = vadd.xlane.f32.xlu0 %v1566
    %v1568 = vpop.xlane.xlu0 %1567
    %v1569 = vsel %vm1491, %v1547, 0.0
    %1570 = vadd.xlane.f32.xlu0 %v1569
    %v1571 = vpop.xlane.xlu0 %1570
    %v1573 = vsel %vm1491, %v1540, 0
    %v1576 = vsel %vm1491, %v1541, 0
    %1578 = vmatprep.subr.mxu0 0.0
    %1579 = vmatpush1.msra.mxu0 %v900
    %1580 = vmatprep.subr.mxu0 0.0
    %1581 = vmatpush1.msra.mxu0 %v905
    %1582 = vmatprep.subr.mxu0 0.0
    %1583 = vmatpush1.msra.mxu0 0.0
    %1584 = vmatprep.subr.mxu0 0.0
    %1585 = vmatpush1.msra.mxu0 0.0
    %1586 = vmatprep.subr.mxu0 0.0
    %1587 = vmatpush1.msra.mxu0 0.0
    %1588 = vmatprep.subr.mxu0 0.0
    %1589 = vmatpush1.msra.mxu0 0.0
    %1590 = vmatprep.subr.mxu0 0.0
    %1591 = vmatpush1.msra.mxu0 0.0
    %1592 = vmatprep.subr.mxu0 0.0
    %1593 = vmatpush1.msra.mxu0 0.0
    %1594 = vmatprep.subr.mxu0 0.0
    %1595 = vmatpush1.msra.mxu0 0.0
    %1596 = vmatprep.subr.mxu0 0.0
    %1597 = vmatpush1.msra.mxu0 0.0
    %1598 = vmatprep.subr.mxu0 0.0
    %1599 = vmatpush1.msra.mxu0 0.0
    %1600 = vmatprep.subr.mxu0 0.0
    %1601 = vmatpush1.msra.mxu0 0.0
    %1602 = vmatprep.subr.mxu0 0.0
    %1603 = vmatpush1.msra.mxu0 0.0
    %1604 = vmatprep.subr.mxu0 0.0
    %1605 = vmatpush1.msra.mxu0 0.0
    %1606 = vmatprep.subr.mxu0 0.0
    %1607 = vmatpush1.msra.mxu0 0.0
    %1608 = vmatprep.subr.mxu0 0.0
    %1609 = vmatpush1.msra.mxu0 0.0
    %1610 = vmatprep.subr.mxu0 0.0
    %1611 = vmatpush1.msra.mxu0 0.0
    %1612 = vmatprep.subr.mxu0 0.0
    %1613 = vmatpush1.msra.mxu0 0.0
    %1614 = vmatprep.subr.mxu0 0.0
    %1615 = vmatpush1.msra.mxu0 0.0
    %1616 = vmatprep.subr.mxu0 0.0
    %1617 = vmatpush1.msra.mxu0 0.0
    %1618 = vmatprep.subr.mxu0 0.0
    %1619 = vmatpush1.msra.mxu0 0.0
    %1620 = vmatprep.subr.mxu0 0.0
    %1621 = vmatpush1.msra.mxu0 0.0
    %1622 = vmatprep.subr.mxu0 0.0
    %1623 = vmatpush1.msra.mxu0 0.0
    %1624 = vmatprep.subr.mxu0 0.0
    %1625 = vmatpush1.msra.mxu0 0.0
    %1626 = vmatprep.subr.mxu0 0.0
    %1627 = vmatpush1.msra.mxu0 0.0
    %1628 = vmatprep.subr.mxu0 0.0
    %1629 = vmatpush1.msra.mxu0 0.0
    %1630 = vmatprep.subr.mxu0 0.0
    %1631 = vmatpush1.msra.mxu0 0.0
    %1632 = vmatprep.subr.mxu0 0.0
    %1633 = vmatpush1.msra.mxu0 0.0
    %1634 = vmatprep.subr.mxu0 0.0
    %1635 = vmatpush1.msra.mxu0 0.0
    %1636 = vmatprep.subr.mxu0 0.0
    %1637 = vmatpush1.msra.mxu0 0.0
    %1638 = vmatprep.subr.mxu0 0.0
    %1639 = vmatpush1.msra.mxu0 0.0
    %1640 = vmatprep.subr.mxu0 0.0
    %1641 = vmatpush1.msra.mxu0 0.0
    %1642 = vmatprep.mubr.f32.mxu0 0.0
    %1643 = vmatmul.mubr.f32.gmra.mrb[0].mxu0 %v1573
    %v1644 = vpop.f32.mrb[0].mxu0
    %v1645 = vadd.f32 0.0, %v1644
    %v1646 = vpop.f32.mrb[0].mxu0
    %1647 = vmatprep.mubr.f32.mxu0 0.0
    %1648 = vmatmul.mubr.f32.gmra.mrb[0].mxu0 %v1576
    %v1649 = vpop.f32.mrb[0].mxu0
    %v1650 = vadd.f32 0.0, %v1649
    %v1651 = vpop.f32.mrb[0].mxu0
    %1652 = vdwg.mxu0
    %v1654 = vsel %vm1491, %v1542, 0
    %v1657 = vsel %vm1491, %v1543, 0
    %1659 = vmatprep.subr.mxu0 0.0
    %1660 = vmatpush1.msra.mxu0 %v978
    %1661 = vmatprep.subr.mxu0 0.0
    %1662 = vmatpush1.msra.mxu0 %v983
    %1663 = vmatprep.subr.mxu0 0.0
    %1664 = vmatpush1.msra.mxu0 0.0
    %1665 = vmatprep.subr.mxu0 0.0
    %1666 = vmatpush1.msra.mxu0 0.0
    %1667 = vmatprep.subr.mxu0 0.0
    %1668 = vmatpush1.msra.mxu0 0.0
    %1669 = vmatprep.subr.mxu0 0.0
    %1670 = vmatpush1.msra.mxu0 0.0
    %1671 = vmatprep.subr.mxu0 0.0
    %1672 = vmatpush1.msra.mxu0 0.0
    %1673 = vmatprep.subr.mxu0 0.0
    %1674 = vmatpush1.msra.mxu0 0.0
    %1675 = vmatprep.subr.mxu0 0.0
    %1676 = vmatpush1.msra.mxu0 0.0
    %1677 = vmatprep.subr.mxu0 0.0
    %1678 = vmatpush1.msra.mxu0 0.0
    %1679 = vmatprep.subr.mxu0 0.0
    %1680 = vmatpush1.msra.mxu0 0.0
    %1681 = vmatprep.subr.mxu0 0.0
    %1682 = vmatpush1.msra.mxu0 0.0
    %1683 = vmatprep.subr.mxu0 0.0
    %1684 = vmatpush1.msra.mxu0 0.0
    %1685 = vmatprep.subr.mxu0 0.0
    %1686 = vmatpush1.msra.mxu0 0.0
    %1687 = vmatprep.subr.mxu0 0.0
    %1688 = vmatpush1.msra.mxu0 0.0
    %1689 = vmatprep.subr.mxu0 0.0
    %1690 = vmatpush1.msra.mxu0 0.0
    %1691 = vmatprep.subr.mxu0 0.0
    %1692 = vmatpush1.msra.mxu0 0.0
    %1693 = vmatprep.subr.mxu0 0.0
    %1694 = vmatpush1.msra.mxu0 0.0
    %1695 = vmatprep.subr.mxu0 0.0
    %1696 = vmatpush1.msra.mxu0 0.0
    %1697 = vmatprep.subr.mxu0 0.0
    %1698 = vmatpush1.msra.mxu0 0.0
    %1699 = vmatprep.subr.mxu0 0.0
    %1700 = vmatpush1.msra.mxu0 0.0
    %1701 = vmatprep.subr.mxu0 0.0
    %1702 = vmatpush1.msra.mxu0 0.0
    %1703 = vmatprep.subr.mxu0 0.0
    %1704 = vmatpush1.msra.mxu0 0.0
    %1705 = vmatprep.subr.mxu0 0.0
    %1706 = vmatpush1.msra.mxu0 0.0
    %1707 = vmatprep.subr.mxu0 0.0
    %1708 = vmatpush1.msra.mxu0 0.0
    %1709 = vmatprep.subr.mxu0 0.0
    %1710 = vmatpush1.msra.mxu0 0.0
    %1711 = vmatprep.subr.mxu0 0.0
    %1712 = vmatpush1.msra.mxu0 0.0
    %1713 = vmatprep.subr.mxu0 0.0
    %1714 = vmatpush1.msra.mxu0 0.0
    %1715 = vmatprep.subr.mxu0 0.0
    %1716 = vmatpush1.msra.mxu0 0.0
    %1717 = vmatprep.subr.mxu0 0.0
    %1718 = vmatpush1.msra.mxu0 0.0
    %1719 = vmatprep.subr.mxu0 0.0
    %1720 = vmatpush1.msra.mxu0 0.0
    %1721 = vmatprep.subr.mxu0 0.0
    %1722 = vmatpush1.msra.mxu0 0.0
    %1723 = vmatprep.mubr.f32.mxu0 0.0
    %1724 = vmatmul.mubr.f32.gmra.mrb[0].mxu0 %v1654
    %v1725 = vpop.f32.mrb[0].mxu0
    %v1726 = vadd.f32 0.0, %v1725
    %v1727 = vpop.f32.mrb[0].mxu0
    %1728 = vmatprep.mubr.f32.mxu0 0.0
    %1729 = vmatmul.mubr.f32.gmra.mrb[0].mxu0 %v1657
    %v1730 = vpop.f32.mrb[0].mxu0
    %v1731 = vadd.f32 0.0, %v1730
    %v1732 = vpop.f32.mrb[0].mxu0
    %1733 = vdwg.mxu0
    %v1735 = vsel %vm1491, %v1544, 0
    %v1738 = vsel %vm1491, %v1545, 0
    %1740 = vmatprep.subr.mxu0 0.0
    %1741 = vmatpush1.msra.mxu0 %v1056
    %1742 = vmatprep.subr.mxu0 0.0
    %1743 = vmatpush1.msra.mxu0 %v1061
    %1744 = vmatprep.subr.mxu0 0.0
    %1745 = vmatpush1.msra.mxu0 0.0
    %1746 = vmatprep.subr.mxu0 0.0
    %1747 = vmatpush1.msra.mxu0 0.0
    %1748 = vmatprep.subr.mxu0 0.0
    %1749 = vmatpush1.msra.mxu0 0.0
    %1750 = vmatprep.subr.mxu0 0.0
    %1751 = vmatpush1.msra.mxu0 0.0
    %1752 = vmatprep.subr.mxu0 0.0
    %1753 = vmatpush1.msra.mxu0 0.0
    %1754 = vmatprep.subr.mxu0 0.0
    %1755 = vmatpush1.msra.mxu0 0.0
    %1756 = vmatprep.subr.mxu0 0.0
    %1757 = vmatpush1.msra.mxu0 0.0
    %1758 = vmatprep.subr.mxu0 0.0
    %1759 = vmatpush1.msra.mxu0 0.0
    %1760 = vmatprep.subr.mxu0 0.0
    %1761 = vmatpush1.msra.mxu0 0.0
    %1762 = vmatprep.subr.mxu0 0.0
    %1763 = vmatpush1.msra.mxu0 0.0
    %1764 = vmatprep.subr.mxu0 0.0
    %1765 = vmatpush1.msra.mxu0 0.0
    %1766 = vmatprep.subr.mxu0 0.0
    %1767 = vmatpush1.msra.mxu0 0.0
    %1768 = vmatprep.subr.mxu0 0.0
    %1769 = vmatpush1.msra.mxu0 0.0
    %1770 = vmatprep.subr.mxu0 0.0
    %1771 = vmatpush1.msra.mxu0 0.0
    %1772 = vmatprep.subr.mxu0 0.0
    %1773 = vmatpush1.msra.mxu0 0.0
    %1774 = vmatprep.subr.mxu0 0.0
    %1775 = vmatpush1.msra.mxu0 0.0
    %1776 = vmatprep.subr.mxu0 0.0
    %1777 = vmatpush1.msra.mxu0 0.0
    %1778 = vmatprep.subr.mxu0 0.0
    %1779 = vmatpush1.msra.mxu0 0.0
    %1780 = vmatprep.subr.mxu0 0.0
    %1781 = vmatpush1.msra.mxu0 0.0
    %1782 = vmatprep.subr.mxu0 0.0
    %1783 = vmatpush1.msra.mxu0 0.0
    %1784 = vmatprep.subr.mxu0 0.0
    %1785 = vmatpush1.msra.mxu0 0.0
    %1786 = vmatprep.subr.mxu0 0.0
    %1787 = vmatpush1.msra.mxu0 0.0
    %1788 = vmatprep.subr.mxu0 0.0
    %1789 = vmatpush1.msra.mxu0 0.0
    %1790 = vmatprep.subr.mxu0 0.0
    %1791 = vmatpush1.msra.mxu0 0.0
    %1792 = vmatprep.subr.mxu0 0.0
    %1793 = vmatpush1.msra.mxu0 0.0
    %1794 = vmatprep.subr.mxu0 0.0
    %1795 = vmatpush1.msra.mxu0 0.0
    %1796 = vmatprep.subr.mxu0 0.0
    %1797 = vmatpush1.msra.mxu0 0.0
    %1798 = vmatprep.subr.mxu0 0.0
    %1799 = vmatpush1.msra.mxu0 0.0
    %1800 = vmatprep.subr.mxu0 0.0
    %1801 = vmatpush1.msra.mxu0 0.0
    %1802 = vmatprep.subr.mxu0 0.0
    %1803 = vmatpush1.msra.mxu0 0.0
    %1804 = vmatprep.mubr.f32.mxu0 0.0
    %1805 = vmatmul.mubr.f32.gmra.mrb[0].mxu0 %v1735
    %v1806 = vpop.f32.mrb[0].mxu0
    %v1807 = vadd.f32 0.0, %v1806
    %v1808 = vpop.f32.mrb[0].mxu0
    %1809 = vmatprep.mubr.f32.mxu0 0.0
    %1810 = vmatmul.mubr.f32.gmra.mrb[0].mxu0 %v1738
    %v1811 = vpop.f32.mrb[0].mxu0
    %v1812 = vadd.f32 0.0, %v1811
    %v1813 = vpop.f32.mrb[0].mxu0
    %1814 = vdwg.mxu0
    %v1816 = vsel %vm1491, %v1546, 0
    %v1819 = vsel %vm1491, %v1547, 0
    %1821 = vmatprep.subr.mxu0 0.0
    %1822 = vmatpush1.msra.mxu0 %v1134
    %1823 = vmatprep.subr.mxu0 0.0
    %1824 = vmatpush1.msra.mxu0 %v1139
    %1825 = vmatprep.subr.mxu0 0.0
    %1826 = vmatpush1.msra.mxu0 0.0
    %1827 = vmatprep.subr.mxu0 0.0
    %1828 = vmatpush1.msra.mxu0 0.0
    %1829 = vmatprep.subr.mxu0 0.0
    %1830 = vmatpush1.msra.mxu0 0.0
    %1831 = vmatprep.subr.mxu0 0.0
    %1832 = vmatpush1.msra.mxu0 0.0
    %1833 = vmatprep.subr.mxu0 0.0
    %1834 = vmatpush1.msra.mxu0 0.0
    %1835 = vmatprep.subr.mxu0 0.0
    %1836 = vmatpush1.msra.mxu0 0.0
    %1837 = vmatprep.subr.mxu0 0.0
    %1838 = vmatpush1.msra.mxu0 0.0
    %1839 = vmatprep.subr.mxu0 0.0
    %1840 = vmatpush1.msra.mxu0 0.0
    %1841 = vmatprep.subr.mxu0 0.0
    %1842 = vmatpush1.msra.mxu0 0.0
    %1843 = vmatprep.subr.mxu0 0.0
    %1844 = vmatpush1.msra.mxu0 0.0
    %1845 = vmatprep.subr.mxu0 0.0
    %1846 = vmatpush1.msra.mxu0 0.0
    %1847 = vmatprep.subr.mxu0 0.0
    %1848 = vmatpush1.msra.mxu0 0.0
    %1849 = vmatprep.subr.mxu0 0.0
    %1850 = vmatpush1.msra.mxu0 0.0
    %1851 = vmatprep.subr.mxu0 0.0
    %1852 = vmatpush1.msra.mxu0 0.0
    %1853 = vmatprep.subr.mxu0 0.0
    %1854 = vmatpush1.msra.mxu0 0.0
    %1855 = vmatprep.subr.mxu0 0.0
    %1856 = vmatpush1.msra.mxu0 0.0
    %1857 = vmatprep.subr.mxu0 0.0
    %1858 = vmatpush1.msra.mxu0 0.0
    %1859 = vmatprep.subr.mxu0 0.0
    %1860 = vmatpush1.msra.mxu0 0.0
    %1861 = vmatprep.subr.mxu0 0.0
    %1862 = vmatpush1.msra.mxu0 0.0
    %1863 = vmatprep.subr.mxu0 0.0
    %1864 = vmatpush1.msra.mxu0 0.0
    %1865 = vmatprep.subr.mxu0 0.0
    %1866 = vmatpush1.msra.mxu0 0.0
    %1867 = vmatprep.subr.mxu0 0.0
    %1868 = vmatpush1.msra.mxu0 0.0
    %1869 = vmatprep.subr.mxu0 0.0
    %1870 = vmatpush1.msra.mxu0 0.0
    %1871 = vmatprep.subr.mxu0 0.0
    %1872 = vmatpush1.msra.mxu0 0.0
    %1873 = vmatprep.subr.mxu0 0.0
    %1874 = vmatpush1.msra.mxu0 0.0
    %1875 = vmatprep.subr.mxu0 0.0
    %1876 = vmatpush1.msra.mxu0 0.0
    %1877 = vmatprep.subr.mxu0 0.0
    %1878 = vmatpush1.msra.mxu0 0.0
    %1879 = vmatprep.subr.mxu0 0.0
    %1880 = vmatpush1.msra.mxu0 0.0
    %1881 = vmatprep.subr.mxu0 0.0
    %1882 = vmatpush1.msra.mxu0 0.0
    %1883 = vmatprep.subr.mxu0 0.0
    %1884 = vmatpush1.msra.mxu0 0.0
    %1885 = vmatprep.mubr.f32.mxu0 0.0
    %1886 = vmatmul.mubr.f32.gmra.mrb[0].mxu0 %v1816
    %v1887 = vpop.f32.mrb[0].mxu0
    %v1888 = vadd.f32 0.0, %v1887
    %v1889 = vpop.f32.mrb[0].mxu0
    %1890 = vmatprep.mubr.f32.mxu0 0.0
    %1891 = vmatmul.mubr.f32.gmra.mrb[0].mxu0 %v1819
    %v1892 = vpop.f32.mrb[0].mxu0
    %v1893 = vadd.f32 0.0, %v1892
    %v1894 = vpop.f32.mrb[0].mxu0
    %1895 = vdwg.mxu0
    %v1896 = vrcp.pop %v1550
    %v1897 = vrcp.pop %v1553
    %v1898 = vrcp.pop %v1556
    %v1899 = vrcp.pop %v1559
    %v1900 = vrcp.pop %v1562
    %v1901 = vrcp.pop %v1565
    %v1902 = vrcp.pop %v1568
    %v1903 = vrcp.pop %v1571
    %v1904 = vmul.f32 %v1645, %v1896
    %v1905 = vmul.f32 %v1650, %v1897
    %v1906 = vmul.f32 %v1726, %v1898
    %v1907 = vmul.f32 %v1731, %v1899
    %v1908 = vmul.f32 %v1807, %v1900
    %v1909 = vmul.f32 %v1812, %v1901
    %v1910 = vmul.f32 %v1888, %v1902
    %v1911 = vmul.f32 %v1893, %v1903
    %v1913 = vsel %vm1142, %v1904, 0
    %v1916 = vsel %vm1142, %v1905, 0
    %1918 = vmatprep.subr.mxu0 0.0
    %1919 = vmatpush1.msra.mxu0 %v157
    %1920 = vmatprep.subr.mxu0 0.0
    %1921 = vmatpush1.msra.mxu0 0.0
    %1922 = vmatprep.subr.mxu0 0.0
    %1923 = vmatpush1.msra.mxu0 0.0
    %1924 = vmatprep.subr.mxu0 0.0
    %1925 = vmatpush1.msra.mxu0 0.0
    %1926 = vmatprep.subr.mxu0 0.0
    %1927 = vmatpush1.msra.mxu0 0.0
    %1928 = vmatprep.subr.mxu0 0.0
    %1929 = vmatpush1.msra.mxu0 0.0
    %1930 = vmatprep.subr.mxu0 0.0
    %1931 = vmatpush1.msra.mxu0 0.0
    %1932 = vmatprep.subr.mxu0 0.0
    %1933 = vmatpush1.msra.mxu0 0.0
    %1934 = vmatprep.subr.mxu0 0.0
    %1935 = vmatpush1.msra.mxu0 0.0
    %1936 = vmatprep.subr.mxu0 0.0
    %1937 = vmatpush1.msra.mxu0 0.0
    %1938 = vmatprep.subr.mxu0 0.0
    %1939 = vmatpush1.msra.mxu0 0.0
    %1940 = vmatprep.subr.mxu0 0.0
    %1941 = vmatpush1.msra.mxu0 0.0
    %1942 = vmatprep.subr.mxu0 0.0
    %1943 = vmatpush1.msra.mxu0 0.0
    %1944 = vmatprep.subr.mxu0 0.0
    %1945 = vmatpush1.msra.mxu0 0.0
    %1946 = vmatprep.subr.mxu0 0.0
    %1947 = vmatpush1.msra.mxu0 0.0
    %1948 = vmatprep.subr.mxu0 0.0
    %1949 = vmatpush1.msra.mxu0 0.0
    %1950 = vmatprep.subr.mxu0 0.0
    %1951 = vmatpush1.msra.mxu0 0.0
    %1952 = vmatprep.subr.mxu0 0.0
    %1953 = vmatpush1.msra.mxu0 0.0
    %1954 = vmatprep.subr.mxu0 0.0
    %1955 = vmatpush1.msra.mxu0 0.0
    %1956 = vmatprep.subr.mxu0 0.0
    %1957 = vmatpush1.msra.mxu0 0.0
    %1958 = vmatprep.subr.mxu0 0.0
    %1959 = vmatpush1.msra.mxu0 0.0
    %1960 = vmatprep.subr.mxu0 0.0
    %1961 = vmatpush1.msra.mxu0 0.0
    %1962 = vmatprep.subr.mxu0 0.0
    %1963 = vmatpush1.msra.mxu0 0.0
    %1964 = vmatprep.subr.mxu0 0.0
    %1965 = vmatpush1.msra.mxu0 0.0
    %1966 = vmatprep.subr.mxu0 0.0
    %1967 = vmatpush1.msra.mxu0 0.0
    %1968 = vmatprep.subr.mxu0 0.0
    %1969 = vmatpush1.msra.mxu0 0.0
    %1970 = vmatprep.subr.mxu0 0.0
    %1971 = vmatpush1.msra.mxu0 0.0
    %1972 = vmatprep.subr.mxu0 0.0
    %1973 = vmatpush1.msra.mxu0 0.0
    %1974 = vmatprep.subr.mxu0 0.0
    %1975 = vmatpush1.msra.mxu0 0.0
    %1976 = vmatprep.subr.mxu0 0.0
    %1977 = vmatpush1.msra.mxu0 0.0
    %1978 = vmatprep.subr.mxu0 0.0
    %1979 = vmatpush1.msra.mxu0 0.0
    %1980 = vmatprep.subr.mxu0 0.0
    %1981 = vmatpush1.msra.mxu0 0.0
    %1982 = vmatprep.mubr.f32.mxu0 0.0
    %1983 = vmatmul.mubr.f32.gmra.mrb[0].mxu0 %v1913
    %v1984 = vpop.f32.mrb[0].mxu0
    %v1985 = vadd.f32 0.0, %v1984
    %v1986 = vpop.f32.mrb[0].mxu0
    %1987 = vmatprep.mubr.f32.mxu0 0.0
    %1988 = vmatmul.mubr.f32.gmra.mrb[0].mxu0 %v1916
    %v1989 = vpop.f32.mrb[0].mxu0
    %v1990 = vadd.f32 0.0, %v1989
    %v1991 = vpop.f32.mrb[0].mxu0
    %1992 = vdwg.mxu0
    %v1994 = vsel %vm1142, %v1906, 0
    %v1997 = vsel %vm1142, %v1907, 0
    %1999 = vmatprep.subr.mxu0 0.0
    %2000 = vmatpush1.msra.mxu0 %v158
    %2001 = vmatprep.subr.mxu0 0.0
    %2002 = vmatpush1.msra.mxu0 0.0
    %2003 = vmatprep.subr.mxu0 0.0
    %2004 = vmatpush1.msra.mxu0 0.0
    %2005 = vmatprep.subr.mxu0 0.0
    %2006 = vmatpush1.msra.mxu0 0.0
    %2007 = vmatprep.subr.mxu0 0.0
    %2008 = vmatpush1.msra.mxu0 0.0
    %2009 = vmatprep.subr.mxu0 0.0
    %2010 = vmatpush1.msra.mxu0 0.0
    %2011 = vmatprep.subr.mxu0 0.0
    %2012 = vmatpush1.msra.mxu0 0.0
    %2013 = vmatprep.subr.mxu0 0.0
    %2014 = vmatpush1.msra.mxu0 0.0
    %2015 = vmatprep.subr.mxu0 0.0
    %2016 = vmatpush1.msra.mxu0 0.0
    %2017 = vmatprep.subr.mxu0 0.0
    %2018 = vmatpush1.msra.mxu0 0.0
    %2019 = vmatprep.subr.mxu0 0.0
    %2020 = vmatpush1.msra.mxu0 0.0
    %2021 = vmatprep.subr.mxu0 0.0
    %2022 = vmatpush1.msra.mxu0 0.0
    %2023 = vmatprep.subr.mxu0 0.0
    %2024 = vmatpush1.msra.mxu0 0.0
    %2025 = vmatprep.subr.mxu0 0.0
    %2026 = vmatpush1.msra.mxu0 0.0
    %2027 = vmatprep.subr.mxu0 0.0
    %2028 = vmatpush1.msra.mxu0 0.0
    %2029 = vmatprep.subr.mxu0 0.0
    %2030 = vmatpush1.msra.mxu0 0.0
    %2031 = vmatprep.subr.mxu0 0.0
    %2032 = vmatpush1.msra.mxu0 0.0
    %2033 = vmatprep.subr.mxu0 0.0
    %2034 = vmatpush1.msra.mxu0 0.0
    %2035 = vmatprep.subr.mxu0 0.0
    %2036 = vmatpush1.msra.mxu0 0.0
    %2037 = vmatprep.subr.mxu0 0.0
    %2038 = vmatpush1.msra.mxu0 0.0
    %2039 = vmatprep.subr.mxu0 0.0
    %2040 = vmatpush1.msra.mxu0 0.0
    %2041 = vmatprep.subr.mxu0 0.0
    %2042 = vmatpush1.msra.mxu0 0.0
    %2043 = vmatprep.subr.mxu0 0.0
    %2044 = vmatpush1.msra.mxu0 0.0
    %2045 = vmatprep.subr.mxu0 0.0
    %2046 = vmatpush1.msra.mxu0 0.0
    %2047 = vmatprep.subr.mxu0 0.0
    %2048 = vmatpush1.msra.mxu0 0.0
    %2049 = vmatprep.subr.mxu0 0.0
    %2050 = vmatpush1.msra.mxu0 0.0
    %2051 = vmatprep.subr.mxu0 0.0
    %2052 = vmatpush1.msra.mxu0 0.0
    %2053 = vmatprep.subr.mxu0 0.0
    %2054 = vmatpush1.msra.mxu0 0.0
    %2055 = vmatprep.subr.mxu0 0.0
    %2056 = vmatpush1.msra.mxu0 0.0
    %2057 = vmatprep.subr.mxu0 0.0
    %2058 = vmatpush1.msra.mxu0 0.0
    %2059 = vmatprep.subr.mxu0 0.0
    %2060 = vmatpush1.msra.mxu0 0.0
    %2061 = vmatprep.subr.mxu0 0.0
    %2062 = vmatpush1.msra.mxu0 0.0
    %2063 = vmatprep.mubr.f32.mxu0 0.0
    %2064 = vmatmul.mubr.f32.gmra.mrb[0].mxu0 %v1994
    %v2065 = vpop.f32.mrb[0].mxu0
    %v2066 = vadd.f32 0.0, %v2065
    %v2067 = vpop.f32.mrb[0].mxu0
    %2068 = vmatprep.mubr.f32.mxu0 0.0
    %2069 = vmatmul.mubr.f32.gmra.mrb[0].mxu0 %v1997
    %v2070 = vpop.f32.mrb[0].mxu0
    %v2071 = vadd.f32 0.0, %v2070
    %v2072 = vpop.f32.mrb[0].mxu0
    %2073 = vdwg.mxu0
    %v2075 = vsel %vm1142, %v1908, 0
    %v2078 = vsel %vm1142, %v1909, 0
    %2080 = vmatprep.subr.mxu0 0.0
    %2081 = vmatpush1.msra.mxu0 %v159
    %2082 = vmatprep.subr.mxu0 0.0
    %2083 = vmatpush1.msra.mxu0 0.0
    %2084 = vmatprep.subr.mxu0 0.0
    %2085 = vmatpush1.msra.mxu0 0.0
    %2086 = vmatprep.subr.mxu0 0.0
    %2087 = vmatpush1.msra.mxu0 0.0
    %2088 = vmatprep.subr.mxu0 0.0
    %2089 = vmatpush1.msra.mxu0 0.0
    %2090 = vmatprep.subr.mxu0 0.0
    %2091 = vmatpush1.msra.mxu0 0.0
    %2092 = vmatprep.subr.mxu0 0.0
    %2093 = vmatpush1.msra.mxu0 0.0
    %2094 = vmatprep.subr.mxu0 0.0
    %2095 = vmatpush1.msra.mxu0 0.0
    %2096 = vmatprep.subr.mxu0 0.0
    %2097 = vmatpush1.msra.mxu0 0.0
    %2098 = vmatprep.subr.mxu0 0.0
    %2099 = vmatpush1.msra.mxu0 0.0
    %2100 = vmatprep.subr.mxu0 0.0
    %2101 = vmatpush1.msra.mxu0 0.0
    %2102 = vmatprep.subr.mxu0 0.0
    %2103 = vmatpush1.msra.mxu0 0.0
    %2104 = vmatprep.subr.mxu0 0.0
    %2105 = vmatpush1.msra.mxu0 0.0
    %2106 = vmatprep.subr.mxu0 0.0
    %2107 = vmatpush1.msra.mxu0 0.0
    %2108 = vmatprep.subr.mxu0 0.0
    %2109 = vmatpush1.msra.mxu0 0.0
    %2110 = vmatprep.subr.mxu0 0.0
    %2111 = vmatpush1.msra.mxu0 0.0
    %2112 = vmatprep.subr.mxu0 0.0
    %2113 = vmatpush1.msra.mxu0 0.0
    %2114 = vmatprep.subr.mxu0 0.0
    %2115 = vmatpush1.msra.mxu0 0.0
    %2116 = vmatprep.subr.mxu0 0.0
    %2117 = vmatpush1.msra.mxu0 0.0
    %2118 = vmatprep.subr.mxu0 0.0
    %2119 = vmatpush1.msra.mxu0 0.0
    %2120 = vmatprep.subr.mxu0 0.0
    %2121 = vmatpush1.msra.mxu0 0.0
    %2122 = vmatprep.subr.mxu0 0.0
    %2123 = vmatpush1.msra.mxu0 0.0
    %2124 = vmatprep.subr.mxu0 0.0
    %2125 = vmatpush1.msra.mxu0 0.0
    %2126 = vmatprep.subr.mxu0 0.0
    %2127 = vmatpush1.msra.mxu0 0.0
    %2128 = vmatprep.subr.mxu0 0.0
    %2129 = vmatpush1.msra.mxu0 0.0
    %2130 = vmatprep.subr.mxu0 0.0
    %2131 = vmatpush1.msra.mxu0 0.0
    %2132 = vmatprep.subr.mxu0 0.0
    %2133 = vmatpush1.msra.mxu0 0.0
    %2134 = vmatprep.subr.mxu0 0.0
    %2135 = vmatpush1.msra.mxu0 0.0
    %2136 = vmatprep.subr.mxu0 0.0
    %2137 = vmatpush1.msra.mxu0 0.0
    %2138 = vmatprep.subr.mxu0 0.0
    %2139 = vmatpush1.msra.mxu0 0.0
    %2140 = vmatprep.subr.mxu0 0.0
    %2141 = vmatpush1.msra.mxu0 0.0
    %2142 = vmatprep.subr.mxu0 0.0
    %2143 = vmatpush1.msra.mxu0 0.0
    %2144 = vmatprep.mubr.f32.mxu0 0.0
    %2145 = vmatmul.mubr.f32.gmra.mrb[0].mxu0 %v2075
    %v2146 = vpop.f32.mrb[0].mxu0
    %v2147 = vadd.f32 0.0, %v2146
    %v2148 = vpop.f32.mrb[0].mxu0
    %2149 = vmatprep.mubr.f32.mxu0 0.0
    %2150 = vmatmul.mubr.f32.gmra.mrb[0].mxu0 %v2078
    %v2151 = vpop.f32.mrb[0].mxu0
    %v2152 = vadd.f32 0.0, %v2151
    %v2153 = vpop.f32.mrb[0].mxu0
    %2154 = vdwg.mxu0
    %v2156 = vsel %vm1142, %v1910, 0
    %v2159 = vsel %vm1142, %v1911, 0
    %2161 = vmatprep.subr.mxu0 0.0
    %2162 = vmatpush1.msra.mxu0 %v160
    %2163 = vmatprep.subr.mxu0 0.0
    %2164 = vmatpush1.msra.mxu0 0.0
    %2165 = vmatprep.subr.mxu0 0.0
    %2166 = vmatpush1.msra.mxu0 0.0
    %2167 = vmatprep.subr.mxu0 0.0
    %2168 = vmatpush1.msra.mxu0 0.0
    %2169 = vmatprep.subr.mxu0 0.0
    %2170 = vmatpush1.msra.mxu0 0.0
    %2171 = vmatprep.subr.mxu0 0.0
    %2172 = vmatpush1.msra.mxu0 0.0
    %2173 = vmatprep.subr.mxu0 0.0
    %2174 = vmatpush1.msra.mxu0 0.0
    %2175 = vmatprep.subr.mxu0 0.0
    %2176 = vmatpush1.msra.mxu0 0.0
    %2177 = vmatprep.subr.mxu0 0.0
    %2178 = vmatpush1.msra.mxu0 0.0
    %2179 = vmatprep.subr.mxu0 0.0
    %2180 = vmatpush1.msra.mxu0 0.0
    %2181 = vmatprep.subr.mxu0 0.0
    %2182 = vmatpush1.msra.mxu0 0.0
    %2183 = vmatprep.subr.mxu0 0.0
    %2184 = vmatpush1.msra.mxu0 0.0
    %2185 = vmatprep.subr.mxu0 0.0
    %2186 = vmatpush1.msra.mxu0 0.0
    %2187 = vmatprep.subr.mxu0 0.0
    %2188 = vmatpush1.msra.mxu0 0.0
    %2189 = vmatprep.subr.mxu0 0.0
    %2190 = vmatpush1.msra.mxu0 0.0
    %2191 = vmatprep.subr.mxu0 0.0
    %2192 = vmatpush1.msra.mxu0 0.0
    %2193 = vmatprep.subr.mxu0 0.0
    %2194 = vmatpush1.msra.mxu0 0.0
    %2195 = vmatprep.subr.mxu0 0.0
    %2196 = vmatpush1.msra.mxu0 0.0
    %2197 = vmatprep.subr.mxu0 0.0
    %2198 = vmatpush1.msra.mxu0 0.0
    %2199 = vmatprep.subr.mxu0 0.0
    %2200 = vmatpush1.msra.mxu0 0.0
    %2201 = vmatprep.subr.mxu0 0.0
    %2202 = vmatpush1.msra.mxu0 0.0
    %2203 = vmatprep.subr.mxu0 0.0
    %2204 = vmatpush1.msra.mxu0 0.0
    %2205 = vmatprep.subr.mxu0 0.0
    %2206 = vmatpush1.msra.mxu0 0.0
    %2207 = vmatprep.subr.mxu0 0.0
    %2208 = vmatpush1.msra.mxu0 0.0
    %2209 = vmatprep.subr.mxu0 0.0
    %2210 = vmatpush1.msra.mxu0 0.0
    %2211 = vmatprep.subr.mxu0 0.0
    %2212 = vmatpush1.msra.mxu0 0.0
    %2213 = vmatprep.subr.mxu0 0.0
    %2214 = vmatpush1.msra.mxu0 0.0
    %2215 = vmatprep.subr.mxu0 0.0
    %2216 = vmatpush1.msra.mxu0 0.0
    %2217 = vmatprep.subr.mxu0 0.0
    %2218 = vmatpush1.msra.mxu0 0.0
    %2219 = vmatprep.subr.mxu0 0.0
    %2220 = vmatpush1.msra.mxu0 0.0
    %2221 = vmatprep.subr.mxu0 0.0
    %2222 = vmatpush1.msra.mxu0 0.0
    %2223 = vmatprep.subr.mxu0 0.0
    %2224 = vmatpush1.msra.mxu0 0.0
    %2225 = vmatprep.mubr.f32.mxu0 0.0
    %2226 = vmatmul.mubr.f32.gmra.mrb[0].mxu0 %v2156
    %v2227 = vpop.f32.mrb[0].mxu0
    %v2228 = vadd.f32 0.0, %v2227
    %v2229 = vpop.f32.mrb[0].mxu0
    %2230 = vmatprep.mubr.f32.mxu0 0.0
    %2231 = vmatmul.mubr.f32.gmra.mrb[0].mxu0 %v2159
    %v2232 = vpop.f32.mrb[0].mxu0
    %v2233 = vadd.f32 0.0, %v2232
    %v2234 = vpop.f32.mrb[0].mxu0
    %2235 = vdwg.mxu0
    %v2236 = vadd.f32 %v1985, %v2066
    %v2237 = vadd.f32 %v1990, %v2071
    %v2238 = vadd.f32 %v2236, %v2147
    %v2239 = vadd.f32 %v2237, %v2152
    %v2240 = vadd.f32 %v2238, %v2228
    %v2241 = vadd.f32 %v2239, %v2233
    %v2242 = vlaneseq
    %v2243 = vshrl.u32 %v2242, 7
    %v2244 = vsub.s32 0, %v2243
    %v2245 = vrot.slane %v169, %v2244
    %v2246 = vadd.f32 %v2240, %v2245
    %v2247 = vadd.f32 %v2241, %v2245
    %v2248 = vadd.f32 %v124, %v2246
    %v2249 = vadd.f32 %v129, %v2247
    %v2250 = vsel %vm199, %v2248, 0.0
    %2251 = vadd.xlane.f32.xlu0 %v2250
    %v2252 = vpop.xlane.xlu0 %2251
    %v2253 = vsel %vm199, %v2249, 0.0
    %2254 = vadd.xlane.f32.xlu0 %v2253
    %v2255 = vpop.xlane.xlu0 %2254
    %v2256 = vrcp.pop 32.0
    %v2257 = vmul.f32 %v2252, %v2256
    %v2258 = vmul.f32 %v2255, %v2256
    %v2259 = vsub.f32 %v2248, %v2257
    %v2260 = vsub.f32 %v2249, %v2258
    %v2261 = vmul.f32 %v2259, %v2259
    %v2262 = vmul.f32 %v2260, %v2260
    %v2263 = vsel %vm199, %v2261, 0.0
    %2264 = vadd.xlane.f32.xlu0 %v2263
    %v2265 = vpop.xlane.xlu0 %2264
    %v2266 = vsel %vm199, %v2262, 0.0
    %2267 = vadd.xlane.f32.xlu0 %v2266
    %v2268 = vpop.xlane.xlu0 %2267
    %v2269 = vmul.f32 %v2265, %v2256
    %v2270 = vmul.f32 %v2268, %v2256
    %v2271 = vadd.f32 %v2269, 1e-05
    %v2272 = vadd.f32 %v2270, 1e-05
    %v2273 = vrsqrt.pop %v2271
    %v2274 = vrsqrt.pop %v2272
    %v2275 = vmul.f32 %v2259, %v2273
    %v2276 = vmul.f32 %v2260, %v2274
    %v2277 = vlaneseq
    %v2278 = vshrl.u32 %v2277, 7
    %v2279 = vsub.s32 2, %v2278
    %v2280 = vrot.slane %v169, %v2279
    %v2281 = vmul.f32 %v2275, %v2280
    %v2282 = vmul.f32 %v2276, %v2280
    %v2283 = vlaneseq
    %v2284 = vshrl.u32 %v2283, 7
    %v2285 = vsub.s32 3, %v2284
    %v2286 = vrot.slane %v169, %v2285
    %v2287 = vadd.f32 %v2281, %v2286
    %v2288 = vadd.f32 %v2282, %v2286
    %v2289 = vlaneseq
    %v2290 = vshrl.u32 %v2289, 7
    %v2291 = vsub.s32 0, %v2290
    %v2292 = vrot.slane %v174, %v2291
    %v2294 = vsel %vm199, %v2287, 0
    %v2297 = vsel %vm199, %v2288, 0
    %2299 = vmatprep.subr.mxu0 0.0
    %2300 = vmatpush1.msra.mxu0 %v170
    %2301 = vmatprep.subr.mxu0 0.0
    %2302 = vmatpush1.msra.mxu0 %v171
    %2303 = vmatprep.subr.mxu0 0.0
    %2304 = vmatpush1.msra.mxu0 %v172
    %2305 = vmatprep.subr.mxu0 0.0
    %2306 = vmatpush1.msra.mxu0 %v173
    %2307 = vmatprep.subr.mxu0 0.0
    %2308 = vmatpush1.msra.mxu0 0.0
    %2309 = vmatprep.subr.mxu0 0.0
    %2310 = vmatpush1.msra.mxu0 0.0
    %2311 = vmatprep.subr.mxu0 0.0
    %2312 = vmatpush1.msra.mxu0 0.0
    %2313 = vmatprep.subr.mxu0 0.0
    %2314 = vmatpush1.msra.mxu0 0.0
    %2315 = vmatprep.subr.mxu0 0.0
    %2316 = vmatpush1.msra.mxu0 0.0
    %2317 = vmatprep.subr.mxu0 0.0
    %2318 = vmatpush1.msra.mxu0 0.0
    %2319 = vmatprep.subr.mxu0 0.0
    %2320 = vmatpush1.msra.mxu0 0.0
    %2321 = vmatprep.subr.mxu0 0.0
    %2322 = vmatpush1.msra.mxu0 0.0
    %2323 = vmatprep.subr.mxu0 0.0
    %2324 = vmatpush1.msra.mxu0 0.0
    %2325 = vmatprep.subr.mxu0 0.0
    %2326 = vmatpush1.msra.mxu0 0.0
    %2327 = vmatprep.subr.mxu0 0.0
    %2328 = vmatpush1.msra.mxu0 0.0
    %2329 = vmatprep.subr.mxu0 0.0
    %2330 = vmatpush1.msra.mxu0 0.0
    %2331 = vmatprep.subr.mxu0 0.0
    %2332 = vmatpush1.msra.mxu0 0.0
    %2333 = vmatprep.subr.mxu0 0.0
    %2334 = vmatpush1.msra.mxu0 0.0
    %2335 = vmatprep.subr.mxu0 0.0
    %2336 = vmatpush1.msra.mxu0 0.0
    %2337 = vmatprep.subr.mxu0 0.0
    %2338 = vmatpush1.msra.mxu0 0.0
    %2339 = vmatprep.subr.mxu0 0.0
    %2340 = vmatpush1.msra.mxu0 0.0
    %2341 = vmatprep.subr.mxu0 0.0
    %2342 = vmatpush1.msra.mxu0 0.0
    %2343 = vmatprep.subr.mxu0 0.0
    %2344 = vmatpush1.msra.mxu0 0.0
    %2345 = vmatprep.subr.mxu0 0.0
    %2346 = vmatpush1.msra.mxu0 0.0
    %2347 = vmatprep.subr.mxu0 0.0
    %2348 = vmatpush1.msra.mxu0 0.0
    %2349 = vmatprep.subr.mxu0 0.0
    %2350 = vmatpush1.msra.mxu0 0.0
    %2351 = vmatprep.subr.mxu0 0.0
    %2352 = vmatpush1.msra.mxu0 0.0
    %2353 = vmatprep.subr.mxu0 0.0
    %2354 = vmatpush1.msra.mxu0 0.0
    %2355 = vmatprep.subr.mxu0 0.0
    %2356 = vmatpush1.msra.mxu0 0.0
    %2357 = vmatprep.subr.mxu0 0.0
    %2358 = vmatpush1.msra.mxu0 0.0
    %2359 = vmatprep.subr.mxu0 0.0
    %2360 = vmatpush1.msra.mxu0 0.0
    %2361 = vmatprep.subr.mxu0 0.0
    %2362 = vmatpush1.msra.mxu0 0.0
    %2363 = vmatprep.mubr.f32.mxu0 0.0
    %2364 = vmatmul.mubr.f32.gmra.mrb[0].mxu0 %v2294
    %v2365 = vpop.f32.mrb[0].mxu0
    %v2366 = vadd.f32 %v2292, %v2365
    %v2367 = vpop.f32.mrb[0].mxu0
    %2368 = vmatprep.mubr.f32.mxu0 0.0
    %2369 = vmatmul.mubr.f32.gmra.mrb[0].mxu0 %v2297
    %v2370 = vpop.f32.mrb[0].mxu0
    %v2371 = vadd.f32 %v2292, %v2370
    %v2372 = vpop.f32.mrb[0].mxu0
    %2373 = vdwg.mxu0
    %v2374 = vmax.f32 %v2366, 0.0
    %v2375 = vmax.f32 %v2371, 0.0
    %v2376 = vlaneseq
    %v2377 = vshrl.u32 %v2376, 7
    %v2378 = vsub.s32 1, %v2377
    %v2379 = vrot.slane %v169, %v2378
    %v2381 = vsel %vm50, %v2374, 0
    %v2384 = vsel %vm50, %v2375, 0
    %2386 = vmatprep.subr.mxu0 0.0
    %2387 = vmatpush1.msra.mxu0 %v161
    %2388 = vmatprep.subr.mxu0 0.0
    %2389 = vmatpush1.msra.mxu0 %v162
    %2390 = vmatprep.subr.mxu0 0.0
    %2391 = vmatpush1.msra.mxu0 %v163
    %2392 = vmatprep.subr.mxu0 0.0
    %2393 = vmatpush1.msra.mxu0 %v164
    %2394 = vmatprep.subr.mxu0 0.0
    %2395 = vmatpush1.msra.mxu0 %v165
    %2396 = vmatprep.subr.mxu0 0.0
    %2397 = vmatpush1.msra.mxu0 %v166
    %2398 = vmatprep.subr.mxu0 0.0
    %2399 = vmatpush1.msra.mxu0 %v167
    %2400 = vmatprep.subr.mxu0 0.0
    %2401 = vmatpush1.msra.mxu0 %v168
    %2402 = vmatprep.subr.mxu0 0.0
    %2403 = vmatpush1.msra.mxu0 0.0
    %2404 = vmatprep.subr.mxu0 0.0
    %2405 = vmatpush1.msra.mxu0 0.0
    %2406 = vmatprep.subr.mxu0 0.0
    %2407 = vmatpush1.msra.mxu0 0.0
    %2408 = vmatprep.subr.mxu0 0.0
    %2409 = vmatpush1.msra.mxu0 0.0
    %2410 = vmatprep.subr.mxu0 0.0
    %2411 = vmatpush1.msra.mxu0 0.0
    %2412 = vmatprep.subr.mxu0 0.0
    %2413 = vmatpush1.msra.mxu0 0.0
    %2414 = vmatprep.subr.mxu0 0.0
    %2415 = vmatpush1.msra.mxu0 0.0
    %2416 = vmatprep.subr.mxu0 0.0
    %2417 = vmatpush1.msra.mxu0 0.0
    %2418 = vmatprep.subr.mxu0 0.0
    %2419 = vmatpush1.msra.mxu0 0.0
    %2420 = vmatprep.subr.mxu0 0.0
    %2421 = vmatpush1.msra.mxu0 0.0
    %2422 = vmatprep.subr.mxu0 0.0
    %2423 = vmatpush1.msra.mxu0 0.0
    %2424 = vmatprep.subr.mxu0 0.0
    %2425 = vmatpush1.msra.mxu0 0.0
    %2426 = vmatprep.subr.mxu0 0.0
    %2427 = vmatpush1.msra.mxu0 0.0
    %2428 = vmatprep.subr.mxu0 0.0
    %2429 = vmatpush1.msra.mxu0 0.0
    %2430 = vmatprep.subr.mxu0 0.0
    %2431 = vmatpush1.msra.mxu0 0.0
    %2432 = vmatprep.subr.mxu0 0.0
    %2433 = vmatpush1.msra.mxu0 0.0
    %2434 = vmatprep.subr.mxu0 0.0
    %2435 = vmatpush1.msra.mxu0 0.0
    %2436 = vmatprep.subr.mxu0 0.0
    %2437 = vmatpush1.msra.mxu0 0.0
    %2438 = vmatprep.subr.mxu0 0.0
    %2439 = vmatpush1.msra.mxu0 0.0
    %2440 = vmatprep.subr.mxu0 0.0
    %2441 = vmatpush1.msra.mxu0 0.0
    %2442 = vmatprep.subr.mxu0 0.0
    %2443 = vmatpush1.msra.mxu0 0.0
    %2444 = vmatprep.subr.mxu0 0.0
    %2445 = vmatpush1.msra.mxu0 0.0
    %2446 = vmatprep.subr.mxu0 0.0
    %2447 = vmatpush1.msra.mxu0 0.0
    %2448 = vmatprep.subr.mxu0 0.0
    %2449 = vmatpush1.msra.mxu0 0.0
    %2450 = vmatprep.mubr.f32.mxu0 0.0
    %2451 = vmatmul.mubr.f32.gmra.mrb[0].mxu0 %v2381
    %v2452 = vpop.f32.mrb[0].mxu0
    %v2453 = vadd.f32 %v2379, %v2452
    %v2454 = vpop.f32.mrb[0].mxu0
    %2455 = vmatprep.mubr.f32.mxu0 0.0
    %2456 = vmatmul.mubr.f32.gmra.mrb[0].mxu0 %v2384
    %v2457 = vpop.f32.mrb[0].mxu0
    %v2458 = vadd.f32 %v2379, %v2457
    %v2459 = vpop.f32.mrb[0].mxu0
    %2460 = vdwg.mxu0
    %v2461 = vadd.f32 %v2287, %v2453
    %v2462 = vadd.f32 %v2288, %v2458
    %v2463 = vsel %vm199, %v2461, 0.0
    %2464 = vadd.xlane.f32.xlu0 %v2463
    %v2465 = vpop.xlane.xlu0 %2464
    %v2466 = vsel %vm199, %v2462, 0.0
    %2467 = vadd.xlane.f32.xlu0 %v2466
    %v2468 = vpop.xlane.xlu0 %2467
    %v2469 = vmul.f32 %v2465, %v2256
    %v2470 = vmul.f32 %v2468, %v2256
    %v2471 = vsub.f32 %v2461, %v2469
    %v2472 = vsub.f32 %v2462, %v2470
    %v2473 = vmul.f32 %v2471, %v2471
    %v2474 = vmul.f32 %v2472, %v2472
    %v2475 = vsel %vm199, %v2473, 0.0
    %2476 = vadd.xlane.f32.xlu0 %v2475
    %v2477 = vpop.xlane.xlu0 %2476
    %v2478 = vsel %vm199, %v2474, 0.0
    %2479 = vadd.xlane.f32.xlu0 %v2478
    %v2480 = vpop.xlane.xlu0 %2479
    %v2481 = vmul.f32 %v2477, %v2256
    %v2482 = vmul.f32 %v2480, %v2256
    %v2483 = vadd.f32 %v2481, 1e-05
    %v2484 = vadd.f32 %v2482, 1e-05
    %v2485 = vrsqrt.pop %v2483
    %v2486 = vrsqrt.pop %v2484
    %v2487 = vmul.f32 %v2471, %v2485
    %v2488 = vmul.f32 %v2472, %v2486
    %v2489 = vlaneseq
    %v2490 = vshrl.u32 %v2489, 7
    %v2491 = vsub.s32 4, %v2490
    %v2492 = vrot.slane %v169, %v2491
    %v2493 = vmul.f32 %v2487, %v2492
    %v2494 = vmul.f32 %v2488, %v2492
    %v2495 = vlaneseq
    %v2496 = vshrl.u32 %v2495, 7
    %v2497 = vsub.s32 5, %v2496
    %v2498 = vrot.slane %v169, %v2497
    %v2499 = vadd.f32 %v2493, %v2498
    %v2500 = vadd.f32 %v2494, %v2498
    %s2501 = scalar_lea.vmem %s2, 128
    %v2502 = vld [vmem:[%s2501] sm:$0xff]
    %v2503 = vld [vmem:[%s2501 + $0x8] sm:$0xff]
    %v2504 = vld [vmem:[%s2501 + $0x10] sm:$0xff]
    %v2505 = vld [vmem:[%s2501 + $0x18] sm:$0xff]
    %v2506 = vld [vmem:[%s2501 + $0x20] sm:$0xff]
    %v2507 = vld [vmem:[%s2501 + $0x28] sm:$0xff]
    %v2508 = vld [vmem:[%s2501 + $0x30] sm:$0xff]
    %v2509 = vld [vmem:[%s2501 + $0x38] sm:$0xff]
    %v2510 = vld [vmem:[%s2501 + $0x40] sm:$0xff]
    %v2511 = vld [vmem:[%s2501 + $0x48] sm:$0xff]
    %v2512 = vld [vmem:[%s2501 + $0x50] sm:$0xff]
    %v2513 = vld [vmem:[%s2501 + $0x58] sm:$0xff]
    %s2514 = scalar_lea.vmem %s2, 224
    %v2515 = vld [vmem:[%s2514] sm:$0xff]
    %v2516 = vld [vmem:[%s2514 + $0x8] sm:$0xff]
    %v2517 = vld [vmem:[%s2514 + $0x10] sm:$0xff]
    %v2518 = vld [vmem:[%s2514 + $0x18] sm:$0xff]
    %v2519 = vld [vmem:[%s1 + $0x98] sm:$0xff]
    %v2520 = vld [vmem:[%s1 + $0xa0] sm:$0xff]
    %v2521 = vld [vmem:[%s1 + $0xa8] sm:$0xff]
    %v2522 = vld [vmem:[%s1 + $0xb0] sm:$0xff]
    %v2523 = vld [vmem:[%s1 + $0xb8] sm:$0xff]
    %v2524 = vld [vmem:[%s1 + $0xc0] sm:$0xff]
    %v2525 = vld [vmem:[%s1 + $0xc8] sm:$0xff]
    %v2526 = vld [vmem:[%s1 + $0xd0] sm:$0xff]
    %v2527 = vld [vmem:[%s1 + $0xd8] sm:$0xff]
    %v2528 = vld [vmem:[%s3 + $0x28] sm:$0xff]
    %v2529 = vld [vmem:[%s3 + $0x30] sm:$0xff]
    %v2530 = vld [vmem:[%s3 + $0x38] sm:$0xff]
    %v2531 = vld [vmem:[%s3 + $0x40] sm:$0xff]
    %v2532 = vld [vmem:[%s3 + $0x48] sm:$0x1]
    %s2533 = scalar_lea.vmem %s5, 192
    %v2534 = vld [vmem:[%s2533] sm:$0xff]
    %v2535 = vld [vmem:[%s2533 + $0x8] sm:$0xff]
    %v2536 = vld [vmem:[%s2533 + $0x10] sm:$0xff]
    %v2537 = vld [vmem:[%s2533 + $0x18] sm:$0xff]
    %v2538 = vld [vmem:[%s2533 + $0x20] sm:$0xff]
    %v2539 = vld [vmem:[%s2533 + $0x28] sm:$0xff]
    %v2540 = vld [vmem:[%s2533 + $0x30] sm:$0xff]
    %v2541 = vld [vmem:[%s2533 + $0x38] sm:$0xff]
    %v2542 = vld [vmem:[%s2533 + $0x40] sm:$0xff]
    %v2543 = vld [vmem:[%s2533 + $0x48] sm:$0xff]
    %v2544 = vld [vmem:[%s2533 + $0x50] sm:$0xff]
    %v2545 = vld [vmem:[%s2533 + $0x58] sm:$0xff]
    %v2546 = vld [vmem:[%s2533 + $0x60] sm:$0xff]
    %v2547 = vld [vmem:[%s2533 + $0x68] sm:$0xff]
    %v2548 = vld [vmem:[%s2533 + $0x70] sm:$0xff]
    %v2549 = vld [vmem:[%s2533 + $0x78] sm:$0xff]
    %v2550 = vld [vmem:[%s2533 + $0x80] sm:$0xff]
    %v2551 = vld [vmem:[%s2533 + $0x88] sm:$0xff]
    %v2552 = vld [vmem:[%s2533 + $0x90] sm:$0xff]
    %v2553 = vld [vmem:[%s2533 + $0x98] sm:$0xff]
    %v2554 = vld [vmem:[%s2533 + $0xa0] sm:$0xff]
    %v2555 = vld [vmem:[%s2533 + $0xa8] sm:$0xff]
    %v2556 = vld [vmem:[%s2533 + $0xb0] sm:$0xff]
    %v2557 = vld [vmem:[%s2533 + $0xb8] sm:$0xff]
    %v2559 = vsel %vm199, %v2499, 0
    %v2562 = vsel %vm199, %v2500, 0
    %v2565 = vsel %vm199, %v2502, 0
    %2567 = vmatprep.subr.mxu0 0.0
    %2568 = vmatpush1.xpose.msra.mxu0 %v2565
    %2569 = vmatprep.subr.mxu0 0.0
    %2570 = vmatpush1.xpose.msra.mxu0 0.0
    %2571 = vmatprep.subr.mxu0 0.0
    %2572 = vmatpush1.xpose.msra.mxu0 0.0
    %2573 = vmatprep.subr.mxu0 0.0
    %2574 = vmatpush1.xpose.msra.mxu0 0.0
    %2575 = vmatprep.subr.mxu0 0.0
    %2576 = vmatpush1.xpose.msra.mxu0 0.0
    %2577 = vmatprep.subr.mxu0 0.0
    %2578 = vmatpush1.xpose.msra.mxu0 0.0
    %2579 = vmatprep.subr.mxu0 0.0
    %2580 = vmatpush1.xpose.msra.mxu0 0.0
    %2581 = vmatprep.subr.mxu0 0.0
    %2582 = vmatpush1.xpose.msra.mxu0 0.0
    %2583 = vmatprep.subr.mxu0 0.0
    %2584 = vmatpush1.xpose.msra.mxu0 0.0
    %2585 = vmatprep.subr.mxu0 0.0
    %2586 = vmatpush1.xpose.msra.mxu0 0.0
    %2587 = vmatprep.subr.mxu0 0.0
    %2588 = vmatpush1.xpose.msra.mxu0 0.0
    %2589 = vmatprep.subr.mxu0 0.0
    %2590 = vmatpush1.xpose.msra.mxu0 0.0
    %2591 = vmatprep.subr.mxu0 0.0
    %2592 = vmatpush1.xpose.msra.mxu0 0.0
    %2593 = vmatprep.subr.mxu0 0.0
    %2594 = vmatpush1.xpose.msra.mxu0 0.0
    %2595 = vmatprep.subr.mxu0 0.0
    %2596 = vmatpush1.xpose.msra.mxu0 0.0
    %2597 = vmatprep.subr.mxu0 0.0
    %2598 = vmatpush1.xpose.msra.mxu0 0.0
    %2599 = vmatprep.subr.mxu0 0.0
    %2600 = vmatpush1.xpose.msra.mxu0 0.0
    %2601 = vmatprep.subr.mxu0 0.0
    %2602 = vmatpush1.xpose.msra.mxu0 0.0
    %2603 = vmatprep.subr.mxu0 0.0
    %2604 = vmatpush1.xpose.msra.mxu0 0.0
    %2605 = vmatprep.subr.mxu0 0.0
    %2606 = vmatpush1.xpose.msra.mxu0 0.0
    %2607 = vmatprep.subr.mxu0 0.0
    %2608 = vmatpush1.xpose.msra.mxu0 0.0
    %2609 = vmatprep.subr.mxu0 0.0
    %2610 = vmatpush1.xpose.msra.mxu0 0.0
    %2611 = vmatprep.subr.mxu0 0.0
    %2612 = vmatpush1.xpose.msra.mxu0 0.0
    %2613 = vmatprep.subr.mxu0 0.0
    %2614 = vmatpush1.xpose.msra.mxu0 0.0
    %2615 = vmatprep.subr.mxu0 0.0
    %2616 = vmatpush1.xpose.msra.mxu0 0.0
    %2617 = vmatprep.subr.mxu0 0.0
    %2618 = vmatpush1.xpose.msra.mxu0 0.0
    %2619 = vmatprep.subr.mxu0 0.0
    %2620 = vmatpush1.xpose.msra.mxu0 0.0
    %2621 = vmatprep.subr.mxu0 0.0
    %2622 = vmatpush1.xpose.msra.mxu0 0.0
    %2623 = vmatprep.subr.mxu0 0.0
    %2624 = vmatpush1.xpose.msra.mxu0 0.0
    %2625 = vmatprep.subr.mxu0 0.0
    %2626 = vmatpush1.xpose.msra.mxu0 0.0
    %2627 = vmatprep.subr.mxu0 0.0
    %2628 = vmatpush1.xpose.msra.mxu0 0.0
    %2629 = vmatprep.subr.mxu0 0.0
    %2630 = vmatpush1.xpose.msra.mxu0 0.0
    %2631 = vmatprep.mubr.f32.mxu0 0.0
    %2632 = vmatmul.mubr.f32.gmra.mrb[0].mxu0 %v2559
    %v2633 = vpop.f32.mrb[0].mxu0
    %v2634 = vadd.f32 %v2534, %v2633
    %v2635 = vpop.f32.mrb[0].mxu0
    %2636 = vmatprep.mubr.f32.mxu0 0.0
    %2637 = vmatmul.mubr.f32.gmra.mrb[0].mxu0 %v2562
    %v2638 = vpop.f32.mrb[0].mxu0
    %v2639 = vadd.f32 %v2535, %v2638
    %v2640 = vpop.f32.mrb[0].mxu0
    %2641 = vdwg.mxu0
    %v2643 = vsel %vm199, %v2503, 0
    %2645 = vmatprep.subr.mxu0 0.0
    %2646 = vmatpush1.xpose.msra.mxu0 %v2643
    %2647 = vmatprep.subr.mxu0 0.0
    %2648 = vmatpush1.xpose.msra.mxu0 0.0
    %2649 = vmatprep.subr.mxu0 0.0
    %2650 = vmatpush1.xpose.msra.mxu0 0.0
    %2651 = vmatprep.subr.mxu0 0.0
    %2652 = vmatpush1.xpose.msra.mxu0 0.0
    %2653 = vmatprep.subr.mxu0 0.0
    %2654 = vmatpush1.xpose.msra.mxu0 0.0
    %2655 = vmatprep.subr.mxu0 0.0
    %2656 = vmatpush1.xpose.msra.mxu0 0.0
    %2657 = vmatprep.subr.mxu0 0.0
    %2658 = vmatpush1.xpose.msra.mxu0 0.0
    %2659 = vmatprep.subr.mxu0 0.0
    %2660 = vmatpush1.xpose.msra.mxu0 0.0
    %2661 = vmatprep.subr.mxu0 0.0
    %2662 = vmatpush1.xpose.msra.mxu0 0.0
    %2663 = vmatprep.subr.mxu0 0.0
    %2664 = vmatpush1.xpose.msra.mxu0 0.0
    %2665 = vmatprep.subr.mxu0 0.0
    %2666 = vmatpush1.xpose.msra.mxu0 0.0
    %2667 = vmatprep.subr.mxu0 0.0
    %2668 = vmatpush1.xpose.msra.mxu0 0.0
    %2669 = vmatprep.subr.mxu0 0.0
    %2670 = vmatpush1.xpose.msra.mxu0 0.0
    %2671 = vmatprep.subr.mxu0 0.0
    %2672 = vmatpush1.xpose.msra.mxu0 0.0
    %2673 = vmatprep.subr.mxu0 0.0
    %2674 = vmatpush1.xpose.msra.mxu0 0.0
    %2675 = vmatprep.subr.mxu0 0.0
    %2676 = vmatpush1.xpose.msra.mxu0 0.0
    %2677 = vmatprep.subr.mxu0 0.0
    %2678 = vmatpush1.xpose.msra.mxu0 0.0
    %2679 = vmatprep.subr.mxu0 0.0
    %2680 = vmatpush1.xpose.msra.mxu0 0.0
    %2681 = vmatprep.subr.mxu0 0.0
    %2682 = vmatpush1.xpose.msra.mxu0 0.0
    %2683 = vmatprep.subr.mxu0 0.0
    %2684 = vmatpush1.xpose.msra.mxu0 0.0
    %2685 = vmatprep.subr.mxu0 0.0
    %2686 = vmatpush1.xpose.msra.mxu0 0.0
    %2687 = vmatprep.subr.mxu0 0.0
    %2688 = vmatpush1.xpose.msra.mxu0 0.0
    %2689 = vmatprep.subr.mxu0 0.0
    %2690 = vmatpush1.xpose.msra.mxu0 0.0
    %2691 = vmatprep.subr.mxu0 0.0
    %2692 = vmatpush1.xpose.msra.mxu0 0.0
    %2693 = vmatprep.subr.mxu0 0.0
    %2694 = vmatpush1.xpose.msra.mxu0 0.0
    %2695 = vmatprep.subr.mxu0 0.0
    %2696 = vmatpush1.xpose.msra.mxu0 0.0
    %2697 = vmatprep.subr.mxu0 0.0
    %2698 = vmatpush1.xpose.msra.mxu0 0.0
    %2699 = vmatprep.subr.mxu0 0.0
    %2700 = vmatpush1.xpose.msra.mxu0 0.0
    %2701 = vmatprep.subr.mxu0 0.0
    %2702 = vmatpush1.xpose.msra.mxu0 0.0
    %2703 = vmatprep.subr.mxu0 0.0
    %2704 = vmatpush1.xpose.msra.mxu0 0.0
    %2705 = vmatprep.subr.mxu0 0.0
    %2706 = vmatpush1.xpose.msra.mxu0 0.0
    %2707 = vmatprep.subr.mxu0 0.0
    %2708 = vmatpush1.xpose.msra.mxu0 0.0
    %2709 = vmatprep.mubr.f32.mxu0 0.0
    %2710 = vmatmul.mubr.f32.gmra.mrb[0].mxu0 %v2559
    %v2711 = vpop.f32.mrb[0].mxu0
    %v2712 = vadd.f32 %v2536, %v2711
    %v2713 = vpop.f32.mrb[0].mxu0
    %2714 = vmatprep.mubr.f32.mxu0 0.0
    %2715 = vmatmul.mubr.f32.gmra.mrb[0].mxu0 %v2562
    %v2716 = vpop.f32.mrb[0].mxu0
    %v2717 = vadd.f32 %v2537, %v2716
    %v2718 = vpop.f32.mrb[0].mxu0
    %2719 = vdwg.mxu0
    %v2721 = vsel %vm199, %v2504, 0
    %2723 = vmatprep.subr.mxu0 0.0
    %2724 = vmatpush1.xpose.msra.mxu0 %v2721
    %2725 = vmatprep.subr.mxu0 0.0
    %2726 = vmatpush1.xpose.msra.mxu0 0.0
    %2727 = vmatprep.subr.mxu0 0.0
    %2728 = vmatpush1.xpose.msra.mxu0 0.0
    %2729 = vmatprep.subr.mxu0 0.0
    %2730 = vmatpush1.xpose.msra.mxu0 0.0
    %2731 = vmatprep.subr.mxu0 0.0
    %2732 = vmatpush1.xpose.msra.mxu0 0.0
    %2733 = vmatprep.subr.mxu0 0.0
    %2734 = vmatpush1.xpose.msra.mxu0 0.0
    %2735 = vmatprep.subr.mxu0 0.0
    %2736 = vmatpush1.xpose.msra.mxu0 0.0
    %2737 = vmatprep.subr.mxu0 0.0
    %2738 = vmatpush1.xpose.msra.mxu0 0.0
    %2739 = vmatprep.subr.mxu0 0.0
    %2740 = vmatpush1.xpose.msra.mxu0 0.0
    %2741 = vmatprep.subr.mxu0 0.0
    %2742 = vmatpush1.xpose.msra.mxu0 0.0
    %2743 = vmatprep.subr.mxu0 0.0
    %2744 = vmatpush1.xpose.msra.mxu0 0.0
    %2745 = vmatprep.subr.mxu0 0.0
    %2746 = vmatpush1.xpose.msra.mxu0 0.0
    %2747 = vmatprep.subr.mxu0 0.0
    %2748 = vmatpush1.xpose.msra.mxu0 0.0
    %2749 = vmatprep.subr.mxu0 0.0
    %2750 = vmatpush1.xpose.msra.mxu0 0.0
    %2751 = vmatprep.subr.mxu0 0.0
    %2752 = vmatpush1.xpose.msra.mxu0 0.0
    %2753 = vmatprep.subr.mxu0 0.0
    %2754 = vmatpush1.xpose.msra.mxu0 0.0
    %2755 = vmatprep.subr.mxu0 0.0
    %2756 = vmatpush1.xpose.msra.mxu0 0.0
    %2757 = vmatprep.subr.mxu0 0.0
    %2758 = vmatpush1.xpose.msra.mxu0 0.0
    %2759 = vmatprep.subr.mxu0 0.0
    %2760 = vmatpush1.xpose.msra.mxu0 0.0
    %2761 = vmatprep.subr.mxu0 0.0
    %2762 = vmatpush1.xpose.msra.mxu0 0.0
    %2763 = vmatprep.subr.mxu0 0.0
    %2764 = vmatpush1.xpose.msra.mxu0 0.0
    %2765 = vmatprep.subr.mxu0 0.0
    %2766 = vmatpush1.xpose.msra.mxu0 0.0
    %2767 = vmatprep.subr.mxu0 0.0
    %2768 = vmatpush1.xpose.msra.mxu0 0.0
    %2769 = vmatprep.subr.mxu0 0.0
    %2770 = vmatpush1.xpose.msra.mxu0 0.0
    %2771 = vmatprep.subr.mxu0 0.0
    %2772 = vmatpush1.xpose.msra.mxu0 0.0
    %2773 = vmatprep.subr.mxu0 0.0
    %2774 = vmatpush1.xpose.msra.mxu0 0.0
    %2775 = vmatprep.subr.mxu0 0.0
    %2776 = vmatpush1.xpose.msra.mxu0 0.0
    %2777 = vmatprep.subr.mxu0 0.0
    %2778 = vmatpush1.xpose.msra.mxu0 0.0
    %2779 = vmatprep.subr.mxu0 0.0
    %2780 = vmatpush1.xpose.msra.mxu0 0.0
    %2781 = vmatprep.subr.mxu0 0.0
    %2782 = vmatpush1.xpose.msra.mxu0 0.0
    %2783 = vmatprep.subr.mxu0 0.0
    %2784 = vmatpush1.xpose.msra.mxu0 0.0
    %2785 = vmatprep.subr.mxu0 0.0
    %2786 = vmatpush1.xpose.msra.mxu0 0.0
    %2787 = vmatprep.mubr.f32.mxu0 0.0
    %2788 = vmatmul.mubr.f32.gmra.mrb[0].mxu0 %v2559
    %v2789 = vpop.f32.mrb[0].mxu0
    %v2790 = vadd.f32 %v2538, %v2789
    %v2791 = vpop.f32.mrb[0].mxu0
    %2792 = vmatprep.mubr.f32.mxu0 0.0
    %2793 = vmatmul.mubr.f32.gmra.mrb[0].mxu0 %v2562
    %v2794 = vpop.f32.mrb[0].mxu0
    %v2795 = vadd.f32 %v2539, %v2794
    %v2796 = vpop.f32.mrb[0].mxu0
    %2797 = vdwg.mxu0
    %v2799 = vsel %vm199, %v2505, 0
    %2801 = vmatprep.subr.mxu0 0.0
    %2802 = vmatpush1.xpose.msra.mxu0 %v2799
    %2803 = vmatprep.subr.mxu0 0.0
    %2804 = vmatpush1.xpose.msra.mxu0 0.0
    %2805 = vmatprep.subr.mxu0 0.0
    %2806 = vmatpush1.xpose.msra.mxu0 0.0
    %2807 = vmatprep.subr.mxu0 0.0
    %2808 = vmatpush1.xpose.msra.mxu0 0.0
    %2809 = vmatprep.subr.mxu0 0.0
    %2810 = vmatpush1.xpose.msra.mxu0 0.0
    %2811 = vmatprep.subr.mxu0 0.0
    %2812 = vmatpush1.xpose.msra.mxu0 0.0
    %2813 = vmatprep.subr.mxu0 0.0
    %2814 = vmatpush1.xpose.msra.mxu0 0.0
    %2815 = vmatprep.subr.mxu0 0.0
    %2816 = vmatpush1.xpose.msra.mxu0 0.0
    %2817 = vmatprep.subr.mxu0 0.0
    %2818 = vmatpush1.xpose.msra.mxu0 0.0
    %2819 = vmatprep.subr.mxu0 0.0
    %2820 = vmatpush1.xpose.msra.mxu0 0.0
    %2821 = vmatprep.subr.mxu0 0.0
    %2822 = vmatpush1.xpose.msra.mxu0 0.0
    %2823 = vmatprep.subr.mxu0 0.0
    %2824 = vmatpush1.xpose.msra.mxu0 0.0
    %2825 = vmatprep.subr.mxu0 0.0
    %2826 = vmatpush1.xpose.msra.mxu0 0.0
    %2827 = vmatprep.subr.mxu0 0.0
    %2828 = vmatpush1.xpose.msra.mxu0 0.0
    %2829 = vmatprep.subr.mxu0 0.0
    %2830 = vmatpush1.xpose.msra.mxu0 0.0
    %2831 = vmatprep.subr.mxu0 0.0
    %2832 = vmatpush1.xpose.msra.mxu0 0.0
    %2833 = vmatprep.subr.mxu0 0.0
    %2834 = vmatpush1.xpose.msra.mxu0 0.0
    %2835 = vmatprep.subr.mxu0 0.0
    %2836 = vmatpush1.xpose.msra.mxu0 0.0
    %2837 = vmatprep.subr.mxu0 0.0
    %2838 = vmatpush1.xpose.msra.mxu0 0.0
    %2839 = vmatprep.subr.mxu0 0.0
    %2840 = vmatpush1.xpose.msra.mxu0 0.0
    %2841 = vmatprep.subr.mxu0 0.0
    %2842 = vmatpush1.xpose.msra.mxu0 0.0
    %2843 = vmatprep.subr.mxu0 0.0
    %2844 = vmatpush1.xpose.msra.mxu0 0.0
    %2845 = vmatprep.subr.mxu0 0.0
    %2846 = vmatpush1.xpose.msra.mxu0 0.0
    %2847 = vmatprep.subr.mxu0 0.0
    %2848 = vmatpush1.xpose.msra.mxu0 0.0
    %2849 = vmatprep.subr.mxu0 0.0
    %2850 = vmatpush1.xpose.msra.mxu0 0.0
    %2851 = vmatprep.subr.mxu0 0.0
    %2852 = vmatpush1.xpose.msra.mxu0 0.0
    %2853 = vmatprep.subr.mxu0 0.0
    %2854 = vmatpush1.xpose.msra.mxu0 0.0
    %2855 = vmatprep.subr.mxu0 0.0
    %2856 = vmatpush1.xpose.msra.mxu0 0.0
    %2857 = vmatprep.subr.mxu0 0.0
    %2858 = vmatpush1.xpose.msra.mxu0 0.0
    %2859 = vmatprep.subr.mxu0 0.0
    %2860 = vmatpush1.xpose.msra.mxu0 0.0
    %2861 = vmatprep.subr.mxu0 0.0
    %2862 = vmatpush1.xpose.msra.mxu0 0.0
    %2863 = vmatprep.subr.mxu0 0.0
    %2864 = vmatpush1.xpose.msra.mxu0 0.0
    %2865 = vmatprep.mubr.f32.mxu0 0.0
    %2866 = vmatmul.mubr.f32.gmra.mrb[0].mxu0 %v2559
    %v2867 = vpop.f32.mrb[0].mxu0
    %v2868 = vadd.f32 %v2540, %v2867
    %v2869 = vpop.f32.mrb[0].mxu0
    %2870 = vmatprep.mubr.f32.mxu0 0.0
    %2871 = vmatmul.mubr.f32.gmra.mrb[0].mxu0 %v2562
    %v2872 = vpop.f32.mrb[0].mxu0
    %v2873 = vadd.f32 %v2541, %v2872
    %v2874 = vpop.f32.mrb[0].mxu0
    %2875 = vdwg.mxu0
    %v2877 = vsel %vm199, %v2506, 0
    %2879 = vmatprep.subr.mxu0 0.0
    %2880 = vmatpush1.xpose.msra.mxu0 %v2877
    %2881 = vmatprep.subr.mxu0 0.0
    %2882 = vmatpush1.xpose.msra.mxu0 0.0
    %2883 = vmatprep.subr.mxu0 0.0
    %2884 = vmatpush1.xpose.msra.mxu0 0.0
    %2885 = vmatprep.subr.mxu0 0.0
    %2886 = vmatpush1.xpose.msra.mxu0 0.0
    %2887 = vmatprep.subr.mxu0 0.0
    %2888 = vmatpush1.xpose.msra.mxu0 0.0
    %2889 = vmatprep.subr.mxu0 0.0
    %2890 = vmatpush1.xpose.msra.mxu0 0.0
    %2891 = vmatprep.subr.mxu0 0.0
    %2892 = vmatpush1.xpose.msra.mxu0 0.0
    %2893 = vmatprep.subr.mxu0 0.0
    %2894 = vmatpush1.xpose.msra.mxu0 0.0
    %2895 = vmatprep.subr.mxu0 0.0
    %2896 = vmatpush1.xpose.msra.mxu0 0.0
    %2897 = vmatprep.subr.mxu0 0.0
    %2898 = vmatpush1.xpose.msra.mxu0 0.0
    %2899 = vmatprep.subr.mxu0 0.0
    %2900 = vmatpush1.xpose.msra.mxu0 0.0
    %2901 = vmatprep.subr.mxu0 0.0
    %2902 = vmatpush1.xpose.msra.mxu0 0.0
    %2903 = vmatprep.subr.mxu0 0.0
    %2904 = vmatpush1.xpose.msra.mxu0 0.0
    %2905 = vmatprep.subr.mxu0 0.0
    %2906 = vmatpush1.xpose.msra.mxu0 0.0
    %2907 = vmatprep.subr.mxu0 0.0
    %2908 = vmatpush1.xpose.msra.mxu0 0.0
    %2909 = vmatprep.subr.mxu0 0.0
    %2910 = vmatpush1.xpose.msra.mxu0 0.0
    %2911 = vmatprep.subr.mxu0 0.0
    %2912 = vmatpush1.xpose.msra.mxu0 0.0
    %2913 = vmatprep.subr.mxu0 0.0
    %2914 = vmatpush1.xpose.msra.mxu0 0.0
    %2915 = vmatprep.subr.mxu0 0.0
    %2916 = vmatpush1.xpose.msra.mxu0 0.0
    %2917 = vmatprep.subr.mxu0 0.0
    %2918 = vmatpush1.xpose.msra.mxu0 0.0
    %2919 = vmatprep.subr.mxu0 0.0
    %2920 = vmatpush1.xpose.msra.mxu0 0.0
    %2921 = vmatprep.subr.mxu0 0.0
    %2922 = vmatpush1.xpose.msra.mxu0 0.0
    %2923 = vmatprep.subr.mxu0 0.0
    %2924 = vmatpush1.xpose.msra.mxu0 0.0
    %2925 = vmatprep.subr.mxu0 0.0
    %2926 = vmatpush1.xpose.msra.mxu0 0.0
    %2927 = vmatprep.subr.mxu0 0.0
    %2928 = vmatpush1.xpose.msra.mxu0 0.0
    %2929 = vmatprep.subr.mxu0 0.0
    %2930 = vmatpush1.xpose.msra.mxu0 0.0
    %2931 = vmatprep.subr.mxu0 0.0
    %2932 = vmatpush1.xpose.msra.mxu0 0.0
    %2933 = vmatprep.subr.mxu0 0.0
    %2934 = vmatpush1.xpose.msra.mxu0 0.0
    %2935 = vmatprep.subr.mxu0 0.0
    %2936 = vmatpush1.xpose.msra.mxu0 0.0
    %2937 = vmatprep.subr.mxu0 0.0
    %2938 = vmatpush1.xpose.msra.mxu0 0.0
    %2939 = vmatprep.subr.mxu0 0.0
    %2940 = vmatpush1.xpose.msra.mxu0 0.0
    %2941 = vmatprep.subr.mxu0 0.0
    %2942 = vmatpush1.xpose.msra.mxu0 0.0
    %2943 = vmatprep.mubr.f32.mxu0 0.0
    %2944 = vmatmul.mubr.f32.gmra.mrb[0].mxu0 %v2559
    %v2945 = vpop.f32.mrb[0].mxu0
    %v2946 = vadd.f32 %v2542, %v2945
    %v2947 = vpop.f32.mrb[0].mxu0
    %2948 = vmatprep.mubr.f32.mxu0 0.0
    %2949 = vmatmul.mubr.f32.gmra.mrb[0].mxu0 %v2562
    %v2950 = vpop.f32.mrb[0].mxu0
    %v2951 = vadd.f32 %v2543, %v2950
    %v2952 = vpop.f32.mrb[0].mxu0
    %2953 = vdwg.mxu0
    %v2955 = vsel %vm199, %v2507, 0
    %2957 = vmatprep.subr.mxu0 0.0
    %2958 = vmatpush1.xpose.msra.mxu0 %v2955
    %2959 = vmatprep.subr.mxu0 0.0
    %2960 = vmatpush1.xpose.msra.mxu0 0.0
    %2961 = vmatprep.subr.mxu0 0.0
    %2962 = vmatpush1.xpose.msra.mxu0 0.0
    %2963 = vmatprep.subr.mxu0 0.0
    %2964 = vmatpush1.xpose.msra.mxu0 0.0
    %2965 = vmatprep.subr.mxu0 0.0
    %2966 = vmatpush1.xpose.msra.mxu0 0.0
    %2967 = vmatprep.subr.mxu0 0.0
    %2968 = vmatpush1.xpose.msra.mxu0 0.0
    %2969 = vmatprep.subr.mxu0 0.0
    %2970 = vmatpush1.xpose.msra.mxu0 0.0
    %2971 = vmatprep.subr.mxu0 0.0
    %2972 = vmatpush1.xpose.msra.mxu0 0.0
    %2973 = vmatprep.subr.mxu0 0.0
    %2974 = vmatpush1.xpose.msra.mxu0 0.0
    %2975 = vmatprep.subr.mxu0 0.0
    %2976 = vmatpush1.xpose.msra.mxu0 0.0
    %2977 = vmatprep.subr.mxu0 0.0
    %2978 = vmatpush1.xpose.msra.mxu0 0.0
    %2979 = vmatprep.subr.mxu0 0.0
    %2980 = vmatpush1.xpose.msra.mxu0 0.0
    %2981 = vmatprep.subr.mxu0 0.0
    %2982 = vmatpush1.xpose.msra.mxu0 0.0
    %2983 = vmatprep.subr.mxu0 0.0
    %2984 = vmatpush1.xpose.msra.mxu0 0.0
    %2985 = vmatprep.subr.mxu0 0.0
    %2986 = vmatpush1.xpose.msra.mxu0 0.0
    %2987 = vmatprep.subr.mxu0 0.0
    %2988 = vmatpush1.xpose.msra.mxu0 0.0
    %2989 = vmatprep.subr.mxu0 0.0
    %2990 = vmatpush1.xpose.msra.mxu0 0.0
    %2991 = vmatprep.subr.mxu0 0.0
    %2992 = vmatpush1.xpose.msra.mxu0 0.0
    %2993 = vmatprep.subr.mxu0 0.0
    %2994 = vmatpush1.xpose.msra.mxu0 0.0
    %2995 = vmatprep.subr.mxu0 0.0
    %2996 = vmatpush1.xpose.msra.mxu0 0.0
    %2997 = vmatprep.subr.mxu0 0.0
    %2998 = vmatpush1.xpose.msra.mxu0 0.0
    %2999 = vmatprep.subr.mxu0 0.0
    %3000 = vmatpush1.xpose.msra.mxu0 0.0
    %3001 = vmatprep.subr.mxu0 0.0
    %3002 = vmatpush1.xpose.msra.mxu0 0.0
    %3003 = vmatprep.subr.mxu0 0.0
    %3004 = vmatpush1.xpose.msra.mxu0 0.0
    %3005 = vmatprep.subr.mxu0 0.0
    %3006 = vmatpush1.xpose.msra.mxu0 0.0
    %3007 = vmatprep.subr.mxu0 0.0
    %3008 = vmatpush1.xpose.msra.mxu0 0.0
    %3009 = vmatprep.subr.mxu0 0.0
    %3010 = vmatpush1.xpose.msra.mxu0 0.0
    %3011 = vmatprep.subr.mxu0 0.0
    %3012 = vmatpush1.xpose.msra.mxu0 0.0
    %3013 = vmatprep.subr.mxu0 0.0
    %3014 = vmatpush1.xpose.msra.mxu0 0.0
    %3015 = vmatprep.subr.mxu0 0.0
    %3016 = vmatpush1.xpose.msra.mxu0 0.0
    %3017 = vmatprep.subr.mxu0 0.0
    %3018 = vmatpush1.xpose.msra.mxu0 0.0
    %3019 = vmatprep.subr.mxu0 0.0
    %3020 = vmatpush1.xpose.msra.mxu0 0.0
    %3021 = vmatprep.mubr.f32.mxu0 0.0
    %3022 = vmatmul.mubr.f32.gmra.mrb[0].mxu0 %v2559
    %v3023 = vpop.f32.mrb[0].mxu0
    %v3024 = vadd.f32 %v2544, %v3023
    %v3025 = vpop.f32.mrb[0].mxu0
    %3026 = vmatprep.mubr.f32.mxu0 0.0
    %3027 = vmatmul.mubr.f32.gmra.mrb[0].mxu0 %v2562
    %v3028 = vpop.f32.mrb[0].mxu0
    %v3029 = vadd.f32 %v2545, %v3028
    %v3030 = vpop.f32.mrb[0].mxu0
    %3031 = vdwg.mxu0
    %v3033 = vsel %vm199, %v2508, 0
    %3035 = vmatprep.subr.mxu0 0.0
    %3036 = vmatpush1.xpose.msra.mxu0 %v3033
    %3037 = vmatprep.subr.mxu0 0.0
    %3038 = vmatpush1.xpose.msra.mxu0 0.0
    %3039 = vmatprep.subr.mxu0 0.0
    %3040 = vmatpush1.xpose.msra.mxu0 0.0
    %3041 = vmatprep.subr.mxu0 0.0
    %3042 = vmatpush1.xpose.msra.mxu0 0.0
    %3043 = vmatprep.subr.mxu0 0.0
    %3044 = vmatpush1.xpose.msra.mxu0 0.0
    %3045 = vmatprep.subr.mxu0 0.0
    %3046 = vmatpush1.xpose.msra.mxu0 0.0
    %3047 = vmatprep.subr.mxu0 0.0
    %3048 = vmatpush1.xpose.msra.mxu0 0.0
    %3049 = vmatprep.subr.mxu0 0.0
    %3050 = vmatpush1.xpose.msra.mxu0 0.0
    %3051 = vmatprep.subr.mxu0 0.0
    %3052 = vmatpush1.xpose.msra.mxu0 0.0
    %3053 = vmatprep.subr.mxu0 0.0
    %3054 = vmatpush1.xpose.msra.mxu0 0.0
    %3055 = vmatprep.subr.mxu0 0.0
    %3056 = vmatpush1.xpose.msra.mxu0 0.0
    %3057 = vmatprep.subr.mxu0 0.0
    %3058 = vmatpush1.xpose.msra.mxu0 0.0
    %3059 = vmatprep.subr.mxu0 0.0
    %3060 = vmatpush1.xpose.msra.mxu0 0.0
    %3061 = vmatprep.subr.mxu0 0.0
    %3062 = vmatpush1.xpose.msra.mxu0 0.0
    %3063 = vmatprep.subr.mxu0 0.0
    %3064 = vmatpush1.xpose.msra.mxu0 0.0
    %3065 = vmatprep.subr.mxu0 0.0
    %3066 = vmatpush1.xpose.msra.mxu0 0.0
    %3067 = vmatprep.subr.mxu0 0.0
    %3068 = vmatpush1.xpose.msra.mxu0 0.0
    %3069 = vmatprep.subr.mxu0 0.0
    %3070 = vmatpush1.xpose.msra.mxu0 0.0
    %3071 = vmatprep.subr.mxu0 0.0
    %3072 = vmatpush1.xpose.msra.mxu0 0.0
    %3073 = vmatprep.subr.mxu0 0.0
    %3074 = vmatpush1.xpose.msra.mxu0 0.0
    %3075 = vmatprep.subr.mxu0 0.0
    %3076 = vmatpush1.xpose.msra.mxu0 0.0
    %3077 = vmatprep.subr.mxu0 0.0
    %3078 = vmatpush1.xpose.msra.mxu0 0.0
    %3079 = vmatprep.subr.mxu0 0.0
    %3080 = vmatpush1.xpose.msra.mxu0 0.0
    %3081 = vmatprep.subr.mxu0 0.0
    %3082 = vmatpush1.xpose.msra.mxu0 0.0
    %3083 = vmatprep.subr.mxu0 0.0
    %3084 = vmatpush1.xpose.msra.mxu0 0.0
    %3085 = vmatprep.subr.mxu0 0.0
    %3086 = vmatpush1.xpose.msra.mxu0 0.0
    %3087 = vmatprep.subr.mxu0 0.0
    %3088 = vmatpush1.xpose.msra.mxu0 0.0
    %3089 = vmatprep.subr.mxu0 0.0
    %3090 = vmatpush1.xpose.msra.mxu0 0.0
    %3091 = vmatprep.subr.mxu0 0.0
    %3092 = vmatpush1.xpose.msra.mxu0 0.0
    %3093 = vmatprep.subr.mxu0 0.0
    %3094 = vmatpush1.xpose.msra.mxu0 0.0
    %3095 = vmatprep.subr.mxu0 0.0
    %3096 = vmatpush1.xpose.msra.mxu0 0.0
    %3097 = vmatprep.subr.mxu0 0.0
    %3098 = vmatpush1.xpose.msra.mxu0 0.0
    %3099 = vmatprep.mubr.f32.mxu0 0.0
    %3100 = vmatmul.mubr.f32.gmra.mrb[0].mxu0 %v2559
    %v3101 = vpop.f32.mrb[0].mxu0
    %v3102 = vadd.f32 %v2546, %v3101
    %v3103 = vpop.f32.mrb[0].mxu0
    %3104 = vmatprep.mubr.f32.mxu0 0.0
    %3105 = vmatmul.mubr.f32.gmra.mrb[0].mxu0 %v2562
    %v3106 = vpop.f32.mrb[0].mxu0
    %v3107 = vadd.f32 %v2547, %v3106
    %v3108 = vpop.f32.mrb[0].mxu0
    %3109 = vdwg.mxu0
    %v3111 = vsel %vm199, %v2509, 0
    %3113 = vmatprep.subr.mxu0 0.0
    %3114 = vmatpush1.xpose.msra.mxu0 %v3111
    %3115 = vmatprep.subr.mxu0 0.0
    %3116 = vmatpush1.xpose.msra.mxu0 0.0
    %3117 = vmatprep.subr.mxu0 0.0
    %3118 = vmatpush1.xpose.msra.mxu0 0.0
    %3119 = vmatprep.subr.mxu0 0.0
    %3120 = vmatpush1.xpose.msra.mxu0 0.0
    %3121 = vmatprep.subr.mxu0 0.0
    %3122 = vmatpush1.xpose.msra.mxu0 0.0
    %3123 = vmatprep.subr.mxu0 0.0
    %3124 = vmatpush1.xpose.msra.mxu0 0.0
    %3125 = vmatprep.subr.mxu0 0.0
    %3126 = vmatpush1.xpose.msra.mxu0 0.0
    %3127 = vmatprep.subr.mxu0 0.0
    %3128 = vmatpush1.xpose.msra.mxu0 0.0
    %3129 = vmatprep.subr.mxu0 0.0
    %3130 = vmatpush1.xpose.msra.mxu0 0.0
    %3131 = vmatprep.subr.mxu0 0.0
    %3132 = vmatpush1.xpose.msra.mxu0 0.0
    %3133 = vmatprep.subr.mxu0 0.0
    %3134 = vmatpush1.xpose.msra.mxu0 0.0
    %3135 = vmatprep.subr.mxu0 0.0
    %3136 = vmatpush1.xpose.msra.mxu0 0.0
    %3137 = vmatprep.subr.mxu0 0.0
    %3138 = vmatpush1.xpose.msra.mxu0 0.0
    %3139 = vmatprep.subr.mxu0 0.0
    %3140 = vmatpush1.xpose.msra.mxu0 0.0
    %3141 = vmatprep.subr.mxu0 0.0
    %3142 = vmatpush1.xpose.msra.mxu0 0.0
    %3143 = vmatprep.subr.mxu0 0.0
    %3144 = vmatpush1.xpose.msra.mxu0 0.0
    %3145 = vmatprep.subr.mxu0 0.0
    %3146 = vmatpush1.xpose.msra.mxu0 0.0
    %3147 = vmatprep.subr.mxu0 0.0
    %3148 = vmatpush1.xpose.msra.mxu0 0.0
    %3149 = vmatprep.subr.mxu0 0.0
    %3150 = vmatpush1.xpose.msra.mxu0 0.0
    %3151 = vmatprep.subr.mxu0 0.0
    %3152 = vmatpush1.xpose.msra.mxu0 0.0
    %3153 = vmatprep.subr.mxu0 0.0
    %3154 = vmatpush1.xpose.msra.mxu0 0.0
    %3155 = vmatprep.subr.mxu0 0.0
    %3156 = vmatpush1.xpose.msra.mxu0 0.0
    %3157 = vmatprep.subr.mxu0 0.0
    %3158 = vmatpush1.xpose.msra.mxu0 0.0
    %3159 = vmatprep.subr.mxu0 0.0
    %3160 = vmatpush1.xpose.msra.mxu0 0.0
    %3161 = vmatprep.subr.mxu0 0.0
    %3162 = vmatpush1.xpose.msra.mxu0 0.0
    %3163 = vmatprep.subr.mxu0 0.0
    %3164 = vmatpush1.xpose.msra.mxu0 0.0
    %3165 = vmatprep.subr.mxu0 0.0
    %3166 = vmatpush1.xpose.msra.mxu0 0.0
    %3167 = vmatprep.subr.mxu0 0.0
    %3168 = vmatpush1.xpose.msra.mxu0 0.0
    %3169 = vmatprep.subr.mxu0 0.0
    %3170 = vmatpush1.xpose.msra.mxu0 0.0
    %3171 = vmatprep.subr.mxu0 0.0
    %3172 = vmatpush1.xpose.msra.mxu0 0.0
    %3173 = vmatprep.subr.mxu0 0.0
    %3174 = vmatpush1.xpose.msra.mxu0 0.0
    %3175 = vmatprep.subr.mxu0 0.0
    %3176 = vmatpush1.xpose.msra.mxu0 0.0
    %3177 = vmatprep.mubr.f32.mxu0 0.0
    %3178 = vmatmul.mubr.f32.gmra.mrb[0].mxu0 %v2559
    %v3179 = vpop.f32.mrb[0].mxu0
    %v3180 = vadd.f32 %v2548, %v3179
    %v3181 = vpop.f32.mrb[0].mxu0
    %3182 = vmatprep.mubr.f32.mxu0 0.0
    %3183 = vmatmul.mubr.f32.gmra.mrb[0].mxu0 %v2562
    %v3184 = vpop.f32.mrb[0].mxu0
    %v3185 = vadd.f32 %v2549, %v3184
    %v3186 = vpop.f32.mrb[0].mxu0
    %3187 = vdwg.mxu0
    %v3189 = vsel %vm199, %v2510, 0
    %3191 = vmatprep.subr.mxu0 0.0
    %3192 = vmatpush1.xpose.msra.mxu0 %v3189
    %3193 = vmatprep.subr.mxu0 0.0
    %3194 = vmatpush1.xpose.msra.mxu0 0.0
    %3195 = vmatprep.subr.mxu0 0.0
    %3196 = vmatpush1.xpose.msra.mxu0 0.0
    %3197 = vmatprep.subr.mxu0 0.0
    %3198 = vmatpush1.xpose.msra.mxu0 0.0
    %3199 = vmatprep.subr.mxu0 0.0
    %3200 = vmatpush1.xpose.msra.mxu0 0.0
    %3201 = vmatprep.subr.mxu0 0.0
    %3202 = vmatpush1.xpose.msra.mxu0 0.0
    %3203 = vmatprep.subr.mxu0 0.0
    %3204 = vmatpush1.xpose.msra.mxu0 0.0
    %3205 = vmatprep.subr.mxu0 0.0
    %3206 = vmatpush1.xpose.msra.mxu0 0.0
    %3207 = vmatprep.subr.mxu0 0.0
    %3208 = vmatpush1.xpose.msra.mxu0 0.0
    %3209 = vmatprep.subr.mxu0 0.0
    %3210 = vmatpush1.xpose.msra.mxu0 0.0
    %3211 = vmatprep.subr.mxu0 0.0
    %3212 = vmatpush1.xpose.msra.mxu0 0.0
    %3213 = vmatprep.subr.mxu0 0.0
    %3214 = vmatpush1.xpose.msra.mxu0 0.0
    %3215 = vmatprep.subr.mxu0 0.0
    %3216 = vmatpush1.xpose.msra.mxu0 0.0
    %3217 = vmatprep.subr.mxu0 0.0
    %3218 = vmatpush1.xpose.msra.mxu0 0.0
    %3219 = vmatprep.subr.mxu0 0.0
    %3220 = vmatpush1.xpose.msra.mxu0 0.0
    %3221 = vmatprep.subr.mxu0 0.0
    %3222 = vmatpush1.xpose.msra.mxu0 0.0
    %3223 = vmatprep.subr.mxu0 0.0
    %3224 = vmatpush1.xpose.msra.mxu0 0.0
    %3225 = vmatprep.subr.mxu0 0.0
    %3226 = vmatpush1.xpose.msra.mxu0 0.0
    %3227 = vmatprep.subr.mxu0 0.0
    %3228 = vmatpush1.xpose.msra.mxu0 0.0
    %3229 = vmatprep.subr.mxu0 0.0
    %3230 = vmatpush1.xpose.msra.mxu0 0.0
    %3231 = vmatprep.subr.mxu0 0.0
    %3232 = vmatpush1.xpose.msra.mxu0 0.0
    %3233 = vmatprep.subr.mxu0 0.0
    %3234 = vmatpush1.xpose.msra.mxu0 0.0
    %3235 = vmatprep.subr.mxu0 0.0
    %3236 = vmatpush1.xpose.msra.mxu0 0.0
    %3237 = vmatprep.subr.mxu0 0.0
    %3238 = vmatpush1.xpose.msra.mxu0 0.0
    %3239 = vmatprep.subr.mxu0 0.0
    %3240 = vmatpush1.xpose.msra.mxu0 0.0
    %3241 = vmatprep.subr.mxu0 0.0
    %3242 = vmatpush1.xpose.msra.mxu0 0.0
    %3243 = vmatprep.subr.mxu0 0.0
    %3244 = vmatpush1.xpose.msra.mxu0 0.0
    %3245 = vmatprep.subr.mxu0 0.0
    %3246 = vmatpush1.xpose.msra.mxu0 0.0
    %3247 = vmatprep.subr.mxu0 0.0
    %3248 = vmatpush1.xpose.msra.mxu0 0.0
    %3249 = vmatprep.subr.mxu0 0.0
    %3250 = vmatpush1.xpose.msra.mxu0 0.0
    %3251 = vmatprep.subr.mxu0 0.0
    %3252 = vmatpush1.xpose.msra.mxu0 0.0
    %3253 = vmatprep.subr.mxu0 0.0
    %3254 = vmatpush1.xpose.msra.mxu0 0.0
    %3255 = vmatprep.mubr.f32.mxu0 0.0
    %3256 = vmatmul.mubr.f32.gmra.mrb[0].mxu0 %v2559
    %v3257 = vpop.f32.mrb[0].mxu0
    %v3258 = vadd.f32 %v2550, %v3257
    %v3259 = vpop.f32.mrb[0].mxu0
    %3260 = vmatprep.mubr.f32.mxu0 0.0
    %3261 = vmatmul.mubr.f32.gmra.mrb[0].mxu0 %v2562
    %v3262 = vpop.f32.mrb[0].mxu0
    %v3263 = vadd.f32 %v2551, %v3262
    %v3264 = vpop.f32.mrb[0].mxu0
    %3265 = vdwg.mxu0
    %v3267 = vsel %vm199, %v2511, 0
    %3269 = vmatprep.subr.mxu0 0.0
    %3270 = vmatpush1.xpose.msra.mxu0 %v3267
    %3271 = vmatprep.subr.mxu0 0.0
    %3272 = vmatpush1.xpose.msra.mxu0 0.0
    %3273 = vmatprep.subr.mxu0 0.0
    %3274 = vmatpush1.xpose.msra.mxu0 0.0
    %3275 = vmatprep.subr.mxu0 0.0
    %3276 = vmatpush1.xpose.msra.mxu0 0.0
    %3277 = vmatprep.subr.mxu0 0.0
    %3278 = vmatpush1.xpose.msra.mxu0 0.0
    %3279 = vmatprep.subr.mxu0 0.0
    %3280 = vmatpush1.xpose.msra.mxu0 0.0
    %3281 = vmatprep.subr.mxu0 0.0
    %3282 = vmatpush1.xpose.msra.mxu0 0.0
    %3283 = vmatprep.subr.mxu0 0.0
    %3284 = vmatpush1.xpose.msra.mxu0 0.0
    %3285 = vmatprep.subr.mxu0 0.0
    %3286 = vmatpush1.xpose.msra.mxu0 0.0
    %3287 = vmatprep.subr.mxu0 0.0
    %3288 = vmatpush1.xpose.msra.mxu0 0.0
    %3289 = vmatprep.subr.mxu0 0.0
    %3290 = vmatpush1.xpose.msra.mxu0 0.0
    %3291 = vmatprep.subr.mxu0 0.0
    %3292 = vmatpush1.xpose.msra.mxu0 0.0
    %3293 = vmatprep.subr.mxu0 0.0
    %3294 = vmatpush1.xpose.msra.mxu0 0.0
    %3295 = vmatprep.subr.mxu0 0.0
    %3296 = vmatpush1.xpose.msra.mxu0 0.0
    %3297 = vmatprep.subr.mxu0 0.0
    %3298 = vmatpush1.xpose.msra.mxu0 0.0
    %3299 = vmatprep.subr.mxu0 0.0
    %3300 = vmatpush1.xpose.msra.mxu0 0.0
    %3301 = vmatprep.subr.mxu0 0.0
    %3302 = vmatpush1.xpose.msra.mxu0 0.0
    %3303 = vmatprep.subr.mxu0 0.0
    %3304 = vmatpush1.xpose.msra.mxu0 0.0
    %3305 = vmatprep.subr.mxu0 0.0
    %3306 = vmatpush1.xpose.msra.mxu0 0.0
    %3307 = vmatprep.subr.mxu0 0.0
    %3308 = vmatpush1.xpose.msra.mxu0 0.0
    %3309 = vmatprep.subr.mxu0 0.0
    %3310 = vmatpush1.xpose.msra.mxu0 0.0
    %3311 = vmatprep.subr.mxu0 0.0
    %3312 = vmatpush1.xpose.msra.mxu0 0.0
    %3313 = vmatprep.subr.mxu0 0.0
    %3314 = vmatpush1.xpose.msra.mxu0 0.0
    %3315 = vmatprep.subr.mxu0 0.0
    %3316 = vmatpush1.xpose.msra.mxu0 0.0
    %3317 = vmatprep.subr.mxu0 0.0
    %3318 = vmatpush1.xpose.msra.mxu0 0.0
    %3319 = vmatprep.subr.mxu0 0.0
    %3320 = vmatpush1.xpose.msra.mxu0 0.0
    %3321 = vmatprep.subr.mxu0 0.0
    %3322 = vmatpush1.xpose.msra.mxu0 0.0
    %3323 = vmatprep.subr.mxu0 0.0
    %3324 = vmatpush1.xpose.msra.mxu0 0.0
    %3325 = vmatprep.subr.mxu0 0.0
    %3326 = vmatpush1.xpose.msra.mxu0 0.0
    %3327 = vmatprep.subr.mxu0 0.0
    %3328 = vmatpush1.xpose.msra.mxu0 0.0
    %3329 = vmatprep.subr.mxu0 0.0
    %3330 = vmatpush1.xpose.msra.mxu0 0.0
    %3331 = vmatprep.subr.mxu0 0.0
    %3332 = vmatpush1.xpose.msra.mxu0 0.0
    %3333 = vmatprep.mubr.f32.mxu0 0.0
    %3334 = vmatmul.mubr.f32.gmra.mrb[0].mxu0 %v2559
    %v3335 = vpop.f32.mrb[0].mxu0
    %v3336 = vadd.f32 %v2552, %v3335
    %v3337 = vpop.f32.mrb[0].mxu0
    %3338 = vmatprep.mubr.f32.mxu0 0.0
    %3339 = vmatmul.mubr.f32.gmra.mrb[0].mxu0 %v2562
    %v3340 = vpop.f32.mrb[0].mxu0
    %v3341 = vadd.f32 %v2553, %v3340
    %v3342 = vpop.f32.mrb[0].mxu0
    %3343 = vdwg.mxu0
    %v3345 = vsel %vm199, %v2512, 0
    %3347 = vmatprep.subr.mxu0 0.0
    %3348 = vmatpush1.xpose.msra.mxu0 %v3345
    %3349 = vmatprep.subr.mxu0 0.0
    %3350 = vmatpush1.xpose.msra.mxu0 0.0
    %3351 = vmatprep.subr.mxu0 0.0
    %3352 = vmatpush1.xpose.msra.mxu0 0.0
    %3353 = vmatprep.subr.mxu0 0.0
    %3354 = vmatpush1.xpose.msra.mxu0 0.0
    %3355 = vmatprep.subr.mxu0 0.0
    %3356 = vmatpush1.xpose.msra.mxu0 0.0
    %3357 = vmatprep.subr.mxu0 0.0
    %3358 = vmatpush1.xpose.msra.mxu0 0.0
    %3359 = vmatprep.subr.mxu0 0.0
    %3360 = vmatpush1.xpose.msra.mxu0 0.0
    %3361 = vmatprep.subr.mxu0 0.0
    %3362 = vmatpush1.xpose.msra.mxu0 0.0
    %3363 = vmatprep.subr.mxu0 0.0
    %3364 = vmatpush1.xpose.msra.mxu0 0.0
    %3365 = vmatprep.subr.mxu0 0.0
    %3366 = vmatpush1.xpose.msra.mxu0 0.0
    %3367 = vmatprep.subr.mxu0 0.0
    %3368 = vmatpush1.xpose.msra.mxu0 0.0
    %3369 = vmatprep.subr.mxu0 0.0
    %3370 = vmatpush1.xpose.msra.mxu0 0.0
    %3371 = vmatprep.subr.mxu0 0.0
    %3372 = vmatpush1.xpose.msra.mxu0 0.0
    %3373 = vmatprep.subr.mxu0 0.0
    %3374 = vmatpush1.xpose.msra.mxu0 0.0
    %3375 = vmatprep.subr.mxu0 0.0
    %3376 = vmatpush1.xpose.msra.mxu0 0.0
    %3377 = vmatprep.subr.mxu0 0.0
    %3378 = vmatpush1.xpose.msra.mxu0 0.0
    %3379 = vmatprep.subr.mxu0 0.0
    %3380 = vmatpush1.xpose.msra.mxu0 0.0
    %3381 = vmatprep.subr.mxu0 0.0
    %3382 = vmatpush1.xpose.msra.mxu0 0.0
    %3383 = vmatprep.subr.mxu0 0.0
    %3384 = vmatpush1.xpose.msra.mxu0 0.0
    %3385 = vmatprep.subr.mxu0 0.0
    %3386 = vmatpush1.xpose.msra.mxu0 0.0
    %3387 = vmatprep.subr.mxu0 0.0
    %3388 = vmatpush1.xpose.msra.mxu0 0.0
    %3389 = vmatprep.subr.mxu0 0.0
    %3390 = vmatpush1.xpose.msra.mxu0 0.0
    %3391 = vmatprep.subr.mxu0 0.0
    %3392 = vmatpush1.xpose.msra.mxu0 0.0
    %3393 = vmatprep.subr.mxu0 0.0
    %3394 = vmatpush1.xpose.msra.mxu0 0.0
    %3395 = vmatprep.subr.mxu0 0.0
    %3396 = vmatpush1.xpose.msra.mxu0 0.0
    %3397 = vmatprep.subr.mxu0 0.0
    %3398 = vmatpush1.xpose.msra.mxu0 0.0
    %3399 = vmatprep.subr.mxu0 0.0
    %3400 = vmatpush1.xpose.msra.mxu0 0.0
    %3401 = vmatprep.subr.mxu0 0.0
    %3402 = vmatpush1.xpose.msra.mxu0 0.0
    %3403 = vmatprep.subr.mxu0 0.0
    %3404 = vmatpush1.xpose.msra.mxu0 0.0
    %3405 = vmatprep.subr.mxu0 0.0
    %3406 = vmatpush1.xpose.msra.mxu0 0.0
    %3407 = vmatprep.subr.mxu0 0.0
    %3408 = vmatpush1.xpose.msra.mxu0 0.0
    %3409 = vmatprep.subr.mxu0 0.0
    %3410 = vmatpush1.xpose.msra.mxu0 0.0
    %3411 = vmatprep.mubr.f32.mxu0 0.0
    %3412 = vmatmul.mubr.f32.gmra.mrb[0].mxu0 %v2559
    %v3413 = vpop.f32.mrb[0].mxu0
    %v3414 = vadd.f32 %v2554, %v3413
    %v3415 = vpop.f32.mrb[0].mxu0
    %3416 = vmatprep.mubr.f32.mxu0 0.0
    %3417 = vmatmul.mubr.f32.gmra.mrb[0].mxu0 %v2562
    %v3418 = vpop.f32.mrb[0].mxu0
    %v3419 = vadd.f32 %v2555, %v3418
    %v3420 = vpop.f32.mrb[0].mxu0
    %3421 = vdwg.mxu0
    %v3423 = vsel %vm199, %v2513, 0
    %3425 = vmatprep.subr.mxu0 0.0
    %3426 = vmatpush1.xpose.msra.mxu0 %v3423
    %3427 = vmatprep.subr.mxu0 0.0
    %3428 = vmatpush1.xpose.msra.mxu0 0.0
    %3429 = vmatprep.subr.mxu0 0.0
    %3430 = vmatpush1.xpose.msra.mxu0 0.0
    %3431 = vmatprep.subr.mxu0 0.0
    %3432 = vmatpush1.xpose.msra.mxu0 0.0
    %3433 = vmatprep.subr.mxu0 0.0
    %3434 = vmatpush1.xpose.msra.mxu0 0.0
    %3435 = vmatprep.subr.mxu0 0.0
    %3436 = vmatpush1.xpose.msra.mxu0 0.0
    %3437 = vmatprep.subr.mxu0 0.0
    %3438 = vmatpush1.xpose.msra.mxu0 0.0
    %3439 = vmatprep.subr.mxu0 0.0
    %3440 = vmatpush1.xpose.msra.mxu0 0.0
    %3441 = vmatprep.subr.mxu0 0.0
    %3442 = vmatpush1.xpose.msra.mxu0 0.0
    %3443 = vmatprep.subr.mxu0 0.0
    %3444 = vmatpush1.xpose.msra.mxu0 0.0
    %3445 = vmatprep.subr.mxu0 0.0
    %3446 = vmatpush1.xpose.msra.mxu0 0.0
    %3447 = vmatprep.subr.mxu0 0.0
    %3448 = vmatpush1.xpose.msra.mxu0 0.0
    %3449 = vmatprep.subr.mxu0 0.0
    %3450 = vmatpush1.xpose.msra.mxu0 0.0
    %3451 = vmatprep.subr.mxu0 0.0
    %3452 = vmatpush1.xpose.msra.mxu0 0.0
    %3453 = vmatprep.subr.mxu0 0.0
    %3454 = vmatpush1.xpose.msra.mxu0 0.0
    %3455 = vmatprep.subr.mxu0 0.0
    %3456 = vmatpush1.xpose.msra.mxu0 0.0
    %3457 = vmatprep.subr.mxu0 0.0
    %3458 = vmatpush1.xpose.msra.mxu0 0.0
    %3459 = vmatprep.subr.mxu0 0.0
    %3460 = vmatpush1.xpose.msra.mxu0 0.0
    %3461 = vmatprep.subr.mxu0 0.0
    %3462 = vmatpush1.xpose.msra.mxu0 0.0
    %3463 = vmatprep.subr.mxu0 0.0
    %3464 = vmatpush1.xpose.msra.mxu0 0.0
    %3465 = vmatprep.subr.mxu0 0.0
    %3466 = vmatpush1.xpose.msra.mxu0 0.0
    %3467 = vmatprep.subr.mxu0 0.0
    %3468 = vmatpush1.xpose.msra.mxu0 0.0
    %3469 = vmatprep.subr.mxu0 0.0
    %3470 = vmatpush1.xpose.msra.mxu0 0.0
    %3471 = vmatprep.subr.mxu0 0.0
    %3472 = vmatpush1.xpose.msra.mxu0 0.0
    %3473 = vmatprep.subr.mxu0 0.0
    %3474 = vmatpush1.xpose.msra.mxu0 0.0
    %3475 = vmatprep.subr.mxu0 0.0
    %3476 = vmatpush1.xpose.msra.mxu0 0.0
    %3477 = vmatprep.subr.mxu0 0.0
    %3478 = vmatpush1.xpose.msra.mxu0 0.0
    %3479 = vmatprep.subr.mxu0 0.0
    %3480 = vmatpush1.xpose.msra.mxu0 0.0
    %3481 = vmatprep.subr.mxu0 0.0
    %3482 = vmatpush1.xpose.msra.mxu0 0.0
    %3483 = vmatprep.subr.mxu0 0.0
    %3484 = vmatpush1.xpose.msra.mxu0 0.0
    %3485 = vmatprep.subr.mxu0 0.0
    %3486 = vmatpush1.xpose.msra.mxu0 0.0
    %3487 = vmatprep.subr.mxu0 0.0
    %3488 = vmatpush1.xpose.msra.mxu0 0.0
    %3489 = vmatprep.mubr.f32.mxu0 0.0
    %3490 = vmatmul.mubr.f32.gmra.mrb[0].mxu0 %v2559
    %v3491 = vpop.f32.mrb[0].mxu0
    %v3492 = vadd.f32 %v2556, %v3491
    %v3493 = vpop.f32.mrb[0].mxu0
    %3494 = vmatprep.mubr.f32.mxu0 0.0
    %3495 = vmatmul.mubr.f32.gmra.mrb[0].mxu0 %v2562
    %v3496 = vpop.f32.mrb[0].mxu0
    %v3497 = vadd.f32 %v2557, %v3496
    %v3498 = vpop.f32.mrb[0].mxu0
    %3499 = vdwg.mxu0
    %v3501 = vsel %vm1142, %v2634, 0
    %v3504 = vsel %vm1142, %v2639, 0
    %v3507 = vsel %vm1142, %v2946, 0
    %v3510 = vsel %vm1142, %v2951, 0
    %3512 = vmatprep.subr.mxu0 0.0
    %3513 = vmatpush1.xpose.msra.mxu0 %v3507
    %3514 = vmatprep.subr.mxu0 0.0
    %3515 = vmatpush1.xpose.msra.mxu0 %v3510
    %3516 = vmatprep.subr.mxu0 0.0
    %3517 = vmatpush1.xpose.msra.mxu0 0.0
    %3518 = vmatprep.subr.mxu0 0.0
    %3519 = vmatpush1.xpose.msra.mxu0 0.0
    %3520 = vmatprep.subr.mxu0 0.0
    %3521 = vmatpush1.xpose.msra.mxu0 0.0
    %3522 = vmatprep.subr.mxu0 0.0
    %3523 = vmatpush1.xpose.msra.mxu0 0.0
    %3524 = vmatprep.subr.mxu0 0.0
    %3525 = vmatpush1.xpose.msra.mxu0 0.0
    %3526 = vmatprep.subr.mxu0 0.0
    %3527 = vmatpush1.xpose.msra.mxu0 0.0
    %3528 = vmatprep.subr.mxu0 0.0
    %3529 = vmatpush1.xpose.msra.mxu0 0.0
    %3530 = vmatprep.subr.mxu0 0.0
    %3531 = vmatpush1.xpose.msra.mxu0 0.0
    %3532 = vmatprep.subr.mxu0 0.0
    %3533 = vmatpush1.xpose.msra.mxu0 0.0
    %3534 = vmatprep.subr.mxu0 0.0
    %3535 = vmatpush1.xpose.msra.mxu0 0.0
    %3536 = vmatprep.subr.mxu0 0.0
    %3537 = vmatpush1.xpose.msra.mxu0 0.0
    %3538 = vmatprep.subr.mxu0 0.0
    %3539 = vmatpush1.xpose.msra.mxu0 0.0
    %3540 = vmatprep.subr.mxu0 0.0
    %3541 = vmatpush1.xpose.msra.mxu0 0.0
    %3542 = vmatprep.subr.mxu0 0.0
    %3543 = vmatpush1.xpose.msra.mxu0 0.0
    %3544 = vmatprep.subr.mxu0 0.0
    %3545 = vmatpush1.xpose.msra.mxu0 0.0
    %3546 = vmatprep.subr.mxu0 0.0
    %3547 = vmatpush1.xpose.msra.mxu0 0.0
    %3548 = vmatprep.subr.mxu0 0.0
    %3549 = vmatpush1.xpose.msra.mxu0 0.0
    %3550 = vmatprep.subr.mxu0 0.0
    %3551 = vmatpush1.xpose.msra.mxu0 0.0
    %3552 = vmatprep.subr.mxu0 0.0
    %3553 = vmatpush1.xpose.msra.mxu0 0.0
    %3554 = vmatprep.subr.mxu0 0.0
    %3555 = vmatpush1.xpose.msra.mxu0 0.0
    %3556 = vmatprep.subr.mxu0 0.0
    %3557 = vmatpush1.xpose.msra.mxu0 0.0
    %3558 = vmatprep.subr.mxu0 0.0
    %3559 = vmatpush1.xpose.msra.mxu0 0.0
    %3560 = vmatprep.subr.mxu0 0.0
    %3561 = vmatpush1.xpose.msra.mxu0 0.0
    %3562 = vmatprep.subr.mxu0 0.0
    %3563 = vmatpush1.xpose.msra.mxu0 0.0
    %3564 = vmatprep.subr.mxu0 0.0
    %3565 = vmatpush1.xpose.msra.mxu0 0.0
    %3566 = vmatprep.subr.mxu0 0.0
    %3567 = vmatpush1.xpose.msra.mxu0 0.0
    %3568 = vmatprep.subr.mxu0 0.0
    %3569 = vmatpush1.xpose.msra.mxu0 0.0
    %3570 = vmatprep.subr.mxu0 0.0
    %3571 = vmatpush1.xpose.msra.mxu0 0.0
    %3572 = vmatprep.subr.mxu0 0.0
    %3573 = vmatpush1.xpose.msra.mxu0 0.0
    %3574 = vmatprep.subr.mxu0 0.0
    %3575 = vmatpush1.xpose.msra.mxu0 0.0
    %3576 = vmatprep.mubr.f32.mxu0 0.0
    %3577 = vmatmul.mubr.f32.gmra.mrb[0].mxu0 %v3501
    %v3578 = vpop.f32.mrb[0].mxu0
    %v3579 = vadd.f32 0.0, %v3578
    %v3580 = vpop.f32.mrb[0].mxu0
    %3581 = vmatprep.mubr.f32.mxu0 0.0
    %3582 = vmatmul.mubr.f32.gmra.mrb[0].mxu0 %v3504
    %v3583 = vpop.f32.mrb[0].mxu0
    %v3584 = vadd.f32 0.0, %v3583
    %v3585 = vpop.f32.mrb[0].mxu0
    %3586 = vdwg.mxu0
    %v3588 = vsel %vm1142, %v2712, 0
    %v3591 = vsel %vm1142, %v2717, 0
    %v3594 = vsel %vm1142, %v3024, 0
    %v3597 = vsel %vm1142, %v3029, 0
    %3599 = vmatprep.subr.mxu0 0.0
    %3600 = vmatpush1.xpose.msra.mxu0 %v3594
    %3601 = vmatprep.subr.mxu0 0.0
    %3602 = vmatpush1.xpose.msra.mxu0 %v3597
    %3603 = vmatprep.subr.mxu0 0.0
    %3604 = vmatpush1.xpose.msra.mxu0 0.0
    %3605 = vmatprep.subr.mxu0 0.0
    %3606 = vmatpush1.xpose.msra.mxu0 0.0
    %3607 = vmatprep.subr.mxu0 0.0
    %3608 = vmatpush1.xpose.msra.mxu0 0.0
    %3609 = vmatprep.subr.mxu0 0.0
    %3610 = vmatpush1.xpose.msra.mxu0 0.0
    %3611 = vmatprep.subr.mxu0 0.0
    %3612 = vmatpush1.xpose.msra.mxu0 0.0
    %3613 = vmatprep.subr.mxu0 0.0
    %3614 = vmatpush1.xpose.msra.mxu0 0.0
    %3615 = vmatprep.subr.mxu0 0.0
    %3616 = vmatpush1.xpose.msra.mxu0 0.0
    %3617 = vmatprep.subr.mxu0 0.0
    %3618 = vmatpush1.xpose.msra.mxu0 0.0
    %3619 = vmatprep.subr.mxu0 0.0
    %3620 = vmatpush1.xpose.msra.mxu0 0.0
    %3621 = vmatprep.subr.mxu0 0.0
    %3622 = vmatpush1.xpose.msra.mxu0 0.0
    %3623 = vmatprep.subr.mxu0 0.0
    %3624 = vmatpush1.xpose.msra.mxu0 0.0
    %3625 = vmatprep.subr.mxu0 0.0
    %3626 = vmatpush1.xpose.msra.mxu0 0.0
    %3627 = vmatprep.subr.mxu0 0.0
    %3628 = vmatpush1.xpose.msra.mxu0 0.0
    %3629 = vmatprep.subr.mxu0 0.0
    %3630 = vmatpush1.xpose.msra.mxu0 0.0
    %3631 = vmatprep.subr.mxu0 0.0
    %3632 = vmatpush1.xpose.msra.mxu0 0.0
    %3633 = vmatprep.subr.mxu0 0.0
    %3634 = vmatpush1.xpose.msra.mxu0 0.0
    %3635 = vmatprep.subr.mxu0 0.0
    %3636 = vmatpush1.xpose.msra.mxu0 0.0
    %3637 = vmatprep.subr.mxu0 0.0
    %3638 = vmatpush1.xpose.msra.mxu0 0.0
    %3639 = vmatprep.subr.mxu0 0.0
    %3640 = vmatpush1.xpose.msra.mxu0 0.0
    %3641 = vmatprep.subr.mxu0 0.0
    %3642 = vmatpush1.xpose.msra.mxu0 0.0
    %3643 = vmatprep.subr.mxu0 0.0
    %3644 = vmatpush1.xpose.msra.mxu0 0.0
    %3645 = vmatprep.subr.mxu0 0.0
    %3646 = vmatpush1.xpose.msra.mxu0 0.0
    %3647 = vmatprep.subr.mxu0 0.0
    %3648 = vmatpush1.xpose.msra.mxu0 0.0
    %3649 = vmatprep.subr.mxu0 0.0
    %3650 = vmatpush1.xpose.msra.mxu0 0.0
    %3651 = vmatprep.subr.mxu0 0.0
    %3652 = vmatpush1.xpose.msra.mxu0 0.0
    %3653 = vmatprep.subr.mxu0 0.0
    %3654 = vmatpush1.xpose.msra.mxu0 0.0
    %3655 = vmatprep.subr.mxu0 0.0
    %3656 = vmatpush1.xpose.msra.mxu0 0.0
    %3657 = vmatprep.subr.mxu0 0.0
    %3658 = vmatpush1.xpose.msra.mxu0 0.0
    %3659 = vmatprep.subr.mxu0 0.0
    %3660 = vmatpush1.xpose.msra.mxu0 0.0
    %3661 = vmatprep.subr.mxu0 0.0
    %3662 = vmatpush1.xpose.msra.mxu0 0.0
    %3663 = vmatprep.mubr.f32.mxu0 0.0
    %3664 = vmatmul.mubr.f32.gmra.mrb[0].mxu0 %v3588
    %v3665 = vpop.f32.mrb[0].mxu0
    %v3666 = vadd.f32 0.0, %v3665
    %v3667 = vpop.f32.mrb[0].mxu0
    %3668 = vmatprep.mubr.f32.mxu0 0.0
    %3669 = vmatmul.mubr.f32.gmra.mrb[0].mxu0 %v3591
    %v3670 = vpop.f32.mrb[0].mxu0
    %v3671 = vadd.f32 0.0, %v3670
    %v3672 = vpop.f32.mrb[0].mxu0
    %3673 = vdwg.mxu0
    %v3675 = vsel %vm1142, %v2790, 0
    %v3678 = vsel %vm1142, %v2795, 0
    %v3681 = vsel %vm1142, %v3102, 0
    %v3684 = vsel %vm1142, %v3107, 0
    %3686 = vmatprep.subr.mxu0 0.0
    %3687 = vmatpush1.xpose.msra.mxu0 %v3681
    %3688 = vmatprep.subr.mxu0 0.0
    %3689 = vmatpush1.xpose.msra.mxu0 %v3684
    %3690 = vmatprep.subr.mxu0 0.0
    %3691 = vmatpush1.xpose.msra.mxu0 0.0
    %3692 = vmatprep.subr.mxu0 0.0
    %3693 = vmatpush1.xpose.msra.mxu0 0.0
    %3694 = vmatprep.subr.mxu0 0.0
    %3695 = vmatpush1.xpose.msra.mxu0 0.0
    %3696 = vmatprep.subr.mxu0 0.0
    %3697 = vmatpush1.xpose.msra.mxu0 0.0
    %3698 = vmatprep.subr.mxu0 0.0
    %3699 = vmatpush1.xpose.msra.mxu0 0.0
    %3700 = vmatprep.subr.mxu0 0.0
    %3701 = vmatpush1.xpose.msra.mxu0 0.0
    %3702 = vmatprep.subr.mxu0 0.0
    %3703 = vmatpush1.xpose.msra.mxu0 0.0
    %3704 = vmatprep.subr.mxu0 0.0
    %3705 = vmatpush1.xpose.msra.mxu0 0.0
    %3706 = vmatprep.subr.mxu0 0.0
    %3707 = vmatpush1.xpose.msra.mxu0 0.0
    %3708 = vmatprep.subr.mxu0 0.0
    %3709 = vmatpush1.xpose.msra.mxu0 0.0
    %3710 = vmatprep.subr.mxu0 0.0
    %3711 = vmatpush1.xpose.msra.mxu0 0.0
    %3712 = vmatprep.subr.mxu0 0.0
    %3713 = vmatpush1.xpose.msra.mxu0 0.0
    %3714 = vmatprep.subr.mxu0 0.0
    %3715 = vmatpush1.xpose.msra.mxu0 0.0
    %3716 = vmatprep.subr.mxu0 0.0
    %3717 = vmatpush1.xpose.msra.mxu0 0.0
    %3718 = vmatprep.subr.mxu0 0.0
    %3719 = vmatpush1.xpose.msra.mxu0 0.0
    %3720 = vmatprep.subr.mxu0 0.0
    %3721 = vmatpush1.xpose.msra.mxu0 0.0
    %3722 = vmatprep.subr.mxu0 0.0
    %3723 = vmatpush1.xpose.msra.mxu0 0.0
    %3724 = vmatprep.subr.mxu0 0.0
    %3725 = vmatpush1.xpose.msra.mxu0 0.0
    %3726 = vmatprep.subr.mxu0 0.0
    %3727 = vmatpush1.xpose.msra.mxu0 0.0
    %3728 = vmatprep.subr.mxu0 0.0
    %3729 = vmatpush1.xpose.msra.mxu0 0.0
    %3730 = vmatprep.subr.mxu0 0.0
    %3731 = vmatpush1.xpose.msra.mxu0 0.0
    %3732 = vmatprep.subr.mxu0 0.0
    %3733 = vmatpush1.xpose.msra.mxu0 0.0
    %3734 = vmatprep.subr.mxu0 0.0
    %3735 = vmatpush1.xpose.msra.mxu0 0.0
    %3736 = vmatprep.subr.mxu0 0.0
    %3737 = vmatpush1.xpose.msra.mxu0 0.0
    %3738 = vmatprep.subr.mxu0 0.0
    %3739 = vmatpush1.xpose.msra.mxu0 0.0
    %3740 = vmatprep.subr.mxu0 0.0
    %3741 = vmatpush1.xpose.msra.mxu0 0.0
    %3742 = vmatprep.subr.mxu0 0.0
    %3743 = vmatpush1.xpose.msra.mxu0 0.0
    %3744 = vmatprep.subr.mxu0 0.0
    %3745 = vmatpush1.xpose.msra.mxu0 0.0
    %3746 = vmatprep.subr.mxu0 0.0
    %3747 = vmatpush1.xpose.msra.mxu0 0.0
    %3748 = vmatprep.subr.mxu0 0.0
    %3749 = vmatpush1.xpose.msra.mxu0 0.0
    %3750 = vmatprep.mubr.f32.mxu0 0.0
    %3751 = vmatmul.mubr.f32.gmra.mrb[0].mxu0 %v3675
    %v3752 = vpop.f32.mrb[0].mxu0
    %v3753 = vadd.f32 0.0, %v3752
    %v3754 = vpop.f32.mrb[0].mxu0
    %3755 = vmatprep.mubr.f32.mxu0 0.0
    %3756 = vmatmul.mubr.f32.gmra.mrb[0].mxu0 %v3678
    %v3757 = vpop.f32.mrb[0].mxu0
    %v3758 = vadd.f32 0.0, %v3757
    %v3759 = vpop.f32.mrb[0].mxu0
    %3760 = vdwg.mxu0
    %v3762 = vsel %vm1142, %v2868, 0
    %v3765 = vsel %vm1142, %v2873, 0
    %v3768 = vsel %vm1142, %v3180, 0
    %v3771 = vsel %vm1142, %v3185, 0
    %3773 = vmatprep.subr.mxu0 0.0
    %3774 = vmatpush1.xpose.msra.mxu0 %v3768
    %3775 = vmatprep.subr.mxu0 0.0
    %3776 = vmatpush1.xpose.msra.mxu0 %v3771
    %3777 = vmatprep.subr.mxu0 0.0
    %3778 = vmatpush1.xpose.msra.mxu0 0.0
    %3779 = vmatprep.subr.mxu0 0.0
    %3780 = vmatpush1.xpose.msra.mxu0 0.0
    %3781 = vmatprep.subr.mxu0 0.0
    %3782 = vmatpush1.xpose.msra.mxu0 0.0
    %3783 = vmatprep.subr.mxu0 0.0
    %3784 = vmatpush1.xpose.msra.mxu0 0.0
    %3785 = vmatprep.subr.mxu0 0.0
    %3786 = vmatpush1.xpose.msra.mxu0 0.0
    %3787 = vmatprep.subr.mxu0 0.0
    %3788 = vmatpush1.xpose.msra.mxu0 0.0
    %3789 = vmatprep.subr.mxu0 0.0
    %3790 = vmatpush1.xpose.msra.mxu0 0.0
    %3791 = vmatprep.subr.mxu0 0.0
    %3792 = vmatpush1.xpose.msra.mxu0 0.0
    %3793 = vmatprep.subr.mxu0 0.0
    %3794 = vmatpush1.xpose.msra.mxu0 0.0
    %3795 = vmatprep.subr.mxu0 0.0
    %3796 = vmatpush1.xpose.msra.mxu0 0.0
    %3797 = vmatprep.subr.mxu0 0.0
    %3798 = vmatpush1.xpose.msra.mxu0 0.0
    %3799 = vmatprep.subr.mxu0 0.0
    %3800 = vmatpush1.xpose.msra.mxu0 0.0
    %3801 = vmatprep.subr.mxu0 0.0
    %3802 = vmatpush1.xpose.msra.mxu0 0.0
    %3803 = vmatprep.subr.mxu0 0.0
    %3804 = vmatpush1.xpose.msra.mxu0 0.0
    %3805 = vmatprep.subr.mxu0 0.0
    %3806 = vmatpush1.xpose.msra.mxu0 0.0
    %3807 = vmatprep.subr.mxu0 0.0
    %3808 = vmatpush1.xpose.msra.mxu0 0.0
    %3809 = vmatprep.subr.mxu0 0.0
    %3810 = vmatpush1.xpose.msra.mxu0 0.0
    %3811 = vmatprep.subr.mxu0 0.0
    %3812 = vmatpush1.xpose.msra.mxu0 0.0
    %3813 = vmatprep.subr.mxu0 0.0
    %3814 = vmatpush1.xpose.msra.mxu0 0.0
    %3815 = vmatprep.subr.mxu0 0.0
    %3816 = vmatpush1.xpose.msra.mxu0 0.0
    %3817 = vmatprep.subr.mxu0 0.0
    %3818 = vmatpush1.xpose.msra.mxu0 0.0
    %3819 = vmatprep.subr.mxu0 0.0
    %3820 = vmatpush1.xpose.msra.mxu0 0.0
    %3821 = vmatprep.subr.mxu0 0.0
    %3822 = vmatpush1.xpose.msra.mxu0 0.0
    %3823 = vmatprep.subr.mxu0 0.0
    %3824 = vmatpush1.xpose.msra.mxu0 0.0
    %3825 = vmatprep.subr.mxu0 0.0
    %3826 = vmatpush1.xpose.msra.mxu0 0.0
    %3827 = vmatprep.subr.mxu0 0.0
    %3828 = vmatpush1.xpose.msra.mxu0 0.0
    %3829 = vmatprep.subr.mxu0 0.0
    %3830 = vmatpush1.xpose.msra.mxu0 0.0
    %3831 = vmatprep.subr.mxu0 0.0
    %3832 = vmatpush1.xpose.msra.mxu0 0.0
    %3833 = vmatprep.subr.mxu0 0.0
    %3834 = vmatpush1.xpose.msra.mxu0 0.0
    %3835 = vmatprep.subr.mxu0 0.0
    %3836 = vmatpush1.xpose.msra.mxu0 0.0
    %3837 = vmatprep.mubr.f32.mxu0 0.0
    %3838 = vmatmul.mubr.f32.gmra.mrb[0].mxu0 %v3762
    %v3839 = vpop.f32.mrb[0].mxu0
    %v3840 = vadd.f32 0.0, %v3839
    %v3841 = vpop.f32.mrb[0].mxu0
    %3842 = vmatprep.mubr.f32.mxu0 0.0
    %3843 = vmatmul.mubr.f32.gmra.mrb[0].mxu0 %v3765
    %v3844 = vpop.f32.mrb[0].mxu0
    %v3845 = vadd.f32 0.0, %v3844
    %v3846 = vpop.f32.mrb[0].mxu0
    %3847 = vdwg.mxu0
    %v3848 = vsel %vm1491, %v3579, -inf
    %3849 = vmax.xlane.f32.xlu0 %v3848
    %v3850 = vpop.xlane.xlu0 %3849
    %v3851 = vsel %vm1491, %v3584, -inf
    %3852 = vmax.xlane.f32.xlu0 %v3851
    %v3853 = vpop.xlane.xlu0 %3852
    %v3854 = vsel %vm1491, %v3666, -inf
    %3855 = vmax.xlane.f32.xlu0 %v3854
    %v3856 = vpop.xlane.xlu0 %3855
    %v3857 = vsel %vm1491, %v3671, -inf
    %3858 = vmax.xlane.f32.xlu0 %v3857
    %v3859 = vpop.xlane.xlu0 %3858
    %v3860 = vsel %vm1491, %v3753, -inf
    %3861 = vmax.xlane.f32.xlu0 %v3860
    %v3862 = vpop.xlane.xlu0 %3861
    %v3863 = vsel %vm1491, %v3758, -inf
    %3864 = vmax.xlane.f32.xlu0 %v3863
    %v3865 = vpop.xlane.xlu0 %3864
    %v3866 = vsel %vm1491, %v3840, -inf
    %3867 = vmax.xlane.f32.xlu0 %v3866
    %v3868 = vpop.xlane.xlu0 %3867
    %v3869 = vsel %vm1491, %v3845, -inf
    %3870 = vmax.xlane.f32.xlu0 %v3869
    %v3871 = vpop.xlane.xlu0 %3870
    %v3872 = vsub.f32 %v3579, %v3850
    %v3873 = vsub.f32 %v3584, %v3853
    %v3874 = vsub.f32 %v3666, %v3856
    %v3875 = vsub.f32 %v3671, %v3859
    %v3876 = vsub.f32 %v3753, %v3862
    %v3877 = vsub.f32 %v3758, %v3865
    %v3878 = vsub.f32 %v3840, %v3868
    %v3879 = vsub.f32 %v3845, %v3871
    %v3880 = vmul.f32 %v3872, 1.442695
    %v3881 = vpow.pop %v3880
    %v3882 = vmul.f32 %v3873, 1.442695
    %v3883 = vpow.pop %v3882
    %v3884 = vmul.f32 %v3874, 1.442695
    %v3885 = vpow.pop %v3884
    %v3886 = vmul.f32 %v3875, 1.442695
    %v3887 = vpow.pop %v3886
    %v3888 = vmul.f32 %v3876, 1.442695
    %v3889 = vpow.pop %v3888
    %v3890 = vmul.f32 %v3877, 1.442695
    %v3891 = vpow.pop %v3890
    %v3892 = vmul.f32 %v3878, 1.442695
    %v3893 = vpow.pop %v3892
    %v3894 = vmul.f32 %v3879, 1.442695
    %v3895 = vpow.pop %v3894
    %v3896 = vmul.f32 %v3881, %v142
    %v3897 = vmul.f32 %v3883, %v143
    %v3898 = vmul.f32 %v3885, %v142
    %v3899 = vmul.f32 %v3887, %v143
    %v3900 = vmul.f32 %v3889, %v142
    %v3901 = vmul.f32 %v3891, %v143
    %v3902 = vmul.f32 %v3893, %v142
    %v3903 = vmul.f32 %v3895, %v143
    %v3904 = vsel %vm1491, %v3896, 0.0
    %3905 = vadd.xlane.f32.xlu0 %v3904
    %v3906 = vpop.xlane.xlu0 %3905
    %v3907 = vsel %vm1491, %v3897, 0.0
    %3908 = vadd.xlane.f32.xlu0 %v3907
    %v3909 = vpop.xlane.xlu0 %3908
    %v3910 = vsel %vm1491, %v3898, 0.0
    %3911 = vadd.xlane.f32.xlu0 %v3910
    %v3912 = vpop.xlane.xlu0 %3911
    %v3913 = vsel %vm1491, %v3899, 0.0
    %3914 = vadd.xlane.f32.xlu0 %v3913
    %v3915 = vpop.xlane.xlu0 %3914
    %v3916 = vsel %vm1491, %v3900, 0.0
    %3917 = vadd.xlane.f32.xlu0 %v3916
    %v3918 = vpop.xlane.xlu0 %3917
    %v3919 = vsel %vm1491, %v3901, 0.0
    %3920 = vadd.xlane.f32.xlu0 %v3919
    %v3921 = vpop.xlane.xlu0 %3920
    %v3922 = vsel %vm1491, %v3902, 0.0
    %3923 = vadd.xlane.f32.xlu0 %v3922
    %v3924 = vpop.xlane.xlu0 %3923
    %v3925 = vsel %vm1491, %v3903, 0.0
    %3926 = vadd.xlane.f32.xlu0 %v3925
    %v3927 = vpop.xlane.xlu0 %3926
    %v3929 = vsel %vm1491, %v3896, 0
    %v3932 = vsel %vm1491, %v3897, 0
    %3934 = vmatprep.subr.mxu0 0.0
    %3935 = vmatpush1.msra.mxu0 %v3258
    %3936 = vmatprep.subr.mxu0 0.0
    %3937 = vmatpush1.msra.mxu0 %v3263
    %3938 = vmatprep.subr.mxu0 0.0
    %3939 = vmatpush1.msra.mxu0 0.0
    %3940 = vmatprep.subr.mxu0 0.0
    %3941 = vmatpush1.msra.mxu0 0.0
    %3942 = vmatprep.subr.mxu0 0.0
    %3943 = vmatpush1.msra.mxu0 0.0
    %3944 = vmatprep.subr.mxu0 0.0
    %3945 = vmatpush1.msra.mxu0 0.0
    %3946 = vmatprep.subr.mxu0 0.0
    %3947 = vmatpush1.msra.mxu0 0.0
    %3948 = vmatprep.subr.mxu0 0.0
    %3949 = vmatpush1.msra.mxu0 0.0
    %3950 = vmatprep.subr.mxu0 0.0
    %3951 = vmatpush1.msra.mxu0 0.0
    %3952 = vmatprep.subr.mxu0 0.0
    %3953 = vmatpush1.msra.mxu0 0.0
    %3954 = vmatprep.subr.mxu0 0.0
    %3955 = vmatpush1.msra.mxu0 0.0
    %3956 = vmatprep.subr.mxu0 0.0
    %3957 = vmatpush1.msra.mxu0 0.0
    %3958 = vmatprep.subr.mxu0 0.0
    %3959 = vmatpush1.msra.mxu0 0.0
    %3960 = vmatprep.subr.mxu0 0.0
    %3961 = vmatpush1.msra.mxu0 0.0
    %3962 = vmatprep.subr.mxu0 0.0
    %3963 = vmatpush1.msra.mxu0 0.0
    %3964 = vmatprep.subr.mxu0 0.0
    %3965 = vmatpush1.msra.mxu0 0.0
    %3966 = vmatprep.subr.mxu0 0.0
    %3967 = vmatpush1.msra.mxu0 0.0
    %3968 = vmatprep.subr.mxu0 0.0
    %3969 = vmatpush1.msra.mxu0 0.0
    %3970 = vmatprep.subr.mxu0 0.0
    %3971 = vmatpush1.msra.mxu0 0.0
    %3972 = vmatprep.subr.mxu0 0.0
    %3973 = vmatpush1.msra.mxu0 0.0
    %3974 = vmatprep.subr.mxu0 0.0
    %3975 = vmatpush1.msra.mxu0 0.0
    %3976 = vmatprep.subr.mxu0 0.0
    %3977 = vmatpush1.msra.mxu0 0.0
    %3978 = vmatprep.subr.mxu0 0.0
    %3979 = vmatpush1.msra.mxu0 0.0
    %3980 = vmatprep.subr.mxu0 0.0
    %3981 = vmatpush1.msra.mxu0 0.0
    %3982 = vmatprep.subr.mxu0 0.0
    %3983 = vmatpush1.msra.mxu0 0.0
    %3984 = vmatprep.subr.mxu0 0.0
    %3985 = vmatpush1.msra.mxu0 0.0
    %3986 = vmatprep.subr.mxu0 0.0
    %3987 = vmatpush1.msra.mxu0 0.0
    %3988 = vmatprep.subr.mxu0 0.0
    %3989 = vmatpush1.msra.mxu0 0.0
    %3990 = vmatprep.subr.mxu0 0.0
    %3991 = vmatpush1.msra.mxu0 0.0
    %3992 = vmatprep.subr.mxu0 0.0
    %3993 = vmatpush1.msra.mxu0 0.0
    %3994 = vmatprep.subr.mxu0 0.0
    %3995 = vmatpush1.msra.mxu0 0.0
    %3996 = vmatprep.subr.mxu0 0.0
    %3997 = vmatpush1.msra.mxu0 0.0
    %3998 = vmatprep.mubr.f32.mxu0 0.0
    %3999 = vmatmul.mubr.f32.gmra.mrb[0].mxu0 %v3929
    %v4000 = vpop.f32.mrb[0].mxu0
    %v4001 = vadd.f32 0.0, %v4000
    %v4002 = vpop.f32.mrb[0].mxu0
    %4003 = vmatprep.mubr.f32.mxu0 0.0
    %4004 = vmatmul.mubr.f32.gmra.mrb[0].mxu0 %v3932
    %v4005 = vpop.f32.mrb[0].mxu0
    %v4006 = vadd.f32 0.0, %v4005
    %v4007 = vpop.f32.mrb[0].mxu0
    %4008 = vdwg.mxu0
    %v4010 = vsel %vm1491, %v3898, 0
    %v4013 = vsel %vm1491, %v3899, 0
    %4015 = vmatprep.subr.mxu0 0.0
    %4016 = vmatpush1.msra.mxu0 %v3336
    %4017 = vmatprep.subr.mxu0 0.0
    %4018 = vmatpush1.msra.mxu0 %v3341
    %4019 = vmatprep.subr.mxu0 0.0
    %4020 = vmatpush1.msra.mxu0 0.0
    %4021 = vmatprep.subr.mxu0 0.0
    %4022 = vmatpush1.msra.mxu0 0.0
    %4023 = vmatprep.subr.mxu0 0.0
    %4024 = vmatpush1.msra.mxu0 0.0
    %4025 = vmatprep.subr.mxu0 0.0
    %4026 = vmatpush1.msra.mxu0 0.0
    %4027 = vmatprep.subr.mxu0 0.0
    %4028 = vmatpush1.msra.mxu0 0.0
    %4029 = vmatprep.subr.mxu0 0.0
    %4030 = vmatpush1.msra.mxu0 0.0
    %4031 = vmatprep.subr.mxu0 0.0
    %4032 = vmatpush1.msra.mxu0 0.0
    %4033 = vmatprep.subr.mxu0 0.0
    %4034 = vmatpush1.msra.mxu0 0.0
    %4035 = vmatprep.subr.mxu0 0.0
    %4036 = vmatpush1.msra.mxu0 0.0
    %4037 = vmatprep.subr.mxu0 0.0
    %4038 = vmatpush1.msra.mxu0 0.0
    %4039 = vmatprep.subr.mxu0 0.0
    %4040 = vmatpush1.msra.mxu0 0.0
    %4041 = vmatprep.subr.mxu0 0.0
    %4042 = vmatpush1.msra.mxu0 0.0
    %4043 = vmatprep.subr.mxu0 0.0
    %4044 = vmatpush1.msra.mxu0 0.0
    %4045 = vmatprep.subr.mxu0 0.0
    %4046 = vmatpush1.msra.mxu0 0.0
    %4047 = vmatprep.subr.mxu0 0.0
    %4048 = vmatpush1.msra.mxu0 0.0
    %4049 = vmatprep.subr.mxu0 0.0
    %4050 = vmatpush1.msra.mxu0 0.0
    %4051 = vmatprep.subr.mxu0 0.0
    %4052 = vmatpush1.msra.mxu0 0.0
    %4053 = vmatprep.subr.mxu0 0.0
    %4054 = vmatpush1.msra.mxu0 0.0
    %4055 = vmatprep.subr.mxu0 0.0
    %4056 = vmatpush1.msra.mxu0 0.0
    %4057 = vmatprep.subr.mxu0 0.0
    %4058 = vmatpush1.msra.mxu0 0.0
    %4059 = vmatprep.subr.mxu0 0.0
    %4060 = vmatpush1.msra.mxu0 0.0
    %4061 = vmatprep.subr.mxu0 0.0
    %4062 = vmatpush1.msra.mxu0 0.0
    %4063 = vmatprep.subr.mxu0 0.0
    %4064 = vmatpush1.msra.mxu0 0.0
    %4065 = vmatprep.subr.mxu0 0.0
    %4066 = vmatpush1.msra.mxu0 0.0
    %4067 = vmatprep.subr.mxu0 0.0
    %4068 = vmatpush1.msra.mxu0 0.0
    %4069 = vmatprep.subr.mxu0 0.0
    %4070 = vmatpush1.msra.mxu0 0.0
    %4071 = vmatprep.subr.mxu0 0.0
    %4072 = vmatpush1.msra.mxu0 0.0
    %4073 = vmatprep.subr.mxu0 0.0
    %4074 = vmatpush1.msra.mxu0 0.0
    %4075 = vmatprep.subr.mxu0 0.0
    %4076 = vmatpush1.msra.mxu0 0.0
    %4077 = vmatprep.subr.mxu0 0.0
    %4078 = vmatpush1.msra.mxu0 0.0
    %4079 = vmatprep.mubr.f32.mxu0 0.0
    %4080 = vmatmul.mubr.f32.gmra.mrb[0].mxu0 %v4010
    %v4081 = vpop.f32.mrb[0].mxu0
    %v4082 = vadd.f32 0.0, %v4081
    %v4083 = vpop.f32.mrb[0].mxu0
    %4084 = vmatprep.mubr.f32.mxu0 0.0
    %4085 = vmatmul.mubr.f32.gmra.mrb[0].mxu0 %v4013
    %v4086 = vpop.f32.mrb[0].mxu0
    %v4087 = vadd.f32 0.0, %v4086
    %v4088 = vpop.f32.mrb[0].mxu0
    %4089 = vdwg.mxu0
    %v4091 = vsel %vm1491, %v3900, 0
    %v4094 = vsel %vm1491, %v3901, 0
    %4096 = vmatprep.subr.mxu0 0.0
    %4097 = vmatpush1.msra.mxu0 %v3414
    %4098 = vmatprep.subr.mxu0 0.0
    %4099 = vmatpush1.msra.mxu0 %v3419
    %4100 = vmatprep.subr.mxu0 0.0
    %4101 = vmatpush1.msra.mxu0 0.0
    %4102 = vmatprep.subr.mxu0 0.0
    %4103 = vmatpush1.msra.mxu0 0.0
    %4104 = vmatprep.subr.mxu0 0.0
    %4105 = vmatpush1.msra.mxu0 0.0
    %4106 = vmatprep.subr.mxu0 0.0
    %4107 = vmatpush1.msra.mxu0 0.0
    %4108 = vmatprep.subr.mxu0 0.0
    %4109 = vmatpush1.msra.mxu0 0.0
    %4110 = vmatprep.subr.mxu0 0.0
    %4111 = vmatpush1.msra.mxu0 0.0
    %4112 = vmatprep.subr.mxu0 0.0
    %4113 = vmatpush1.msra.mxu0 0.0
    %4114 = vmatprep.subr.mxu0 0.0
    %4115 = vmatpush1.msra.mxu0 0.0
    %4116 = vmatprep.subr.mxu0 0.0
    %4117 = vmatpush1.msra.mxu0 0.0
    %4118 = vmatprep.subr.mxu0 0.0
    %4119 = vmatpush1.msra.mxu0 0.0
    %4120 = vmatprep.subr.mxu0 0.0
    %4121 = vmatpush1.msra.mxu0 0.0
    %4122 = vmatprep.subr.mxu0 0.0
    %4123 = vmatpush1.msra.mxu0 0.0
    %4124 = vmatprep.subr.mxu0 0.0
    %4125 = vmatpush1.msra.mxu0 0.0
    %4126 = vmatprep.subr.mxu0 0.0
    %4127 = vmatpush1.msra.mxu0 0.0
    %4128 = vmatprep.subr.mxu0 0.0
    %4129 = vmatpush1.msra.mxu0 0.0
    %4130 = vmatprep.subr.mxu0 0.0
    %4131 = vmatpush1.msra.mxu0 0.0
    %4132 = vmatprep.subr.mxu0 0.0
    %4133 = vmatpush1.msra.mxu0 0.0
    %4134 = vmatprep.subr.mxu0 0.0
    %4135 = vmatpush1.msra.mxu0 0.0
    %4136 = vmatprep.subr.mxu0 0.0
    %4137 = vmatpush1.msra.mxu0 0.0
    %4138 = vmatprep.subr.mxu0 0.0
    %4139 = vmatpush1.msra.mxu0 0.0
    %4140 = vmatprep.subr.mxu0 0.0
    %4141 = vmatpush1.msra.mxu0 0.0
    %4142 = vmatprep.subr.mxu0 0.0
    %4143 = vmatpush1.msra.mxu0 0.0
    %4144 = vmatprep.subr.mxu0 0.0
    %4145 = vmatpush1.msra.mxu0 0.0
    %4146 = vmatprep.subr.mxu0 0.0
    %4147 = vmatpush1.msra.mxu0 0.0
    %4148 = vmatprep.subr.mxu0 0.0
    %4149 = vmatpush1.msra.mxu0 0.0
    %4150 = vmatprep.subr.mxu0 0.0
    %4151 = vmatpush1.msra.mxu0 0.0
    %4152 = vmatprep.subr.mxu0 0.0
    %4153 = vmatpush1.msra.mxu0 0.0
    %4154 = vmatprep.subr.mxu0 0.0
    %4155 = vmatpush1.msra.mxu0 0.0
    %4156 = vmatprep.subr.mxu0 0.0
    %4157 = vmatpush1.msra.mxu0 0.0
    %4158 = vmatprep.subr.mxu0 0.0
    %4159 = vmatpush1.msra.mxu0 0.0
    %4160 = vmatprep.mubr.f32.mxu0 0.0
    %4161 = vmatmul.mubr.f32.gmra.mrb[0].mxu0 %v4091
    %v4162 = vpop.f32.mrb[0].mxu0
    %v4163 = vadd.f32 0.0, %v4162
    %v4164 = vpop.f32.mrb[0].mxu0
    %4165 = vmatprep.mubr.f32.mxu0 0.0
    %4166 = vmatmul.mubr.f32.gmra.mrb[0].mxu0 %v4094
    %v4167 = vpop.f32.mrb[0].mxu0
    %v4168 = vadd.f32 0.0, %v4167
    %v4169 = vpop.f32.mrb[0].mxu0
    %4170 = vdwg.mxu0
    %v4172 = vsel %vm1491, %v3902, 0
    %v4175 = vsel %vm1491, %v3903, 0
    %4177 = vmatprep.subr.mxu0 0.0
    %4178 = vmatpush1.msra.mxu0 %v3492
    %4179 = vmatprep.subr.mxu0 0.0
    %4180 = vmatpush1.msra.mxu0 %v3497
    %4181 = vmatprep.subr.mxu0 0.0
    %4182 = vmatpush1.msra.mxu0 0.0
    %4183 = vmatprep.subr.mxu0 0.0
    %4184 = vmatpush1.msra.mxu0 0.0
    %4185 = vmatprep.subr.mxu0 0.0
    %4186 = vmatpush1.msra.mxu0 0.0
    %4187 = vmatprep.subr.mxu0 0.0
    %4188 = vmatpush1.msra.mxu0 0.0
    %4189 = vmatprep.subr.mxu0 0.0
    %4190 = vmatpush1.msra.mxu0 0.0
    %4191 = vmatprep.subr.mxu0 0.0
    %4192 = vmatpush1.msra.mxu0 0.0
    %4193 = vmatprep.subr.mxu0 0.0
    %4194 = vmatpush1.msra.mxu0 0.0
    %4195 = vmatprep.subr.mxu0 0.0
    %4196 = vmatpush1.msra.mxu0 0.0
    %4197 = vmatprep.subr.mxu0 0.0
    %4198 = vmatpush1.msra.mxu0 0.0
    %4199 = vmatprep.subr.mxu0 0.0
    %4200 = vmatpush1.msra.mxu0 0.0
    %4201 = vmatprep.subr.mxu0 0.0
    %4202 = vmatpush1.msra.mxu0 0.0
    %4203 = vmatprep.subr.mxu0 0.0
    %4204 = vmatpush1.msra.mxu0 0.0
    %4205 = vmatprep.subr.mxu0 0.0
    %4206 = vmatpush1.msra.mxu0 0.0
    %4207 = vmatprep.subr.mxu0 0.0
    %4208 = vmatpush1.msra.mxu0 0.0
    %4209 = vmatprep.subr.mxu0 0.0
    %4210 = vmatpush1.msra.mxu0 0.0
    %4211 = vmatprep.subr.mxu0 0.0
    %4212 = vmatpush1.msra.mxu0 0.0
    %4213 = vmatprep.subr.mxu0 0.0
    %4214 = vmatpush1.msra.mxu0 0.0
    %4215 = vmatprep.subr.mxu0 0.0
    %4216 = vmatpush1.msra.mxu0 0.0
    %4217 = vmatprep.subr.mxu0 0.0
    %4218 = vmatpush1.msra.mxu0 0.0
    %4219 = vmatprep.subr.mxu0 0.0
    %4220 = vmatpush1.msra.mxu0 0.0
    %4221 = vmatprep.subr.mxu0 0.0
    %4222 = vmatpush1.msra.mxu0 0.0
    %4223 = vmatprep.subr.mxu0 0.0
    %4224 = vmatpush1.msra.mxu0 0.0
    %4225 = vmatprep.subr.mxu0 0.0
    %4226 = vmatpush1.msra.mxu0 0.0
    %4227 = vmatprep.subr.mxu0 0.0
    %4228 = vmatpush1.msra.mxu0 0.0
    %4229 = vmatprep.subr.mxu0 0.0
    %4230 = vmatpush1.msra.mxu0 0.0
    %4231 = vmatprep.subr.mxu0 0.0
    %4232 = vmatpush1.msra.mxu0 0.0
    %4233 = vmatprep.subr.mxu0 0.0
    %4234 = vmatpush1.msra.mxu0 0.0
    %4235 = vmatprep.subr.mxu0 0.0
    %4236 = vmatpush1.msra.mxu0 0.0
    %4237 = vmatprep.subr.mxu0 0.0
    %4238 = vmatpush1.msra.mxu0 0.0
    %4239 = vmatprep.subr.mxu0 0.0
    %4240 = vmatpush1.msra.mxu0 0.0
    %4241 = vmatprep.mubr.f32.mxu0 0.0
    %4242 = vmatmul.mubr.f32.gmra.mrb[0].mxu0 %v4172
    %v4243 = vpop.f32.mrb[0].mxu0
    %v4244 = vadd.f32 0.0, %v4243
    %v4245 = vpop.f32.mrb[0].mxu0
    %4246 = vmatprep.mubr.f32.mxu0 0.0
    %4247 = vmatmul.mubr.f32.gmra.mrb[0].mxu0 %v4175
    %v4248 = vpop.f32.mrb[0].mxu0
    %v4249 = vadd.f32 0.0, %v4248
    %v4250 = vpop.f32.mrb[0].mxu0
    %4251 = vdwg.mxu0
    %v4252 = vrcp.pop %v3906
    %v4253 = vrcp.pop %v3909
    %v4254 = vrcp.pop %v3912
    %v4255 = vrcp.pop %v3915
    %v4256 = vrcp.pop %v3918
    %v4257 = vrcp.pop %v3921
    %v4258 = vrcp.pop %v3924
    %v4259 = vrcp.pop %v3927
    %v4260 = vmul.f32 %v4001, %v4252
    %v4261 = vmul.f32 %v4006, %v4253
    %v4262 = vmul.f32 %v4082, %v4254
    %v4263 = vmul.f32 %v4087, %v4255
    %v4264 = vmul.f32 %v4163, %v4256
    %v4265 = vmul.f32 %v4168, %v4257
    %v4266 = vmul.f32 %v4244, %v4258
    %v4267 = vmul.f32 %v4249, %v4259
    %v4269 = vsel %vm1142, %v4260, 0
    %v4272 = vsel %vm1142, %v4261, 0
    %4274 = vmatprep.subr.mxu0 0.0
    %4275 = vmatpush1.msra.mxu0 %v2515
    %4276 = vmatprep.subr.mxu0 0.0
    %4277 = vmatpush1.msra.mxu0 0.0
    %4278 = vmatprep.subr.mxu0 0.0
    %4279 = vmatpush1.msra.mxu0 0.0
    %4280 = vmatprep.subr.mxu0 0.0
    %4281 = vmatpush1.msra.mxu0 0.0
    %4282 = vmatprep.subr.mxu0 0.0
    %4283 = vmatpush1.msra.mxu0 0.0
    %4284 = vmatprep.subr.mxu0 0.0
    %4285 = vmatpush1.msra.mxu0 0.0
    %4286 = vmatprep.subr.mxu0 0.0
    %4287 = vmatpush1.msra.mxu0 0.0
    %4288 = vmatprep.subr.mxu0 0.0
    %4289 = vmatpush1.msra.mxu0 0.0
    %4290 = vmatprep.subr.mxu0 0.0
    %4291 = vmatpush1.msra.mxu0 0.0
    %4292 = vmatprep.subr.mxu0 0.0
    %4293 = vmatpush1.msra.mxu0 0.0
    %4294 = vmatprep.subr.mxu0 0.0
    %4295 = vmatpush1.msra.mxu0 0.0
    %4296 = vmatprep.subr.mxu0 0.0
    %4297 = vmatpush1.msra.mxu0 0.0
    %4298 = vmatprep.subr.mxu0 0.0
    %4299 = vmatpush1.msra.mxu0 0.0
    %4300 = vmatprep.subr.mxu0 0.0
    %4301 = vmatpush1.msra.mxu0 0.0
    %4302 = vmatprep.subr.mxu0 0.0
    %4303 = vmatpush1.msra.mxu0 0.0
    %4304 = vmatprep.subr.mxu0 0.0
    %4305 = vmatpush1.msra.mxu0 0.0
    %4306 = vmatprep.subr.mxu0 0.0
    %4307 = vmatpush1.msra.mxu0 0.0
    %4308 = vmatprep.subr.mxu0 0.0
    %4309 = vmatpush1.msra.mxu0 0.0
    %4310 = vmatprep.subr.mxu0 0.0
    %4311 = vmatpush1.msra.mxu0 0.0
    %4312 = vmatprep.subr.mxu0 0.0
    %4313 = vmatpush1.msra.mxu0 0.0
    %4314 = vmatprep.subr.mxu0 0.0
    %4315 = vmatpush1.msra.mxu0 0.0
    %4316 = vmatprep.subr.mxu0 0.0
    %4317 = vmatpush1.msra.mxu0 0.0
    %4318 = vmatprep.subr.mxu0 0.0
    %4319 = vmatpush1.msra.mxu0 0.0
    %4320 = vmatprep.subr.mxu0 0.0
    %4321 = vmatpush1.msra.mxu0 0.0
    %4322 = vmatprep.subr.mxu0 0.0
    %4323 = vmatpush1.msra.mxu0 0.0
    %4324 = vmatprep.subr.mxu0 0.0
    %4325 = vmatpush1.msra.mxu0 0.0
    %4326 = vmatprep.subr.mxu0 0.0
    %4327 = vmatpush1.msra.mxu0 0.0
    %4328 = vmatprep.subr.mxu0 0.0
    %4329 = vmatpush1.msra.mxu0 0.0
    %4330 = vmatprep.subr.mxu0 0.0
    %4331 = vmatpush1.msra.mxu0 0.0
    %4332 = vmatprep.subr.mxu0 0.0
    %4333 = vmatpush1.msra.mxu0 0.0
    %4334 = vmatprep.subr.mxu0 0.0
    %4335 = vmatpush1.msra.mxu0 0.0
    %4336 = vmatprep.subr.mxu0 0.0
    %4337 = vmatpush1.msra.mxu0 0.0
    %4338 = vmatprep.mubr.f32.mxu0 0.0
    %4339 = vmatmul.mubr.f32.gmra.mrb[0].mxu0 %v4269
    %v4340 = vpop.f32.mrb[0].mxu0
    %v4341 = vadd.f32 0.0, %v4340
    %v4342 = vpop.f32.mrb[0].mxu0
    %4343 = vmatprep.mubr.f32.mxu0 0.0
    %4344 = vmatmul.mubr.f32.gmra.mrb[0].mxu0 %v4272
    %v4345 = vpop.f32.mrb[0].mxu0
    %v4346 = vadd.f32 0.0, %v4345
    %v4347 = vpop.f32.mrb[0].mxu0
    %4348 = vdwg.mxu0
    %v4350 = vsel %vm1142, %v4262, 0
    %v4353 = vsel %vm1142, %v4263, 0
    %4355 = vmatprep.subr.mxu0 0.0
    %4356 = vmatpush1.msra.mxu0 %v2516
    %4357 = vmatprep.subr.mxu0 0.0
    %4358 = vmatpush1.msra.mxu0 0.0
    %4359 = vmatprep.subr.mxu0 0.0
    %4360 = vmatpush1.msra.mxu0 0.0
    %4361 = vmatprep.subr.mxu0 0.0
    %4362 = vmatpush1.msra.mxu0 0.0
    %4363 = vmatprep.subr.mxu0 0.0
    %4364 = vmatpush1.msra.mxu0 0.0
    %4365 = vmatprep.subr.mxu0 0.0
    %4366 = vmatpush1.msra.mxu0 0.0
    %4367 = vmatprep.subr.mxu0 0.0
    %4368 = vmatpush1.msra.mxu0 0.0
    %4369 = vmatprep.subr.mxu0 0.0
    %4370 = vmatpush1.msra.mxu0 0.0
    %4371 = vmatprep.subr.mxu0 0.0
    %4372 = vmatpush1.msra.mxu0 0.0
    %4373 = vmatprep.subr.mxu0 0.0
    %4374 = vmatpush1.msra.mxu0 0.0
    %4375 = vmatprep.subr.mxu0 0.0
    %4376 = vmatpush1.msra.mxu0 0.0
    %4377 = vmatprep.subr.mxu0 0.0
    %4378 = vmatpush1.msra.mxu0 0.0
    %4379 = vmatprep.subr.mxu0 0.0
    %4380 = vmatpush1.msra.mxu0 0.0
    %4381 = vmatprep.subr.mxu0 0.0
    %4382 = vmatpush1.msra.mxu0 0.0
    %4383 = vmatprep.subr.mxu0 0.0
    %4384 = vmatpush1.msra.mxu0 0.0
    %4385 = vmatprep.subr.mxu0 0.0
    %4386 = vmatpush1.msra.mxu0 0.0
    %4387 = vmatprep.subr.mxu0 0.0
    %4388 = vmatpush1.msra.mxu0 0.0
    %4389 = vmatprep.subr.mxu0 0.0
    %4390 = vmatpush1.msra.mxu0 0.0
    %4391 = vmatprep.subr.mxu0 0.0
    %4392 = vmatpush1.msra.mxu0 0.0
    %4393 = vmatprep.subr.mxu0 0.0
    %4394 = vmatpush1.msra.mxu0 0.0
    %4395 = vmatprep.subr.mxu0 0.0
    %4396 = vmatpush1.msra.mxu0 0.0
    %4397 = vmatprep.subr.mxu0 0.0
    %4398 = vmatpush1.msra.mxu0 0.0
    %4399 = vmatprep.subr.mxu0 0.0
    %4400 = vmatpush1.msra.mxu0 0.0
    %4401 = vmatprep.subr.mxu0 0.0
    %4402 = vmatpush1.msra.mxu0 0.0
    %4403 = vmatprep.subr.mxu0 0.0
    %4404 = vmatpush1.msra.mxu0 0.0
    %4405 = vmatprep.subr.mxu0 0.0
    %4406 = vmatpush1.msra.mxu0 0.0
    %4407 = vmatprep.subr.mxu0 0.0
    %4408 = vmatpush1.msra.mxu0 0.0
    %4409 = vmatprep.subr.mxu0 0.0
    %4410 = vmatpush1.msra.mxu0 0.0
    %4411 = vmatprep.subr.mxu0 0.0
    %4412 = vmatpush1.msra.mxu0 0.0
    %4413 = vmatprep.subr.mxu0 0.0
    %4414 = vmatpush1.msra.mxu0 0.0
    %4415 = vmatprep.subr.mxu0 0.0
    %4416 = vmatpush1.msra.mxu0 0.0
    %4417 = vmatprep.subr.mxu0 0.0
    %4418 = vmatpush1.msra.mxu0 0.0
    %4419 = vmatprep.mubr.f32.mxu0 0.0
    %4420 = vmatmul.mubr.f32.gmra.mrb[0].mxu0 %v4350
    %v4421 = vpop.f32.mrb[0].mxu0
    %v4422 = vadd.f32 0.0, %v4421
    %v4423 = vpop.f32.mrb[0].mxu0
    %4424 = vmatprep.mubr.f32.mxu0 0.0
    %4425 = vmatmul.mubr.f32.gmra.mrb[0].mxu0 %v4353
    %v4426 = vpop.f32.mrb[0].mxu0
    %v4427 = vadd.f32 0.0, %v4426
    %v4428 = vpop.f32.mrb[0].mxu0
    %4429 = vdwg.mxu0
    %v4431 = vsel %vm1142, %v4264, 0
    %v4434 = vsel %vm1142, %v4265, 0
    %4436 = vmatprep.subr.mxu0 0.0
    %4437 = vmatpush1.msra.mxu0 %v2517
    %4438 = vmatprep.subr.mxu0 0.0
    %4439 = vmatpush1.msra.mxu0 0.0
    %4440 = vmatprep.subr.mxu0 0.0
    %4441 = vmatpush1.msra.mxu0 0.0
    %4442 = vmatprep.subr.mxu0 0.0
    %4443 = vmatpush1.msra.mxu0 0.0
    %4444 = vmatprep.subr.mxu0 0.0
    %4445 = vmatpush1.msra.mxu0 0.0
    %4446 = vmatprep.subr.mxu0 0.0
    %4447 = vmatpush1.msra.mxu0 0.0
    %4448 = vmatprep.subr.mxu0 0.0
    %4449 = vmatpush1.msra.mxu0 0.0
    %4450 = vmatprep.subr.mxu0 0.0
    %4451 = vmatpush1.msra.mxu0 0.0
    %4452 = vmatprep.subr.mxu0 0.0
    %4453 = vmatpush1.msra.mxu0 0.0
    %4454 = vmatprep.subr.mxu0 0.0
    %4455 = vmatpush1.msra.mxu0 0.0
    %4456 = vmatprep.subr.mxu0 0.0
    %4457 = vmatpush1.msra.mxu0 0.0
    %4458 = vmatprep.subr.mxu0 0.0
    %4459 = vmatpush1.msra.mxu0 0.0
    %4460 = vmatprep.subr.mxu0 0.0
    %4461 = vmatpush1.msra.mxu0 0.0
    %4462 = vmatprep.subr.mxu0 0.0
    %4463 = vmatpush1.msra.mxu0 0.0
    %4464 = vmatprep.subr.mxu0 0.0
    %4465 = vmatpush1.msra.mxu0 0.0
    %4466 = vmatprep.subr.mxu0 0.0
    %4467 = vmatpush1.msra.mxu0 0.0
    %4468 = vmatprep.subr.mxu0 0.0
    %4469 = vmatpush1.msra.mxu0 0.0
    %4470 = vmatprep.subr.mxu0 0.0
    %4471 = vmatpush1.msra.mxu0 0.0
    %4472 = vmatprep.subr.mxu0 0.0
    %4473 = vmatpush1.msra.mxu0 0.0
    %4474 = vmatprep.subr.mxu0 0.0
    %4475 = vmatpush1.msra.mxu0 0.0
    %4476 = vmatprep.subr.mxu0 0.0
    %4477 = vmatpush1.msra.mxu0 0.0
    %4478 = vmatprep.subr.mxu0 0.0
    %4479 = vmatpush1.msra.mxu0 0.0
    %4480 = vmatprep.subr.mxu0 0.0
    %4481 = vmatpush1.msra.mxu0 0.0
    %4482 = vmatprep.subr.mxu0 0.0
    %4483 = vmatpush1.msra.mxu0 0.0
    %4484 = vmatprep.subr.mxu0 0.0
    %4485 = vmatpush1.msra.mxu0 0.0
    %4486 = vmatprep.subr.mxu0 0.0
    %4487 = vmatpush1.msra.mxu0 0.0
    %4488 = vmatprep.subr.mxu0 0.0
    %4489 = vmatpush1.msra.mxu0 0.0
    %4490 = vmatprep.subr.mxu0 0.0
    %4491 = vmatpush1.msra.mxu0 0.0
    %4492 = vmatprep.subr.mxu0 0.0
    %4493 = vmatpush1.msra.mxu0 0.0
    %4494 = vmatprep.subr.mxu0 0.0
    %4495 = vmatpush1.msra.mxu0 0.0
    %4496 = vmatprep.subr.mxu0 0.0
    %4497 = vmatpush1.msra.mxu0 0.0
    %4498 = vmatprep.subr.mxu0 0.0
    %4499 = vmatpush1.msra.mxu0 0.0
    %4500 = vmatprep.mubr.f32.mxu0 0.0
    %4501 = vmatmul.mubr.f32.gmra.mrb[0].mxu0 %v4431
    %v4502 = vpop.f32.mrb[0].mxu0
    %v4503 = vadd.f32 0.0, %v4502
    %v4504 = vpop.f32.mrb[0].mxu0
    %4505 = vmatprep.mubr.f32.mxu0 0.0
    %4506 = vmatmul.mubr.f32.gmra.mrb[0].mxu0 %v4434
    %v4507 = vpop.f32.mrb[0].mxu0
    %v4508 = vadd.f32 0.0, %v4507
    %v4509 = vpop.f32.mrb[0].mxu0
    %4510 = vdwg.mxu0
    %v4512 = vsel %vm1142, %v4266, 0
    %v4515 = vsel %vm1142, %v4267, 0
    %4517 = vmatprep.subr.mxu0 0.0
    %4518 = vmatpush1.msra.mxu0 %v2518
    %4519 = vmatprep.subr.mxu0 0.0
    %4520 = vmatpush1.msra.mxu0 0.0
    %4521 = vmatprep.subr.mxu0 0.0
    %4522 = vmatpush1.msra.mxu0 0.0
    %4523 = vmatprep.subr.mxu0 0.0
    %4524 = vmatpush1.msra.mxu0 0.0
    %4525 = vmatprep.subr.mxu0 0.0
    %4526 = vmatpush1.msra.mxu0 0.0
    %4527 = vmatprep.subr.mxu0 0.0
    %4528 = vmatpush1.msra.mxu0 0.0
    %4529 = vmatprep.subr.mxu0 0.0
    %4530 = vmatpush1.msra.mxu0 0.0
    %4531 = vmatprep.subr.mxu0 0.0
    %4532 = vmatpush1.msra.mxu0 0.0
    %4533 = vmatprep.subr.mxu0 0.0
    %4534 = vmatpush1.msra.mxu0 0.0
    %4535 = vmatprep.subr.mxu0 0.0
    %4536 = vmatpush1.msra.mxu0 0.0
    %4537 = vmatprep.subr.mxu0 0.0
    %4538 = vmatpush1.msra.mxu0 0.0
    %4539 = vmatprep.subr.mxu0 0.0
    %4540 = vmatpush1.msra.mxu0 0.0
    %4541 = vmatprep.subr.mxu0 0.0
    %4542 = vmatpush1.msra.mxu0 0.0
    %4543 = vmatprep.subr.mxu0 0.0
    %4544 = vmatpush1.msra.mxu0 0.0
    %4545 = vmatprep.subr.mxu0 0.0
    %4546 = vmatpush1.msra.mxu0 0.0
    %4547 = vmatprep.subr.mxu0 0.0
    %4548 = vmatpush1.msra.mxu0 0.0
    %4549 = vmatprep.subr.mxu0 0.0
    %4550 = vmatpush1.msra.mxu0 0.0
    %4551 = vmatprep.subr.mxu0 0.0
    %4552 = vmatpush1.msra.mxu0 0.0
    %4553 = vmatprep.subr.mxu0 0.0
    %4554 = vmatpush1.msra.mxu0 0.0
    %4555 = vmatprep.subr.mxu0 0.0
    %4556 = vmatpush1.msra.mxu0 0.0
    %4557 = vmatprep.subr.mxu0 0.0
    %4558 = vmatpush1.msra.mxu0 0.0
    %4559 = vmatprep.subr.mxu0 0.0
    %4560 = vmatpush1.msra.mxu0 0.0
    %4561 = vmatprep.subr.mxu0 0.0
    %4562 = vmatpush1.msra.mxu0 0.0
    %4563 = vmatprep.subr.mxu0 0.0
    %4564 = vmatpush1.msra.mxu0 0.0
    %4565 = vmatprep.subr.mxu0 0.0
    %4566 = vmatpush1.msra.mxu0 0.0
    %4567 = vmatprep.subr.mxu0 0.0
    %4568 = vmatpush1.msra.mxu0 0.0
    %4569 = vmatprep.subr.mxu0 0.0
    %4570 = vmatpush1.msra.mxu0 0.0
    %4571 = vmatprep.subr.mxu0 0.0
    %4572 = vmatpush1.msra.mxu0 0.0
    %4573 = vmatprep.subr.mxu0 0.0
    %4574 = vmatpush1.msra.mxu0 0.0
    %4575 = vmatprep.subr.mxu0 0.0
    %4576 = vmatpush1.msra.mxu0 0.0
    %4577 = vmatprep.subr.mxu0 0.0
    %4578 = vmatpush1.msra.mxu0 0.0
    %4579 = vmatprep.subr.mxu0 0.0
    %4580 = vmatpush1.msra.mxu0 0.0
    %4581 = vmatprep.mubr.f32.mxu0 0.0
    %4582 = vmatmul.mubr.f32.gmra.mrb[0].mxu0 %v4512
    %v4583 = vpop.f32.mrb[0].mxu0
    %v4584 = vadd.f32 0.0, %v4583
    %v4585 = vpop.f32.mrb[0].mxu0
    %4586 = vmatprep.mubr.f32.mxu0 0.0
    %4587 = vmatmul.mubr.f32.gmra.mrb[0].mxu0 %v4515
    %v4588 = vpop.f32.mrb[0].mxu0
    %v4589 = vadd.f32 0.0, %v4588
    %v4590 = vpop.f32.mrb[0].mxu0
    %4591 = vdwg.mxu0
    %v4592 = vadd.f32 %v4341, %v4422
    %v4593 = vadd.f32 %v4346, %v4427
    %v4594 = vadd.f32 %v4592, %v4503
    %v4595 = vadd.f32 %v4593, %v4508
    %v4596 = vadd.f32 %v4594, %v4584
    %v4597 = vadd.f32 %v4595, %v4589
    %v4598 = vlaneseq
    %v4599 = vshrl.u32 %v4598, 7
    %v4600 = vsub.s32 0, %v4599
    %v4601 = vrot.slane %v2527, %v4600
    %v4602 = vadd.f32 %v4596, %v4601
    %v4603 = vadd.f32 %v4597, %v4601
    %v4604 = vadd.f32 %v2499, %v4602
    %v4605 = vadd.f32 %v2500, %v4603
    %v4606 = vsel %vm199, %v4604, 0.0
    %4607 = vadd.xlane.f32.xlu0 %v4606
    %v4608 = vpop.xlane.xlu0 %4607
    %v4609 = vsel %vm199, %v4605, 0.0
    %4610 = vadd.xlane.f32.xlu0 %v4609
    %v4611 = vpop.xlane.xlu0 %4610
    %v4612 = vmul.f32 %v4608, %v2256
    %v4613 = vmul.f32 %v4611, %v2256
    %v4614 = vsub.f32 %v4604, %v4612
    %v4615 = vsub.f32 %v4605, %v4613
    %v4616 = vmul.f32 %v4614, %v4614
    %v4617 = vmul.f32 %v4615, %v4615
    %v4618 = vsel %vm199, %v4616, 0.0
    %4619 = vadd.xlane.f32.xlu0 %v4618
    %v4620 = vpop.xlane.xlu0 %4619
    %v4621 = vsel %vm199, %v4617, 0.0
    %4622 = vadd.xlane.f32.xlu0 %v4621
    %v4623 = vpop.xlane.xlu0 %4622
    %v4624 = vmul.f32 %v4620, %v2256
    %v4625 = vmul.f32 %v4623, %v2256
    %v4626 = vadd.f32 %v4624, 1e-05
    %v4627 = vadd.f32 %v4625, 1e-05
    %v4628 = vrsqrt.pop %v4626
    %v4629 = vrsqrt.pop %v4627
    %v4630 = vmul.f32 %v4614, %v4628
    %v4631 = vmul.f32 %v4615, %v4629
    %v4632 = vlaneseq
    %v4633 = vshrl.u32 %v4632, 7
    %v4634 = vsub.s32 2, %v4633
    %v4635 = vrot.slane %v2527, %v4634
    %v4636 = vmul.f32 %v4630, %v4635
    %v4637 = vmul.f32 %v4631, %v4635
    %v4638 = vlaneseq
    %v4639 = vshrl.u32 %v4638, 7
    %v4640 = vsub.s32 3, %v4639
    %v4641 = vrot.slane %v2527, %v4640
    %v4642 = vadd.f32 %v4636, %v4641
    %v4643 = vadd.f32 %v4637, %v4641
    %v4644 = vlaneseq
    %v4645 = vshrl.u32 %v4644, 7
    %v4646 = vsub.s32 0, %v4645
    %v4647 = vrot.slane %v2532, %v4646
    %v4649 = vsel %vm199, %v4642, 0
    %v4652 = vsel %vm199, %v4643, 0
    %4654 = vmatprep.subr.mxu0 0.0
    %4655 = vmatpush1.msra.mxu0 %v2528
    %4656 = vmatprep.subr.mxu0 0.0
    %4657 = vmatpush1.msra.mxu0 %v2529
    %4658 = vmatprep.subr.mxu0 0.0
    %4659 = vmatpush1.msra.mxu0 %v2530
    %4660 = vmatprep.subr.mxu0 0.0
    %4661 = vmatpush1.msra.mxu0 %v2531
    %4662 = vmatprep.subr.mxu0 0.0
    %4663 = vmatpush1.msra.mxu0 0.0
    %4664 = vmatprep.subr.mxu0 0.0
    %4665 = vmatpush1.msra.mxu0 0.0
    %4666 = vmatprep.subr.mxu0 0.0
    %4667 = vmatpush1.msra.mxu0 0.0
    %4668 = vmatprep.subr.mxu0 0.0
    %4669 = vmatpush1.msra.mxu0 0.0
    %4670 = vmatprep.subr.mxu0 0.0
    %4671 = vmatpush1.msra.mxu0 0.0
    %4672 = vmatprep.subr.mxu0 0.0
    %4673 = vmatpush1.msra.mxu0 0.0
    %4674 = vmatprep.subr.mxu0 0.0
    %4675 = vmatpush1.msra.mxu0 0.0
    %4676 = vmatprep.subr.mxu0 0.0
    %4677 = vmatpush1.msra.mxu0 0.0
    %4678 = vmatprep.subr.mxu0 0.0
    %4679 = vmatpush1.msra.mxu0 0.0
    %4680 = vmatprep.subr.mxu0 0.0
    %4681 = vmatpush1.msra.mxu0 0.0
    %4682 = vmatprep.subr.mxu0 0.0
    %4683 = vmatpush1.msra.mxu0 0.0
    %4684 = vmatprep.subr.mxu0 0.0
    %4685 = vmatpush1.msra.mxu0 0.0
    %4686 = vmatprep.subr.mxu0 0.0
    %4687 = vmatpush1.msra.mxu0 0.0
    %4688 = vmatprep.subr.mxu0 0.0
    %4689 = vmatpush1.msra.mxu0 0.0
    %4690 = vmatprep.subr.mxu0 0.0
    %4691 = vmatpush1.msra.mxu0 0.0
    %4692 = vmatprep.subr.mxu0 0.0
    %4693 = vmatpush1.msra.mxu0 0.0
    %4694 = vmatprep.subr.mxu0 0.0
    %4695 = vmatpush1.msra.mxu0 0.0
    %4696 = vmatprep.subr.mxu0 0.0
    %4697 = vmatpush1.msra.mxu0 0.0
    %4698 = vmatprep.subr.mxu0 0.0
    %4699 = vmatpush1.msra.mxu0 0.0
    %4700 = vmatprep.subr.mxu0 0.0
    %4701 = vmatpush1.msra.mxu0 0.0
    %4702 = vmatprep.subr.mxu0 0.0
    %4703 = vmatpush1.msra.mxu0 0.0
    %4704 = vmatprep.subr.mxu0 0.0
    %4705 = vmatpush1.msra.mxu0 0.0
    %4706 = vmatprep.subr.mxu0 0.0
    %4707 = vmatpush1.msra.mxu0 0.0
    %4708 = vmatprep.subr.mxu0 0.0
    %4709 = vmatpush1.msra.mxu0 0.0
    %4710 = vmatprep.subr.mxu0 0.0
    %4711 = vmatpush1.msra.mxu0 0.0
    %4712 = vmatprep.subr.mxu0 0.0
    %4713 = vmatpush1.msra.mxu0 0.0
    %4714 = vmatprep.subr.mxu0 0.0
    %4715 = vmatpush1.msra.mxu0 0.0
    %4716 = vmatprep.subr.mxu0 0.0
    %4717 = vmatpush1.msra.mxu0 0.0
    %4718 = vmatprep.mubr.f32.mxu0 0.0
    %4719 = vmatmul.mubr.f32.gmra.mrb[0].mxu0 %v4649
    %v4720 = vpop.f32.mrb[0].mxu0
    %v4721 = vadd.f32 %v4647, %v4720
    %v4722 = vpop.f32.mrb[0].mxu0
    %4723 = vmatprep.mubr.f32.mxu0 0.0
    %4724 = vmatmul.mubr.f32.gmra.mrb[0].mxu0 %v4652
    %v4725 = vpop.f32.mrb[0].mxu0
    %v4726 = vadd.f32 %v4647, %v4725
    %v4727 = vpop.f32.mrb[0].mxu0
    %4728 = vdwg.mxu0
    %v4729 = vmax.f32 %v4721, 0.0
    %v4730 = vmax.f32 %v4726, 0.0
    %v4731 = vlaneseq
    %v4732 = vshrl.u32 %v4731, 7
    %v4733 = vsub.s32 1, %v4732
    %v4734 = vrot.slane %v2527, %v4733
    %v4736 = vsel %vm50, %v4729, 0
    %v4739 = vsel %vm50, %v4730, 0
    %4741 = vmatprep.subr.mxu0 0.0
    %4742 = vmatpush1.msra.mxu0 %v2519
    %4743 = vmatprep.subr.mxu0 0.0
    %4744 = vmatpush1.msra.mxu0 %v2520
    %4745 = vmatprep.subr.mxu0 0.0
    %4746 = vmatpush1.msra.mxu0 %v2521
    %4747 = vmatprep.subr.mxu0 0.0
    %4748 = vmatpush1.msra.mxu0 %v2522
    %4749 = vmatprep.subr.mxu0 0.0
    %4750 = vmatpush1.msra.mxu0 %v2523
    %4751 = vmatprep.subr.mxu0 0.0
    %4752 = vmatpush1.msra.mxu0 %v2524
    %4753 = vmatprep.subr.mxu0 0.0
    %4754 = vmatpush1.msra.mxu0 %v2525
    %4755 = vmatprep.subr.mxu0 0.0
    %4756 = vmatpush1.msra.mxu0 %v2526
    %4757 = vmatprep.subr.mxu0 0.0
    %4758 = vmatpush1.msra.mxu0 0.0
    %4759 = vmatprep.subr.mxu0 0.0
    %4760 = vmatpush1.msra.mxu0 0.0
    %4761 = vmatprep.subr.mxu0 0.0
    %4762 = vmatpush1.msra.mxu0 0.0
    %4763 = vmatprep.subr.mxu0 0.0
    %4764 = vmatpush1.msra.mxu0 0.0
    %4765 = vmatprep.subr.mxu0 0.0
    %4766 = vmatpush1.msra.mxu0 0.0
    %4767 = vmatprep.subr.mxu0 0.0
    %4768 = vmatpush1.msra.mxu0 0.0
    %4769 = vmatprep.subr.mxu0 0.0
    %4770 = vmatpush1.msra.mxu0 0.0
    %4771 = vmatprep.subr.mxu0 0.0
    %4772 = vmatpush1.msra.mxu0 0.0
    %4773 = vmatprep.subr.mxu0 0.0
    %4774 = vmatpush1.msra.mxu0 0.0
    %4775 = vmatprep.subr.mxu0 0.0
    %4776 = vmatpush1.msra.mxu0 0.0
    %4777 = vmatprep.subr.mxu0 0.0
    %4778 = vmatpush1.msra.mxu0 0.0
    %4779 = vmatprep.subr.mxu0 0.0
    %4780 = vmatpush1.msra.mxu0 0.0
    %4781 = vmatprep.subr.mxu0 0.0
    %4782 = vmatpush1.msra.mxu0 0.0
    %4783 = vmatprep.subr.mxu0 0.0
    %4784 = vmatpush1.msra.mxu0 0.0
    %4785 = vmatprep.subr.mxu0 0.0
    %4786 = vmatpush1.msra.mxu0 0.0
    %4787 = vmatprep.subr.mxu0 0.0
    %4788 = vmatpush1.msra.mxu0 0.0
    %4789 = vmatprep.subr.mxu0 0.0
    %4790 = vmatpush1.msra.mxu0 0.0
    %4791 = vmatprep.subr.mxu0 0.0
    %4792 = vmatpush1.msra.mxu0 0.0
    %4793 = vmatprep.subr.mxu0 0.0
    %4794 = vmatpush1.msra.mxu0 0.0
    %4795 = vmatprep.subr.mxu0 0.0
    %4796 = vmatpush1.msra.mxu0 0.0
    %4797 = vmatprep.subr.mxu0 0.0
    %4798 = vmatpush1.msra.mxu0 0.0
    %4799 = vmatprep.subr.mxu0 0.0
    %4800 = vmatpush1.msra.mxu0 0.0
    %4801 = vmatprep.subr.mxu0 0.0
    %4802 = vmatpush1.msra.mxu0 0.0
    %4803 = vmatprep.subr.mxu0 0.0
    %4804 = vmatpush1.msra.mxu0 0.0
    %4805 = vmatprep.mubr.f32.mxu0 0.0
    %4806 = vmatmul.mubr.f32.gmra.mrb[0].mxu0 %v4736
    %v4807 = vpop.f32.mrb[0].mxu0
    %v4808 = vadd.f32 %v4734, %v4807
    %v4809 = vpop.f32.mrb[0].mxu0
    %4810 = vmatprep.mubr.f32.mxu0 0.0
    %4811 = vmatmul.mubr.f32.gmra.mrb[0].mxu0 %v4739
    %v4812 = vpop.f32.mrb[0].mxu0
    %v4813 = vadd.f32 %v4734, %v4812
    %v4814 = vpop.f32.mrb[0].mxu0
    %4815 = vdwg.mxu0
    %v4816 = vadd.f32 %v4642, %v4808
    %v4817 = vadd.f32 %v4643, %v4813
    %v4818 = vsel %vm199, %v4816, 0.0
    %4819 = vadd.xlane.f32.xlu0 %v4818
    %v4820 = vpop.xlane.xlu0 %4819
    %v4821 = vsel %vm199, %v4817, 0.0
    %4822 = vadd.xlane.f32.xlu0 %v4821
    %v4823 = vpop.xlane.xlu0 %4822
    %v4824 = vmul.f32 %v4820, %v2256
    %v4825 = vmul.f32 %v4823, %v2256
    %v4826 = vsub.f32 %v4816, %v4824
    %v4827 = vsub.f32 %v4817, %v4825
    %v4828 = vmul.f32 %v4826, %v4826
    %v4829 = vmul.f32 %v4827, %v4827
    %v4830 = vsel %vm199, %v4828, 0.0
    %4831 = vadd.xlane.f32.xlu0 %v4830
    %v4832 = vpop.xlane.xlu0 %4831
    %v4833 = vsel %vm199, %v4829, 0.0
    %4834 = vadd.xlane.f32.xlu0 %v4833
    %v4835 = vpop.xlane.xlu0 %4834
    %v4836 = vmul.f32 %v4832, %v2256
    %v4837 = vmul.f32 %v4835, %v2256
    %v4838 = vadd.f32 %v4836, 1e-05
    %v4839 = vadd.f32 %v4837, 1e-05
    %v4840 = vrsqrt.pop %v4838
    %v4841 = vrsqrt.pop %v4839
    %v4842 = vmul.f32 %v4826, %v4840
    %v4843 = vmul.f32 %v4827, %v4841
    %v4844 = vlaneseq
    %v4845 = vshrl.u32 %v4844, 7
    %v4846 = vsub.s32 4, %v4845
    %v4847 = vrot.slane %v2527, %v4846
    %v4848 = vmul.f32 %v4842, %v4847
    %v4849 = vmul.f32 %v4843, %v4847
    %v4850 = vlaneseq
    %v4851 = vshrl.u32 %v4850, 7
    %v4852 = vsub.s32 5, %v4851
    %v4853 = vrot.slane %v2527, %v4852
    %v4854 = vadd.f32 %v4848, %v4853
    %v4855 = vadd.f32 %v4849, %v4853
    %v4856 = vld [vmem:[%s4] sm:$0xff]
    %v4857 = vld [vmem:[%s4 + $0x8] sm:$0xff]
    %v4858 = vld [vmem:[%s4 + $0x10] sm:$0xff]
    %v4859 = vld [vmem:[%s4 + $0x18] sm:$0xff]
    %v4860 = vld [vmem:[%s4 + $0x20] sm:$0x1]
    %v4861 = vlaneseq
    %v4862 = vshrl.u32 %v4861, 7
    %v4863 = vsub.s32 0, %v4862
    %v4864 = vrot.slane %v4860, %v4863
    %v4866 = vsel %vm199, %v4854, 0
    %v4869 = vsel %vm199, %v4855, 0
    %4871 = vmatprep.subr.mxu0 0.0
    %4872 = vmatpush1.msra.mxu0 %v4856
    %4873 = vmatprep.subr.mxu0 0.0
    %4874 = vmatpush1.msra.mxu0 %v4857
    %4875 = vmatprep.subr.mxu0 0.0
    %4876 = vmatpush1.msra.mxu0 %v4858
    %4877 = vmatprep.subr.mxu0 0.0
    %4878 = vmatpush1.msra.mxu0 %v4859
    %4879 = vmatprep.subr.mxu0 0.0
    %4880 = vmatpush1.msra.mxu0 0.0
    %4881 = vmatprep.subr.mxu0 0.0
    %4882 = vmatpush1.msra.mxu0 0.0
    %4883 = vmatprep.subr.mxu0 0.0
    %4884 = vmatpush1.msra.mxu0 0.0
    %4885 = vmatprep.subr.mxu0 0.0
    %4886 = vmatpush1.msra.mxu0 0.0
    %4887 = vmatprep.subr.mxu0 0.0
    %4888 = vmatpush1.msra.mxu0 0.0
    %4889 = vmatprep.subr.mxu0 0.0
    %4890 = vmatpush1.msra.mxu0 0.0
    %4891 = vmatprep.subr.mxu0 0.0
    %4892 = vmatpush1.msra.mxu0 0.0
    %4893 = vmatprep.subr.mxu0 0.0
    %4894 = vmatpush1.msra.mxu0 0.0
    %4895 = vmatprep.subr.mxu0 0.0
    %4896 = vmatpush1.msra.mxu0 0.0
    %4897 = vmatprep.subr.mxu0 0.0
    %4898 = vmatpush1.msra.mxu0 0.0
    %4899 = vmatprep.subr.mxu0 0.0
    %4900 = vmatpush1.msra.mxu0 0.0
    %4901 = vmatprep.subr.mxu0 0.0
    %4902 = vmatpush1.msra.mxu0 0.0
    %4903 = vmatprep.subr.mxu0 0.0
    %4904 = vmatpush1.msra.mxu0 0.0
    %4905 = vmatprep.subr.mxu0 0.0
    %4906 = vmatpush1.msra.mxu0 0.0
    %4907 = vmatprep.subr.mxu0 0.0
    %4908 = vmatpush1.msra.mxu0 0.0
    %4909 = vmatprep.subr.mxu0 0.0
    %4910 = vmatpush1.msra.mxu0 0.0
    %4911 = vmatprep.subr.mxu0 0.0
    %4912 = vmatpush1.msra.mxu0 0.0
    %4913 = vmatprep.subr.mxu0 0.0
    %4914 = vmatpush1.msra.mxu0 0.0
    %4915 = vmatprep.subr.mxu0 0.0
    %4916 = vmatpush1.msra.mxu0 0.0
    %4917 = vmatprep.subr.mxu0 0.0
    %4918 = vmatpush1.msra.mxu0 0.0
    %4919 = vmatprep.subr.mxu0 0.0
    %4920 = vmatpush1.msra.mxu0 0.0
    %4921 = vmatprep.subr.mxu0 0.0
    %4922 = vmatpush1.msra.mxu0 0.0
    %4923 = vmatprep.subr.mxu0 0.0
    %4924 = vmatpush1.msra.mxu0 0.0
    %4925 = vmatprep.subr.mxu0 0.0
    %4926 = vmatpush1.msra.mxu0 0.0
    %4927 = vmatprep.subr.mxu0 0.0
    %4928 = vmatpush1.msra.mxu0 0.0
    %4929 = vmatprep.subr.mxu0 0.0
    %4930 = vmatpush1.msra.mxu0 0.0
    %4931 = vmatprep.subr.mxu0 0.0
    %4932 = vmatpush1.msra.mxu0 0.0
    %4933 = vmatprep.subr.mxu0 0.0
    %4934 = vmatpush1.msra.mxu0 0.0
    %4935 = vmatprep.mubr.f32.mxu0 0.0
    %4936 = vmatmul.mubr.f32.gmra.mrb[0].mxu0 %v4866
    %v4937 = vpop.f32.mrb[0].mxu0
    %v4938 = vadd.f32 %v4864, %v4937
    %v4939 = vpop.f32.mrb[0].mxu0
    %4940 = vmatprep.mubr.f32.mxu0 0.0
    %4941 = vmatmul.mubr.f32.gmra.mrb[0].mxu0 %v4869
    %v4942 = vpop.f32.mrb[0].mxu0
    %v4943 = vadd.f32 %v4864, %v4942
    %v4944 = vpop.f32.mrb[0].mxu0
    %4945 = vdwg.mxu0
    %4946 = vst [vmem:[#allocation2] sm:$0xff] %v4938
    %4947 = vst [vmem:[#allocation2 + $0x8] sm:$0xff] %v4943
    // Predicated region
    $region26: #{transformer_forward.1} parent=1 // pred_check
      _
    $region27: #{transformer_forward.1} parent=1 // pred_check_branch
      %4949 = sbr.rel (0) target = $region29
    $region28: #{transformer_forward.1} parent=1 // pred_region
      %s4951 = ssub.s32 256, 256
      %4952 = vsyncadd [#allocation3], %s4951
      %s4953 = sshll.u32 [#allocation2], 4
      %s4954 = int_to_ptr.vmem [resolvable:$true] %s4953
      %4959 = dma.vmem_to_hbm [thread:$0]  %s4954, 256, %s6, [#allocation3], 128, 128, 8
    $region29: #{transformer_forward.1} parent=1 // pred_fallthru
      _
    // Predicated region
    $region30: #{transformer_forward.1} parent=1 // pred_check
      _
    $region31: #{transformer_forward.1} parent=1 // pred_check_branch
      %4961 = sbr.rel (0) target = $region33
    $region32: #{transformer_forward.1} parent=1 // pred_region
      %4962 = dma.done [#allocation3], 256
    $region33: #{transformer_forward.1} parent=1 // pred_fallthru
      _
    %4963 = vsyncpa [#allocation3], 1

</llo_original>
